<compile_context>
chip_gen: v5e
topology: v5e:2x2
jax: 0.10.0
libtpu: 0.0.40
codegen_flags: <defaults>
</compile_context>

<pallas_src>
import math
import functools

import jax
import jax.numpy as jnp
from jax.experimental import pallas as pl
from jax.experimental.pallas import tpu as pltpu

# --- model dims (from the module) ---
HIDDEN_DIM = 400
HIDDEN_DIM2 = 256
HIDDEN_DIM3 = 128
LATENT_DIM = 64

HIDDEN_PAD = 512            # 400 padded up to the next multiple of 128
N_PARAMS = 20               # 10 (W, b) pairs after fusing FC_mean / FC_var


# ----------------------------------------------------------------------------
# Shared forward math (used verbatim by the kernel and by the strict reference)
# ----------------------------------------------------------------------------
def _leaky_relu(h, slope=0.5):
    return jnp.where(h > 0, h, slope * h)


def _linear(h, w, b):
    # bf16 x bf16 MXU matmul with f32 accumulation; bias add in f32.
    return jnp.dot(h.astype(w.dtype), w, preferred_element_type=jnp.float32) + b


def _vae_math(x, eps, params):
    (e1w, e1b, e2w, e2b, e3w, e3b, e4w, e4b, emvw, emvb,
     d1w, d1b, d2w, d2b, d3w, d3b, d4w, d4b, d5w, d5b) = params

    # ---- Encoder ----
    h = _leaky_relu(_linear(x, e1w, e1b))
    h = _leaky_relu(_linear(h, e2w, e2b))
    h = _leaky_relu(_linear(h, e3w, e3b))
    h = _leaky_relu(_linear(h, e4w, e4b))
    ml = _linear(h, emvw, emvb)                 # fused [mean || log_var], (B, 128)
    mean = ml[:, :LATENT_DIM]
    log_var = ml[:, LATENT_DIM:]

    # ---- Reparameterization:  z = mean + exp(0.5*log_var) * eps ----
    z = mean + jnp.exp(0.5 * log_var) * eps

    # ---- Decoder ----
    g = _leaky_relu(_linear(z, d1w, d1b))
    g = _leaky_relu(_linear(g, d2w, d2b))
    g = _leaky_relu(_linear(g, d3w, d3b))
    g = _leaky_relu(_linear(g, d4w, d4b))
    x_hat = jax.nn.sigmoid(_linear(g, d5w, d5b))
    return x_hat, ml


# ----------------------------------------------------------------------------
# Kernel
# ----------------------------------------------------------------------------
def vae_kernel(x_ref, eps_ref, *rest):
    param_refs = rest[:N_PARAMS]
    xhat_ref, ml_ref = rest[N_PARAMS:]

    params = tuple(r[...] for r in param_refs)
    x_hat, ml = _vae_math(x_ref[...], eps_ref[...], params)

    xhat_ref[...] = x_hat
    ml_ref[...] = ml


@functools.partial(jax.jit, static_argnames=("block_batch",))
def vae_forward(x, eps, kparams, *, block_batch=8):
    """x: (B, input_dim) f32, eps: (B, LATENT_DIM) f32, kparams: prepared params."""
    B, D = x.shape
    grid_b = pl.cdiv(B, block_batch)
    Bp = grid_b * block_batch
    if Bp != B:  # pad batch to a whole number of tiles (zeros are harmless)
        x = jnp.pad(x, ((0, Bp - B), (0, 0)))
        eps = jnp.pad(eps, ((0, Bp - B), (0, 0)))

    in_specs = [
        pl.BlockSpec((block_batch, D), lambda b: (b, 0)),
        pl.BlockSpec((block_batch, LATENT_DIM), lambda b: (b, 0)),
    ] + [pl.BlockSpec(p.shape, lambda b: (0, 0)) for p in kparams]

    out_shapes = (
        jax.ShapeDtypeStruct((Bp, D), jnp.float32),                # x_hat
        jax.ShapeDtypeStruct((Bp, 2 * LATENT_DIM), jnp.float32),   # [mean || log_var]
    )
    out_specs = (
        pl.BlockSpec((block_batch, D), lambda b: (b, 0)),
        pl.BlockSpec((block_batch, 2 * LATENT_DIM), lambda b: (b, 0)),
    )

    x_hat, ml = pl.pallas_call(
        vae_kernel,
        out_shape=out_shapes,
        grid_spec=pltpu.PrefetchScalarGridSpec(
            num_scalar_prefetch=0,
            grid=(grid_b,),
            in_specs=in_specs,
            out_specs=out_specs,
        ),
        compiler_params=pltpu.CompilerParams(
            dimension_semantics=("parallel",),
        ),
    )(x, eps, *kparams)

    mean = ml[:, :LATENT_DIM]
    log_var = ml[:, LATENT_DIM:]
    return x_hat[:B], mean[:B], log_var[:B]


# ----------------------------------------------------------------------------
# Parameter construction / preparation
# ----------------------------------------------------------------------------
def _init_linear(key, in_dim, out_dim):
    """PyTorch nn.Linear default init: U(-1/sqrt(in), 1/sqrt(in)); W stored (in, out)."""
    kw, kb = jax.random.split(key)
    bound = 1.0 / math.sqrt(in_dim)
    w = jax.random.uniform(kw, (in_dim, out_dim), jnp.float32, -bound, bound)
    b = jax.random.uniform(kb, (out_dim,), jnp.float32, -bound, bound)
    return w, b


def make_raw_params(key, input_dim):
    """Raw f32 params, original (unpadded, unfused) layer structure."""
    dims = [
        (input_dim, HIDDEN_DIM),        # FC_input
        (HIDDEN_DIM, HIDDEN_DIM),       # FC_input2
        (HIDDEN_DIM, HIDDEN_DIM2),      # FC_input3
        (HIDDEN_DIM2, HIDDEN_DIM3),     # FC_input4
        (HIDDEN_DIM3, LATENT_DIM),      # FC_mean
        (HIDDEN_DIM3, LATENT_DIM),      # FC_var
        (LATENT_DIM, HIDDEN_DIM3),      # FC_hidden
        (HIDDEN_DIM3, HIDDEN_DIM2),     # FC_hidden4
        (HIDDEN_DIM2, HIDDEN_DIM),      # FC_hidden3
        (HIDDEN_DIM, HIDDEN_DIM),       # FC_hidden2
        (HIDDEN_DIM, input_dim),        # FC_output
    ]
    keys = jax.random.split(key, len(dims))
    return [_init_linear(k, i, o) for k, (i, o) in zip(keys, dims)]


def _pad2(a, rows, cols):
    return jnp.pad(a, ((0, rows - a.shape[0]), (0, cols - a.shape[1])))


def prepare_kernel_params(raw, input_dim):
    """Pad hidden 400->512, fuse FC_mean/FC_var, weights->bf16, biases->(1,out) f32."""
    e1, e2, e3, e4, em, ev, d1, d2, d3, d4, d5 = raw
    H, H2, H3, L = HIDDEN_PAD, HIDDEN_DIM2, HIDDEN_DIM3, LATENT_DIM

    def wb(layer, in_p, out_p):
        w, b = layer
        w = _pad2(w, in_p, out_p).astype(jnp.bfloat16)
        b = jnp.pad(b, (0, out_p - b.shape[0])).reshape(1, out_p).astype(jnp.float32)
        return [w, b]

    out = []
    out += wb(e1, input_dim, H)
    out += wb(e2, H, H)
    out += wb(e3, H, H2)
    out += wb(e4, H2, H3)
    # fused mean/var head: one lane-dense (128, 128) matmul
    emv_w = jnp.concatenate([em[0], ev[0]], axis=1).astype(jnp.bfloat16)
    emv_b = jnp.concatenate([em[1], ev[1]]).reshape(1, 2 * L).astype(jnp.float32)
    out += [emv_w, emv_b]
    out += wb(d1, L, H3)
    out += wb(d2, H3, H2)
    out += wb(d3, H2, H)
    out += wb(d4, H, H)
    out += wb(d5, H, input_dim)
    assert len(out) == N_PARAMS
    return tuple(out)


# ----------------------------------------------------------------------------
# References
# ----------------------------------------------------------------------------
def reference_prepared(x, eps, kparams):
    """Strict reference: same padded/fused bf16 params, same math as the kernel."""
    x_hat, ml = _vae_math(x, eps, kparams)
    return x_hat, ml[:, :LATENT_DIM], ml[:, LATENT_DIM:]


def reference_raw(x, eps, raw):
    """Original-semantics f32 reference (unpadded, unfused)."""
    e1, e2, e3, e4, em, ev, d1, d2, d3, d4, d5 = raw

    def lin(h, layer):
        return h @ layer[0] + layer[1]

    h = _leaky_relu(lin(x, e1))
    h = _leaky_relu(lin(h, e2))
    h = _leaky_relu(lin(h, e3))
    h = _leaky_relu(lin(h, e4))
    mean = lin(h, em)
    log_var = lin(h, ev)
    z = mean + jnp.exp(0.5 * log_var) * eps
    g = _leaky_relu(lin(z, d1))
    g = _leaky_relu(lin(g, d2))
    g = _leaky_relu(lin(g, d3))
    g = _leaky_relu(lin(g, d4))
    x_hat = jax.nn.sigmoid(lin(g, d5))
    return x_hat, mean, log_var


if __name__ == "__main__":
    BATCH = 16        # two batch tiles of 8 -> exercises the parallel grid axis
    INPUT_DIM = 512   # one-hot AA flattened sequence length (lane-aligned)

    root = jax.random.PRNGKey(0)
    k_params, k_x, k_eps = jax.random.split(root, 3)

    raw_params = make_raw_params(k_params, INPUT_DIM)
    kparams = prepare_kernel_params(raw_params, INPUT_DIM)

    x = jax.random.uniform(k_x, (BATCH, INPUT_DIM), jnp.float32)       # one-hot-ish input
    eps = jax.random.normal(k_eps, (BATCH, LATENT_DIM), jnp.float32)   # torch.randn_like(var)

    x_hat, mean, log_var = vae_forward(x, eps, kparams)
    jax.block_until_ready((x_hat, mean, log_var))

    assert x_hat.shape == (BATCH, INPUT_DIM)
    assert mean.shape == (BATCH, LATENT_DIM)
    assert log_var.shape == (BATCH, LATENT_DIM)

    # Strict check: same padded/fused bf16 params, same math.
    p_xhat, p_mean, p_lv = reference_prepared(x, eps, kparams)
    assert jnp.allclose(x_hat, p_xhat, atol=2e-3, rtol=2e-3)
    assert jnp.allclose(mean, p_mean, atol=2e-3, rtol=2e-3)
    assert jnp.allclose(log_var, p_lv, atol=2e-3, rtol=2e-3)

    # Loose check vs. original f32 semantics (only bf16 weight quantization noise).
    r_xhat, r_mean, r_lv = reference_raw(x, eps, raw_params)
    assert jnp.allclose(x_hat, r_xhat, atol=5e-2, rtol=5e-2)
    assert jnp.allclose(mean, r_mean, atol=5e-2, rtol=5e-2)
    assert jnp.allclose(log_var, r_lv, atol=5e-2, rtol=5e-2)

    print("KERNEL_OK")
</pallas_src>

<mosaic_0001>
module attributes {stable_mosaic.version = 11 : i64} {
  func.func @vae_kernel(%arg0: i32, %arg1: memref<8x512xf32, #tpu.memory_space<vmem>>, %arg2: memref<8x64xf32, #tpu.memory_space<vmem>>, %arg3: memref<512x512xbf16, #tpu.memory_space<vmem>>, %arg4: memref<1x512xf32, #tpu.memory_space<vmem>>, %arg5: memref<512x512xbf16, #tpu.memory_space<vmem>>, %arg6: memref<1x512xf32, #tpu.memory_space<vmem>>, %arg7: memref<512x256xbf16, #tpu.memory_space<vmem>>, %arg8: memref<1x256xf32, #tpu.memory_space<vmem>>, %arg9: memref<256x128xbf16, #tpu.memory_space<vmem>>, %arg10: memref<1x128xf32, #tpu.memory_space<vmem>>, %arg11: memref<128x128xbf16, #tpu.memory_space<vmem>>, %arg12: memref<1x128xf32, #tpu.memory_space<vmem>>, %arg13: memref<64x128xbf16, #tpu.memory_space<vmem>>, %arg14: memref<1x128xf32, #tpu.memory_space<vmem>>, %arg15: memref<128x256xbf16, #tpu.memory_space<vmem>>, %arg16: memref<1x256xf32, #tpu.memory_space<vmem>>, %arg17: memref<256x512xbf16, #tpu.memory_space<vmem>>, %arg18: memref<1x512xf32, #tpu.memory_space<vmem>>, %arg19: memref<512x512xbf16, #tpu.memory_space<vmem>>, %arg20: memref<1x512xf32, #tpu.memory_space<vmem>>, %arg21: memref<512x512xbf16, #tpu.memory_space<vmem>>, %arg22: memref<1x512xf32, #tpu.memory_space<vmem>>, %arg23: memref<8x512xf32, #tpu.memory_space<vmem>>, %arg24: memref<8x128xf32, #tpu.memory_space<vmem>>) attributes {dimension_semantics = [#tpu.dimension_semantics<parallel>], iteration_bounds = array<i64: 2>, scalar_prefetch = 0 : i64, scratch_operands = 0 : i64, tpu.core_type = #tpu.core_type<tc>, window_params = [{transform_indices = @transform_0, window_bounds = array<i64: 8, 512>}, {transform_indices = @transform_1, window_bounds = array<i64: 8, 64>}, {pipeline_mode = #tpu.pipeline_mode<synchronous>, transform_indices = @transform_2, window_bounds = array<i64: 512, 512>}, {pipeline_mode = #tpu.pipeline_mode<synchronous>, transform_indices = @transform_3, window_bounds = array<i64: 1, 512>}, {pipeline_mode = #tpu.pipeline_mode<synchronous>, transform_indices = @transform_4, window_bounds = array<i64: 512, 512>}, {pipeline_mode = #tpu.pipeline_mode<synchronous>, transform_indices = @transform_5, window_bounds = array<i64: 1, 512>}, {pipeline_mode = #tpu.pipeline_mode<synchronous>, transform_indices = @transform_6, window_bounds = array<i64: 512, 256>}, {pipeline_mode = #tpu.pipeline_mode<synchronous>, transform_indices = @transform_7, window_bounds = array<i64: 1, 256>}, {pipeline_mode = #tpu.pipeline_mode<synchronous>, transform_indices = @transform_8, window_bounds = array<i64: 256, 128>}, {pipeline_mode = #tpu.pipeline_mode<synchronous>, transform_indices = @transform_9, window_bounds = array<i64: 1, 128>}, {pipeline_mode = #tpu.pipeline_mode<synchronous>, transform_indices = @transform_10, window_bounds = array<i64: 128, 128>}, {pipeline_mode = #tpu.pipeline_mode<synchronous>, transform_indices = @transform_11, window_bounds = array<i64: 1, 128>}, {pipeline_mode = #tpu.pipeline_mode<synchronous>, transform_indices = @transform_12, window_bounds = array<i64: 64, 128>}, {pipeline_mode = #tpu.pipeline_mode<synchronous>, transform_indices = @transform_13, window_bounds = array<i64: 1, 128>}, {pipeline_mode = #tpu.pipeline_mode<synchronous>, transform_indices = @transform_14, window_bounds = array<i64: 128, 256>}, {pipeline_mode = #tpu.pipeline_mode<synchronous>, transform_indices = @transform_15, window_bounds = array<i64: 1, 256>}, {pipeline_mode = #tpu.pipeline_mode<synchronous>, transform_indices = @transform_16, window_bounds = array<i64: 256, 512>}, {pipeline_mode = #tpu.pipeline_mode<synchronous>, transform_indices = @transform_17, window_bounds = array<i64: 1, 512>}, {pipeline_mode = #tpu.pipeline_mode<synchronous>, transform_indices = @transform_18, window_bounds = array<i64: 512, 512>}, {pipeline_mode = #tpu.pipeline_mode<synchronous>, transform_indices = @transform_19, window_bounds = array<i64: 1, 512>}, {pipeline_mode = #tpu.pipeline_mode<synchronous>, transform_indices = @transform_20, window_bounds = array<i64: 512, 512>}, {pipeline_mode = #tpu.pipeline_mode<synchronous>, transform_indices = @transform_21, window_bounds = array<i64: 1, 512>}, {transform_indices = @transform_22, window_bounds = array<i64: 8, 512>}, {transform_indices = @transform_23, window_bounds = array<i64: 8, 128>}]} {
    %c0 = arith.constant 0 : index
    %c0_0 = arith.constant 0 : index
    %0 = vector.load %arg3[%c0, %c0_0] : memref<512x512xbf16, #tpu.memory_space<vmem>>, vector<512x512xbf16>
    %c0_1 = arith.constant 0 : index
    %c0_2 = arith.constant 0 : index
    %1 = vector.load %arg4[%c0_1, %c0_2] : memref<1x512xf32, #tpu.memory_space<vmem>>, vector<1x512xf32>
    %c0_3 = arith.constant 0 : index
    %c0_4 = arith.constant 0 : index
    %2 = vector.load %arg5[%c0_3, %c0_4] : memref<512x512xbf16, #tpu.memory_space<vmem>>, vector<512x512xbf16>
    %c0_5 = arith.constant 0 : index
    %c0_6 = arith.constant 0 : index
    %3 = vector.load %arg6[%c0_5, %c0_6] : memref<1x512xf32, #tpu.memory_space<vmem>>, vector<1x512xf32>
    %c0_7 = arith.constant 0 : index
    %c0_8 = arith.constant 0 : index
    %4 = vector.load %arg7[%c0_7, %c0_8] : memref<512x256xbf16, #tpu.memory_space<vmem>>, vector<512x256xbf16>
    %c0_9 = arith.constant 0 : index
    %c0_10 = arith.constant 0 : index
    %5 = vector.load %arg8[%c0_9, %c0_10] : memref<1x256xf32, #tpu.memory_space<vmem>>, vector<1x256xf32>
    %c0_11 = arith.constant 0 : index
    %c0_12 = arith.constant 0 : index
    %6 = vector.load %arg9[%c0_11, %c0_12] : memref<256x128xbf16, #tpu.memory_space<vmem>>, vector<256x128xbf16>
    %c0_13 = arith.constant 0 : index
    %c0_14 = arith.constant 0 : index
    %7 = vector.load %arg10[%c0_13, %c0_14] : memref<1x128xf32, #tpu.memory_space<vmem>>, vector<1x128xf32>
    %c0_15 = arith.constant 0 : index
    %c0_16 = arith.constant 0 : index
    %8 = vector.load %arg11[%c0_15, %c0_16] : memref<128x128xbf16, #tpu.memory_space<vmem>>, vector<128x128xbf16>
    %c0_17 = arith.constant 0 : index
    %c0_18 = arith.constant 0 : index
    %9 = vector.load %arg12[%c0_17, %c0_18] : memref<1x128xf32, #tpu.memory_space<vmem>>, vector<1x128xf32>
    %c0_19 = arith.constant 0 : index
    %c0_20 = arith.constant 0 : index
    %10 = vector.load %arg13[%c0_19, %c0_20] : memref<64x128xbf16, #tpu.memory_space<vmem>>, vector<64x128xbf16>
    %c0_21 = arith.constant 0 : index
    %c0_22 = arith.constant 0 : index
    %11 = vector.load %arg14[%c0_21, %c0_22] : memref<1x128xf32, #tpu.memory_space<vmem>>, vector<1x128xf32>
    %c0_23 = arith.constant 0 : index
    %c0_24 = arith.constant 0 : index
    %12 = vector.load %arg15[%c0_23, %c0_24] : memref<128x256xbf16, #tpu.memory_space<vmem>>, vector<128x256xbf16>
    %c0_25 = arith.constant 0 : index
    %c0_26 = arith.constant 0 : index
    %13 = vector.load %arg16[%c0_25, %c0_26] : memref<1x256xf32, #tpu.memory_space<vmem>>, vector<1x256xf32>
    %c0_27 = arith.constant 0 : index
    %c0_28 = arith.constant 0 : index
    %14 = vector.load %arg17[%c0_27, %c0_28] : memref<256x512xbf16, #tpu.memory_space<vmem>>, vector<256x512xbf16>
    %c0_29 = arith.constant 0 : index
    %c0_30 = arith.constant 0 : index
    %15 = vector.load %arg18[%c0_29, %c0_30] : memref<1x512xf32, #tpu.memory_space<vmem>>, vector<1x512xf32>
    %c0_31 = arith.constant 0 : index
    %c0_32 = arith.constant 0 : index
    %16 = vector.load %arg19[%c0_31, %c0_32] : memref<512x512xbf16, #tpu.memory_space<vmem>>, vector<512x512xbf16>
    %c0_33 = arith.constant 0 : index
    %c0_34 = arith.constant 0 : index
    %17 = vector.load %arg20[%c0_33, %c0_34] : memref<1x512xf32, #tpu.memory_space<vmem>>, vector<1x512xf32>
    %c0_35 = arith.constant 0 : index
    %c0_36 = arith.constant 0 : index
    %18 = vector.load %arg21[%c0_35, %c0_36] : memref<512x512xbf16, #tpu.memory_space<vmem>>, vector<512x512xbf16>
    %c0_37 = arith.constant 0 : index
    %c0_38 = arith.constant 0 : index
    %19 = vector.load %arg22[%c0_37, %c0_38] : memref<1x512xf32, #tpu.memory_space<vmem>>, vector<1x512xf32>
    %c0_39 = arith.constant 0 : index
    %c0_40 = arith.constant 0 : index
    %20 = vector.load %arg1[%c0_39, %c0_40] : memref<8x512xf32, #tpu.memory_space<vmem>>, vector<8x512xf32>
    %c0_41 = arith.constant 0 : index
    %c0_42 = arith.constant 0 : index
    %21 = vector.load %arg2[%c0_41, %c0_42] : memref<8x64xf32, #tpu.memory_space<vmem>>, vector<8x64xf32>
    %22 = arith.truncf %20 : vector<8x512xf32> to vector<8x512xbf16>
    %cst = arith.constant dense<0.000000e+00> : vector<8x512xf32>
    %23 = tpu.matmul %22, %0, %cst {dimension_numbers = #tpu.dot_dimension_numbers<[1], [0], [0], [1], [0, 0, 1, 1], [], []>} : vector<8x512xbf16>, vector<512x512xbf16>, vector<8x512xf32> -> vector<8x512xf32>
    %24 = vector.broadcast %1 : vector<1x512xf32> to vector<8x512xf32>
    %25 = arith.addf %23, %24 : vector<8x512xf32>
    %cst_43 = arith.constant 0.000000e+00 : f32
    %26 = vector.broadcast %cst_43 : f32 to vector<8x512xf32>
    %27 = arith.cmpf ogt, %25, %26 : vector<8x512xf32>
    %cst_44 = arith.constant 5.000000e-01 : f32
    %28 = vector.broadcast %cst_44 : f32 to vector<8x512xf32>
    %29 = arith.mulf %28, %25 : vector<8x512xf32>
    %30 = arith.select %27, %25, %29 : vector<8x512xi1>, vector<8x512xf32>
    %31 = arith.truncf %30 : vector<8x512xf32> to vector<8x512xbf16>
    %cst_45 = arith.constant dense<0.000000e+00> : vector<8x512xf32>
    %32 = tpu.matmul %31, %2, %cst_45 {dimension_numbers = #tpu.dot_dimension_numbers<[1], [0], [0], [1], [0, 0, 1, 1], [], []>} : vector<8x512xbf16>, vector<512x512xbf16>, vector<8x512xf32> -> vector<8x512xf32>
    %33 = vector.broadcast %3 : vector<1x512xf32> to vector<8x512xf32>
    %34 = arith.addf %32, %33 : vector<8x512xf32>
    %cst_46 = arith.constant 0.000000e+00 : f32
    %35 = vector.broadcast %cst_46 : f32 to vector<8x512xf32>
    %36 = arith.cmpf ogt, %34, %35 : vector<8x512xf32>
    %cst_47 = arith.constant 5.000000e-01 : f32
    %37 = vector.broadcast %cst_47 : f32 to vector<8x512xf32>
    %38 = arith.mulf %37, %34 : vector<8x512xf32>
    %39 = arith.select %36, %34, %38 : vector<8x512xi1>, vector<8x512xf32>
    %40 = arith.truncf %39 : vector<8x512xf32> to vector<8x512xbf16>
    %cst_48 = arith.constant dense<0.000000e+00> : vector<8x256xf32>
    %41 = tpu.matmul %40, %4, %cst_48 {dimension_numbers = #tpu.dot_dimension_numbers<[1], [0], [0], [1], [0, 0, 1, 1], [], []>} : vector<8x512xbf16>, vector<512x256xbf16>, vector<8x256xf32> -> vector<8x256xf32>
    %42 = vector.broadcast %5 : vector<1x256xf32> to vector<8x256xf32>
    %43 = arith.addf %41, %42 : vector<8x256xf32>
    %cst_49 = arith.constant 0.000000e+00 : f32
    %44 = vector.broadcast %cst_49 : f32 to vector<8x256xf32>
    %45 = arith.cmpf ogt, %43, %44 : vector<8x256xf32>
    %cst_50 = arith.constant 5.000000e-01 : f32
    %46 = vector.broadcast %cst_50 : f32 to vector<8x256xf32>
    %47 = arith.mulf %46, %43 : vector<8x256xf32>
    %48 = arith.select %45, %43, %47 : vector<8x256xi1>, vector<8x256xf32>
    %49 = arith.truncf %48 : vector<8x256xf32> to vector<8x256xbf16>
    %cst_51 = arith.constant dense<0.000000e+00> : vector<8x128xf32>
    %50 = tpu.matmul %49, %6, %cst_51 {dimension_numbers = #tpu.dot_dimension_numbers<[1], [0], [0], [1], [0, 0, 1, 1], [], []>} : vector<8x256xbf16>, vector<256x128xbf16>, vector<8x128xf32> -> vector<8x128xf32>
    %51 = vector.broadcast %7 : vector<1x128xf32> to vector<8x128xf32>
    %52 = arith.addf %50, %51 : vector<8x128xf32>
    %cst_52 = arith.constant 0.000000e+00 : f32
    %53 = vector.broadcast %cst_52 : f32 to vector<8x128xf32>
    %54 = arith.cmpf ogt, %52, %53 : vector<8x128xf32>
    %cst_53 = arith.constant 5.000000e-01 : f32
    %55 = vector.broadcast %cst_53 : f32 to vector<8x128xf32>
    %56 = arith.mulf %55, %52 : vector<8x128xf32>
    %57 = arith.select %54, %52, %56 : vector<8x128xi1>, vector<8x128xf32>
    %58 = arith.truncf %57 : vector<8x128xf32> to vector<8x128xbf16>
    %cst_54 = arith.constant dense<0.000000e+00> : vector<8x128xf32>
    %59 = tpu.matmul %58, %8, %cst_54 {dimension_numbers = #tpu.dot_dimension_numbers<[1], [0], [0], [1], [0, 0, 1, 1], [], []>} : vector<8x128xbf16>, vector<128x128xbf16>, vector<8x128xf32> -> vector<8x128xf32>
    %60 = vector.broadcast %9 : vector<1x128xf32> to vector<8x128xf32>
    %61 = arith.addf %59, %60 : vector<8x128xf32>
    %62 = vector.extract_strided_slice %61 {offsets = [0, 0], sizes = [8, 64], strides = [1, 1]} : vector<8x128xf32> to vector<8x64xf32>
    %63 = vector.extract_strided_slice %61 {offsets = [0, 64], sizes = [8, 64], strides = [1, 1]} : vector<8x128xf32> to vector<8x64xf32>
    %cst_55 = arith.constant 5.000000e-01 : f32
    %64 = vector.broadcast %cst_55 : f32 to vector<8x64xf32>
    %65 = arith.mulf %64, %63 : vector<8x64xf32>
    %66 = math.exp %65 : vector<8x64xf32>
    %67 = arith.mulf %66, %21 : vector<8x64xf32>
    %68 = arith.addf %62, %67 : vector<8x64xf32>
    %69 = arith.truncf %68 : vector<8x64xf32> to vector<8x64xbf16>
    %cst_56 = arith.constant dense<0.000000e+00> : vector<8x128xf32>
    %70 = tpu.matmul %69, %10, %cst_56 {dimension_numbers = #tpu.dot_dimension_numbers<[1], [0], [0], [1], [0, 0, 1, 1], [], []>} : vector<8x64xbf16>, vector<64x128xbf16>, vector<8x128xf32> -> vector<8x128xf32>
    %71 = vector.broadcast %11 : vector<1x128xf32> to vector<8x128xf32>
    %72 = arith.addf %70, %71 : vector<8x128xf32>
    %cst_57 = arith.constant 0.000000e+00 : f32
    %73 = vector.broadcast %cst_57 : f32 to vector<8x128xf32>
    %74 = arith.cmpf ogt, %72, %73 : vector<8x128xf32>
    %cst_58 = arith.constant 5.000000e-01 : f32
    %75 = vector.broadcast %cst_58 : f32 to vector<8x128xf32>
    %76 = arith.mulf %75, %72 : vector<8x128xf32>
    %77 = arith.select %74, %72, %76 : vector<8x128xi1>, vector<8x128xf32>
    %78 = arith.truncf %77 : vector<8x128xf32> to vector<8x128xbf16>
    %cst_59 = arith.constant dense<0.000000e+00> : vector<8x256xf32>
    %79 = tpu.matmul %78, %12, %cst_59 {dimension_numbers = #tpu.dot_dimension_numbers<[1], [0], [0], [1], [0, 0, 1, 1], [], []>} : vector<8x128xbf16>, vector<128x256xbf16>, vector<8x256xf32> -> vector<8x256xf32>
    %80 = vector.broadcast %13 : vector<1x256xf32> to vector<8x256xf32>
    %81 = arith.addf %79, %80 : vector<8x256xf32>
    %cst_60 = arith.constant 0.000000e+00 : f32
    %82 = vector.broadcast %cst_60 : f32 to vector<8x256xf32>
    %83 = arith.cmpf ogt, %81, %82 : vector<8x256xf32>
    %cst_61 = arith.constant 5.000000e-01 : f32
    %84 = vector.broadcast %cst_61 : f32 to vector<8x256xf32>
    %85 = arith.mulf %84, %81 : vector<8x256xf32>
    %86 = arith.select %83, %81, %85 : vector<8x256xi1>, vector<8x256xf32>
    %87 = arith.truncf %86 : vector<8x256xf32> to vector<8x256xbf16>
    %cst_62 = arith.constant dense<0.000000e+00> : vector<8x512xf32>
    %88 = tpu.matmul %87, %14, %cst_62 {dimension_numbers = #tpu.dot_dimension_numbers<[1], [0], [0], [1], [0, 0, 1, 1], [], []>} : vector<8x256xbf16>, vector<256x512xbf16>, vector<8x512xf32> -> vector<8x512xf32>
    %89 = vector.broadcast %15 : vector<1x512xf32> to vector<8x512xf32>
    %90 = arith.addf %88, %89 : vector<8x512xf32>
    %cst_63 = arith.constant 0.000000e+00 : f32
    %91 = vector.broadcast %cst_63 : f32 to vector<8x512xf32>
    %92 = arith.cmpf ogt, %90, %91 : vector<8x512xf32>
    %cst_64 = arith.constant 5.000000e-01 : f32
    %93 = vector.broadcast %cst_64 : f32 to vector<8x512xf32>
    %94 = arith.mulf %93, %90 : vector<8x512xf32>
    %95 = arith.select %92, %90, %94 : vector<8x512xi1>, vector<8x512xf32>
    %96 = arith.truncf %95 : vector<8x512xf32> to vector<8x512xbf16>
    %cst_65 = arith.constant dense<0.000000e+00> : vector<8x512xf32>
    %97 = tpu.matmul %96, %16, %cst_65 {dimension_numbers = #tpu.dot_dimension_numbers<[1], [0], [0], [1], [0, 0, 1, 1], [], []>} : vector<8x512xbf16>, vector<512x512xbf16>, vector<8x512xf32> -> vector<8x512xf32>
    %98 = vector.broadcast %17 : vector<1x512xf32> to vector<8x512xf32>
    %99 = arith.addf %97, %98 : vector<8x512xf32>
    %cst_66 = arith.constant 0.000000e+00 : f32
    %100 = vector.broadcast %cst_66 : f32 to vector<8x512xf32>
    %101 = arith.cmpf ogt, %99, %100 : vector<8x512xf32>
    %cst_67 = arith.constant 5.000000e-01 : f32
    %102 = vector.broadcast %cst_67 : f32 to vector<8x512xf32>
    %103 = arith.mulf %102, %99 : vector<8x512xf32>
    %104 = arith.select %101, %99, %103 : vector<8x512xi1>, vector<8x512xf32>
    %105 = arith.truncf %104 : vector<8x512xf32> to vector<8x512xbf16>
    %cst_68 = arith.constant dense<0.000000e+00> : vector<8x512xf32>
    %106 = tpu.matmul %105, %18, %cst_68 {dimension_numbers = #tpu.dot_dimension_numbers<[1], [0], [0], [1], [0, 0, 1, 1], [], []>} : vector<8x512xbf16>, vector<512x512xbf16>, vector<8x512xf32> -> vector<8x512xf32>
    %107 = vector.broadcast %19 : vector<1x512xf32> to vector<8x512xf32>
    %108 = arith.addf %106, %107 : vector<8x512xf32>
    %109 = arith.negf %108 : vector<8x512xf32>
    %110 = math.exp %109 : vector<8x512xf32>
    %cst_69 = arith.constant 1.000000e+00 : f32
    %111 = vector.broadcast %cst_69 : f32 to vector<8x512xf32>
    %112 = arith.addf %111, %110 : vector<8x512xf32>
    %113 = arith.divf %111, %112 : vector<8x512xf32>
    %c0_70 = arith.constant 0 : index
    %c0_71 = arith.constant 0 : index
    %114 = vector.load %arg23[%c0_70, %c0_71] : memref<8x512xf32, #tpu.memory_space<vmem>>, vector<8x512xf32>
    tpu.vector_store %arg23[%c0_70, %c0_71], %113 {strides = array<i32>} : memref<8x512xf32, #tpu.memory_space<vmem>>, vector<8x512xf32>,
    %c0_72 = arith.constant 0 : index
    %c0_73 = arith.constant 0 : index
    %115 = vector.load %arg24[%c0_72, %c0_73] : memref<8x128xf32, #tpu.memory_space<vmem>>, vector<8x128xf32>
    tpu.vector_store %arg24[%c0_72, %c0_73], %61 {strides = array<i32>} : memref<8x128xf32, #tpu.memory_space<vmem>>, vector<8x128xf32>,
    return
  }
  func.func @transform_0(%arg0: i32) -> (i32, i32) {
    %c0_i32 = arith.constant 0 : i32
    %c0_i32_0 = arith.constant 0 : i32
    return %arg0, %c0_i32 : i32, i32
  }
  func.func @transform_1(%arg0: i32) -> (i32, i32) {
    %c0_i32 = arith.constant 0 : i32
    %c0_i32_0 = arith.constant 0 : i32
    return %arg0, %c0_i32 : i32, i32
  }
  func.func @transform_2(%arg0: i32) -> (i32, i32) {
    %c0_i32 = arith.constant 0 : i32
    %c0_i32_0 = arith.constant 0 : i32
    %c0_i32_1 = arith.constant 0 : i32
    return %c0_i32, %c0_i32_0 : i32, i32
  }
  func.func @transform_3(%arg0: i32) -> (i32, i32) {
    %c0_i32 = arith.constant 0 : i32
    %c0_i32_0 = arith.constant 0 : i32
    %c0_i32_1 = arith.constant 0 : i32
    return %c0_i32, %c0_i32_0 : i32, i32
  }
  func.func @transform_4(%arg0: i32) -> (i32, i32) {
    %c0_i32 = arith.constant 0 : i32
    %c0_i32_0 = arith.constant 0 : i32
    %c0_i32_1 = arith.constant 0 : i32
    return %c0_i32, %c0_i32_0 : i32, i32
  }
  func.func @transform_5(%arg0: i32) -> (i32, i32) {
    %c0_i32 = arith.constant 0 : i32
    %c0_i32_0 = arith.constant 0 : i32
    %c0_i32_1 = arith.constant 0 : i32
    return %c0_i32, %c0_i32_0 : i32, i32
  }
  func.func @transform_6(%arg0: i32) -> (i32, i32) {
    %c0_i32 = arith.constant 0 : i32
    %c0_i32_0 = arith.constant 0 : i32
    %c0_i32_1 = arith.constant 0 : i32
    return %c0_i32, %c0_i32_0 : i32, i32
  }
  func.func @transform_7(%arg0: i32) -> (i32, i32) {
    %c0_i32 = arith.constant 0 : i32
    %c0_i32_0 = arith.constant 0 : i32
    %c0_i32_1 = arith.constant 0 : i32
    return %c0_i32, %c0_i32_0 : i32, i32
  }
  func.func @transform_8(%arg0: i32) -> (i32, i32) {
    %c0_i32 = arith.constant 0 : i32
    %c0_i32_0 = arith.constant 0 : i32
    %c0_i32_1 = arith.constant 0 : i32
    return %c0_i32, %c0_i32_0 : i32, i32
  }
  func.func @transform_9(%arg0: i32) -> (i32, i32) {
    %c0_i32 = arith.constant 0 : i32
    %c0_i32_0 = arith.constant 0 : i32
    %c0_i32_1 = arith.constant 0 : i32
    return %c0_i32, %c0_i32_0 : i32, i32
  }
  func.func @transform_10(%arg0: i32) -> (i32, i32) {
    %c0_i32 = arith.constant 0 : i32
    %c0_i32_0 = arith.constant 0 : i32
    %c0_i32_1 = arith.constant 0 : i32
    return %c0_i32, %c0_i32_0 : i32, i32
  }
  func.func @transform_11(%arg0: i32) -> (i32, i32) {
    %c0_i32 = arith.constant 0 : i32
    %c0_i32_0 = arith.constant 0 : i32
    %c0_i32_1 = arith.constant 0 : i32
    return %c0_i32, %c0_i32_0 : i32, i32
  }
  func.func @transform_12(%arg0: i32) -> (i32, i32) {
    %c0_i32 = arith.constant 0 : i32
    %c0_i32_0 = arith.constant 0 : i32
    %c0_i32_1 = arith.constant 0 : i32
    return %c0_i32, %c0_i32_0 : i32, i32
  }
  func.func @transform_13(%arg0: i32) -> (i32, i32) {
    %c0_i32 = arith.constant 0 : i32
    %c0_i32_0 = arith.constant 0 : i32
    %c0_i32_1 = arith.constant 0 : i32
    return %c0_i32, %c0_i32_0 : i32, i32
  }
  func.func @transform_14(%arg0: i32) -> (i32, i32) {
    %c0_i32 = arith.constant 0 : i32
    %c0_i32_0 = arith.constant 0 : i32
    %c0_i32_1 = arith.constant 0 : i32
    return %c0_i32, %c0_i32_0 : i32, i32
  }
  func.func @transform_15(%arg0: i32) -> (i32, i32) {
    %c0_i32 = arith.constant 0 : i32
    %c0_i32_0 = arith.constant 0 : i32
    %c0_i32_1 = arith.constant 0 : i32
    return %c0_i32, %c0_i32_0 : i32, i32
  }
  func.func @transform_16(%arg0: i32) -> (i32, i32) {
    %c0_i32 = arith.constant 0 : i32
    %c0_i32_0 = arith.constant 0 : i32
    %c0_i32_1 = arith.constant 0 : i32
    return %c0_i32, %c0_i32_0 : i32, i32
  }
  func.func @transform_17(%arg0: i32) -> (i32, i32) {
    %c0_i32 = arith.constant 0 : i32
    %c0_i32_0 = arith.constant 0 : i32
    %c0_i32_1 = arith.constant 0 : i32
    return %c0_i32, %c0_i32_0 : i32, i32
  }
  func.func @transform_18(%arg0: i32) -> (i32, i32) {
    %c0_i32 = arith.constant 0 : i32
    %c0_i32_0 = arith.constant 0 : i32
    %c0_i32_1 = arith.constant 0 : i32
    return %c0_i32, %c0_i32_0 : i32, i32
  }
  func.func @transform_19(%arg0: i32) -> (i32, i32) {
    %c0_i32 = arith.constant 0 : i32
    %c0_i32_0 = arith.constant 0 : i32
    %c0_i32_1 = arith.constant 0 : i32
    return %c0_i32, %c0_i32_0 : i32, i32
  }
  func.func @transform_20(%arg0: i32) -> (i32, i32) {
    %c0_i32 = arith.constant 0 : i32
    %c0_i32_0 = arith.constant 0 : i32
    %c0_i32_1 = arith.constant 0 : i32
    return %c0_i32, %c0_i32_0 : i32, i32
  }
  func.func @transform_21(%arg0: i32) -> (i32, i32) {
    %c0_i32 = arith.constant 0 : i32
    %c0_i32_0 = arith.constant 0 : i32
    %c0_i32_1 = arith.constant 0 : i32
    return %c0_i32, %c0_i32_0 : i32, i32
  }
  func.func @transform_22(%arg0: i32) -> (i32, i32) {
    %c0_i32 = arith.constant 0 : i32
    %c0_i32_0 = arith.constant 0 : i32
    return %arg0, %c0_i32 : i32, i32
  }
  func.func @transform_23(%arg0: i32) -> (i32, i32) {
    %c0_i32 = arith.constant 0 : i32
    %c0_i32_0 = arith.constant 0 : i32
    return %arg0, %c0_i32 : i32, i32
  }
}

</mosaic_0001>

<llo_original>
// kernel: vae_forward.1
$region0: #{vae_forward.1}
  #allocation0 [shape = 'u32[]', space=smem, size = 0x4, offset = 0x4, fixed_abs, tag = 'smem constant byte address 0x4 - core index']
  #allocation1 [shape = 'u32[72,128]{1,0:T(1,128)}', space=vmem, size = 0x9000, scoped, tag = 'internal scratch']
  %s0 = inlined_call_operand.hbm [shape: f32[16,512], index: 0, kind: input, shape index: {}]
  %s1 = inlined_call_operand.hbm [shape: f32[16,64], index: 1, kind: input, shape index: {}]
  %s2 = inlined_call_operand.hbm [shape: bf16[512,512], index: 2, kind: input, shape index: {}]
  %s3 = inlined_call_operand.hbm [shape: f32[1,512], index: 3, kind: input, shape index: {}]
  %s4 = inlined_call_operand.hbm [shape: bf16[512,512], index: 4, kind: input, shape index: {}]
  %s5 = inlined_call_operand.vmem [shape: f32[1,512], index: 5, kind: input, shape index: {}]
  %s6 = inlined_call_operand.hbm [shape: bf16[512,256], index: 6, kind: input, shape index: {}]
  %s7 = inlined_call_operand.hbm [shape: f32[1,256], index: 7, kind: input, shape index: {}]
  %s8 = inlined_call_operand.hbm [shape: bf16[256,128], index: 8, kind: input, shape index: {}]
  %s9 = inlined_call_operand.hbm [shape: f32[1,128], index: 9, kind: input, shape index: {}]
  %s10 = inlined_call_operand.hbm [shape: bf16[128,128], index: 10, kind: input, shape index: {}]
  %s11 = inlined_call_operand.hbm [shape: f32[1,128], index: 11, kind: input, shape index: {}]
  %s12 = inlined_call_operand.hbm [shape: bf16[64,128], index: 12, kind: input, shape index: {}]
  %s13 = inlined_call_operand.hbm [shape: f32[1,128], index: 13, kind: input, shape index: {}]
  %s14 = inlined_call_operand.hbm [shape: bf16[128,256], index: 14, kind: input, shape index: {}]
  %s15 = inlined_call_operand.hbm [shape: f32[1,256], index: 15, kind: input, shape index: {}]
  %s16 = inlined_call_operand.hbm [shape: bf16[256,512], index: 16, kind: input, shape index: {}]
  %s17 = inlined_call_operand.vmem [shape: f32[1,512], index: 17, kind: input, shape index: {}]
  %s18 = inlined_call_operand.hbm [shape: bf16[512,512], index: 18, kind: input, shape index: {}]
  %s19 = inlined_call_operand.vmem [shape: f32[1,512], index: 19, kind: input, shape index: {}]
  %s20 = inlined_call_operand.hbm [shape: bf16[512,512], index: 20, kind: input, shape index: {}]
  %s21 = inlined_call_operand.vmem [shape: f32[1,512], index: 21, kind: input, shape index: {}]
  %s22 = inlined_call_operand.hbm [shape: f32[16,512], index: 22, kind: output, shape index: {0}]
  %s23 = inlined_call_operand.vmem [shape: f32[16,128], index: 23, kind: output, shape index: {1}]
  %24 = xla_tuple %s22, %s23
  %s25 = sld [smem:[#allocation0]]
  $region201: #{vae_forward.1} parent=0
    _
  %s27 = ssub.s32 1, %s25
  %s28 = scalar_select 0, %s27, %s25
  $region1: #{vae_forward.1} parent=0
    #allocation2 [shape = 'u8[32768]{0}', space=vmem, size = 0x8000, scoped, tag = 'input window, operand 0']
    #allocation3 [shape = 's32[2]{0}', space=sflag, size = 0x8, scoped, tag = 'scoped memory for vae_forward.1']
    #allocation4 [shape = 's32[2]{0}', space=sflag, size = 0x8, scoped, tag = 'scoped memory for vae_forward.1']
    #allocation5 [shape = 'u8[8192]{0}', space=vmem, size = 0x2000, scoped, tag = 'input window, operand 1']
    #allocation6 [shape = 's32[2]{0}', space=sflag, size = 0x8, scoped, tag = 'scoped memory for vae_forward.1']
    #allocation7 [shape = 'u8[524288]{0}', space=vmem, size = 0x80000, scoped, tag = 'input window, operand 2, single buffered']
    #allocation8 [shape = 'u8[2048]{0}', space=vmem, size = 0x800, scoped, tag = 'input window, operand 3, single buffered']
    #allocation9 [shape = 's32[1]{0}', space=sflag, size = 0x4, scoped, tag = 'scoped memory for vae_forward.1']
    #allocation10 [shape = 'u8[524288]{0}', space=vmem, size = 0x80000, scoped, tag = 'input window, operand 4, single buffered']
    #allocation11 [shape = 'u8[262144]{0}', space=vmem, size = 0x40000, scoped, tag = 'input window, operand 6, single buffered']
    #allocation12 [shape = 's32[1]{0}', space=sflag, size = 0x4, scoped, tag = 'scoped memory for vae_forward.1']
    #allocation13 [shape = 'u8[1024]{0}', space=vmem, size = 0x400, scoped, tag = 'input window, operand 7, single buffered']
    #allocation14 [shape = 'u8[65536]{0}', space=vmem, size = 0x10000, scoped, tag = 'input window, operand 8, single buffered']
    #allocation15 [shape = 's32[1]{0}', space=sflag, size = 0x4, scoped, tag = 'scoped memory for vae_forward.1']
    #allocation16 [shape = 'u8[512]{0}', space=vmem, size = 0x400, scoped, tag = 'input window, operand 9, single buffered']
    #allocation17 [shape = 'u8[32768]{0}', space=vmem, size = 0x8000, scoped, tag = 'input window, operand 10, single buffered']
    #allocation18 [shape = 's32[1]{0}', space=sflag, size = 0x4, scoped, tag = 'scoped memory for vae_forward.1']
    #allocation19 [shape = 'u8[512]{0}', space=vmem, size = 0x400, scoped, tag = 'input window, operand 11, single buffered']
    #allocation20 [shape = 'u8[16384]{0}', space=vmem, size = 0x4000, scoped, tag = 'input window, operand 12, single buffered']
    #allocation21 [shape = 's32[1]{0}', space=sflag, size = 0x4, scoped, tag = 'scoped memory for vae_forward.1']
    #allocation22 [shape = 'u8[512]{0}', space=vmem, size = 0x400, scoped, tag = 'input window, operand 13, single buffered']
    #allocation23 [shape = 'u8[65536]{0}', space=vmem, size = 0x10000, scoped, tag = 'input window, operand 14, single buffered']
    #allocation24 [shape = 's32[1]{0}', space=sflag, size = 0x4, scoped, tag = 'scoped memory for vae_forward.1']
    #allocation25 [shape = 'u8[1024]{0}', space=vmem, size = 0x400, scoped, tag = 'input window, operand 15, single buffered']
    #allocation26 [shape = 'u8[262144]{0}', space=vmem, size = 0x40000, scoped, tag = 'input window, operand 16, single buffered']
    #allocation27 [shape = 's32[1]{0}', space=sflag, size = 0x4, scoped, tag = 'scoped memory for vae_forward.1']
    #allocation28 [shape = 'u8[524288]{0}', space=vmem, size = 0x80000, scoped, tag = 'input window, operand 18, single buffered']
    #allocation29 [shape = 'u8[524288]{0}', space=vmem, size = 0x80000, scoped, tag = 'input window, operand 20, single buffered']
    #allocation30 [shape = 's32[1]{0}', space=sflag, size = 0x4, scoped, tag = 'scoped memory for vae_forward.1']
    #allocation31 [shape = 'u8[32768]{0}', space=vmem, size = 0x8000, scoped, tag = 'output window, operand 0']
    %29 = vsyncpa [#allocation3], 0
    %s30 = scalar_lea.sflag [#allocation3], 1
    %31 = vsyncpa %s30, 0
    %32 = vsyncpa [#allocation6], 0
    %s33 = scalar_lea.sflag [#allocation6], 1
    %34 = vsyncpa %s33, 0
    %35 = vsyncpa [#allocation9], 0
    %36 = vsyncpa [#allocation12], 0
    %37 = vsyncpa [#allocation15], 0
    %38 = vsyncpa [#allocation18], 0
    %39 = vsyncpa [#allocation21], 0
    %40 = vsyncpa [#allocation24], 0
    %41 = vsyncpa [#allocation27], 0
    %42 = vsyncpa [#allocation30], 0
    %43 = vsyncpa [#allocation4], 0
    %s44 = scalar_lea.sflag [#allocation4], 1
    %45 = vsyncpa %s44, 0
    loop: start=0, step=1, limit=4
    $region2: #{vae_forward.1} parent=1 // loop_pre_header
      _
    $region3: #{vae_forward.1} parent=1 // loop_header
      %s47 = sphi 0, %s51
      %p48 = scmp.ge.s32.totalorder %s47, 4
      %s57 = sphi 0, %s59
      %s60 = sphi 0, %s57
      %s61 = sphi 0, %s60
      %s77 = sphi 0, %s61
      %s83 = sphi 0, %s85
      %s86 = sphi 0, %s83
      %s87 = sphi 0, %s86
      %s103 = sphi 0, %s87
      %s107 = sphi 0, %s107
      %s109 = sphi 0, %s107
      %s110 = sphi 0, %s109
      %s124 = sphi 0, %s110
      %s128 = sphi 0, %s128
      %s130 = sphi 0, %s128
      %s131 = sphi 0, %s130
      %s145 = sphi 0, %s131
      %s149 = sphi 0, %s149
      %s151 = sphi 0, %s149
      %s152 = sphi 0, %s151
      %s166 = sphi 0, %s152
      %s170 = sphi 0, %s170
      %s172 = sphi 0, %s170
      %s173 = sphi 0, %s172
      %s187 = sphi 0, %s173
      %s191 = sphi 0, %s191
      %s193 = sphi 0, %s191
      %s194 = sphi 0, %s193
      %s208 = sphi 0, %s194
      %s212 = sphi 0, %s212
      %s214 = sphi 0, %s212
      %s215 = sphi 0, %s214
      %s229 = sphi 0, %s215
      %s233 = sphi 0, %s233
      %s235 = sphi 0, %s233
      %s236 = sphi 0, %s235
      %s250 = sphi 0, %s236
      %s254 = sphi 0, %s254
      %s256 = sphi 0, %s254
      %s257 = sphi 0, %s256
      %s271 = sphi 0, %s257
      %s275 = sphi 0, %s275
      %s277 = sphi 0, %s275
      %s278 = sphi 0, %s277
      %s292 = sphi 0, %s278
      %s296 = sphi 0, %s296
      %s298 = sphi 0, %s296
      %s299 = sphi 0, %s298
      %s313 = sphi 0, %s299
      %s317 = sphi 0, %s317
      %s319 = sphi 0, %s317
      %s320 = sphi 0, %s319
      %s334 = sphi 0, %s320
      %s338 = sphi 0, %s338
      %s340 = sphi 0, %s338
      %s341 = sphi 0, %s340
      %s355 = sphi 0, %s341
      %s359 = sphi 0, %s359
      %s361 = sphi 0, %s359
      %s362 = sphi 0, %s361
      %s376 = sphi 0, %s362
      %s380 = sphi 0, %s380
      %s382 = sphi 0, %s380
      %s383 = sphi 0, %s382
      %s397 = sphi 0, %s383
      %s401 = sphi 0, %s401
      %s403 = sphi 0, %s401
      %s404 = sphi 0, %s403
      %s418 = sphi 0, %s404
      %s422 = sphi 0, %s422
      %s424 = sphi 0, %s422
      %s425 = sphi 0, %s424
      %s439 = sphi 0, %s425
      %s443 = sphi 0, %s443
      %s445 = sphi 0, %s443
      %s446 = sphi 0, %s445
      %s460 = sphi 0, %s446
      %s464 = sphi 0, %s464
      %s466 = sphi 0, %s464
      %s467 = sphi 0, %s466
      %s481 = sphi 0, %s467
      %s485 = sphi 0, %s485
      %s487 = sphi 0, %s485
      %s488 = sphi 0, %s487
      %s502 = sphi 0, %s488
      %s506 = sphi 0, %s506
      %s508 = sphi 0, %s506
      %s509 = sphi 0, %s508
      %s523 = sphi 0, %s509
      %s529 = sphi 0, %s531
      %s532 = sphi 0, %s529
      %s533 = sphi 0, %s532
      %s549 = sphi 0, %s533
      %s555 = sphi 0, %s557
      %s558 = sphi 0, %s555
      %s559 = sphi 0, %s558
      %s575 = sphi 0, %s559
    $region4: #{vae_forward.1} parent=1 // loop_header_branch
      %50 = sbr.rel (%p48) target = $region8
    $region5: #{vae_forward.1} parent=1 // loop_body
      %s52 = ssub.s32 %s47, 1
      %s53 = ssub.s32 %s47, 2
      %s54 = sadd.s32 %s47, 1
      %s55 = ssub.s32 %s47, %s54
      %p56 = scmp.eq.s32.totalorder %s55, 0
      %s58 = sadd.s32 %s57, 1
      %s59 = scalar_select %p56, %s57, %s58
      %p62 = pneg %p56
      %p63 = scmp.eq.s32.totalorder %s47, 1
      %p64 = por %p62, %p63
      %p65 = scmp.ne.s32.totalorder %s57, %s60
      %p66 = scmp.eq.s32.totalorder %s47, 0
      %p67 = por %p65, %p66
      %p68 = scmp.ne.s32.totalorder %s57, %s60
      %p69 = scmp.eq.s32.totalorder %s52, 1
      %p70 = por %p68, %p69
      %p71 = scmp.ne.s32.totalorder %s60, %s61
      %p72 = scmp.eq.s32.totalorder %s52, 0
      %p73 = por %p71, %p72
      %p74 = scmp.ne.s32.totalorder %s60, %s61
      %p75 = scmp.eq.s32.totalorder %s53, 1
      %p76 = por %p74, %p75
      %p78 = scmp.ne.s32.totalorder %s61, %s77
      %p79 = scmp.eq.s32.totalorder %s53, 0
      %p80 = por %p78, %p79
      %s81 = ssub.s32 %s47, %s54
      %p82 = scmp.eq.s32.totalorder %s81, 0
      %s84 = sadd.s32 %s83, 1
      %s85 = scalar_select %p82, %s83, %s84
      %p88 = pneg %p82
      %p89 = scmp.eq.s32.totalorder %s47, 1
      %p90 = por %p88, %p89
      %p91 = scmp.ne.s32.totalorder %s83, %s86
      %p92 = scmp.eq.s32.totalorder %s47, 0
      %p93 = por %p91, %p92
      %p94 = scmp.ne.s32.totalorder %s83, %s86
      %p95 = scmp.eq.s32.totalorder %s52, 1
      %p96 = por %p94, %p95
      %p97 = scmp.ne.s32.totalorder %s86, %s87
      %p98 = scmp.eq.s32.totalorder %s52, 0
      %p99 = por %p97, %p98
      %p100 = scmp.ne.s32.totalorder %s86, %s87
      %p101 = scmp.eq.s32.totalorder %s53, 1
      %p102 = por %p100, %p101
      %p104 = scmp.ne.s32.totalorder %s87, %s103
      %p105 = scmp.eq.s32.totalorder %s53, 0
      %p106 = por %p104, %p105
      %s108 = sadd.s32 %s107, 1
      %p111 = scmp.eq.s32.totalorder %s47, 1
      %p112 = scmp.ne.s32.totalorder %s107, %s109
      %p113 = scmp.eq.s32.totalorder %s47, 0
      %p114 = por %p112, %p113
      %p115 = scmp.ne.s32.totalorder %s107, %s109
      %p116 = scmp.eq.s32.totalorder %s52, 1
      %p117 = por %p115, %p116
      %p118 = scmp.ne.s32.totalorder %s109, %s110
      %p119 = scmp.eq.s32.totalorder %s52, 0
      %p120 = por %p118, %p119
      %p121 = scmp.ne.s32.totalorder %s109, %s110
      %p122 = scmp.eq.s32.totalorder %s53, 1
      %p123 = por %p121, %p122
      %p125 = scmp.ne.s32.totalorder %s110, %s124
      %p126 = scmp.eq.s32.totalorder %s53, 0
      %p127 = por %p125, %p126
      %s129 = sadd.s32 %s128, 1
      %p132 = scmp.eq.s32.totalorder %s47, 1
      %p133 = scmp.ne.s32.totalorder %s128, %s130
      %p134 = scmp.eq.s32.totalorder %s47, 0
      %p135 = por %p133, %p134
      %p136 = scmp.ne.s32.totalorder %s128, %s130
      %p137 = scmp.eq.s32.totalorder %s52, 1
      %p138 = por %p136, %p137
      %p139 = scmp.ne.s32.totalorder %s130, %s131
      %p140 = scmp.eq.s32.totalorder %s52, 0
      %p141 = por %p139, %p140
      %p142 = scmp.ne.s32.totalorder %s130, %s131
      %p143 = scmp.eq.s32.totalorder %s53, 1
      %p144 = por %p142, %p143
      %p146 = scmp.ne.s32.totalorder %s131, %s145
      %p147 = scmp.eq.s32.totalorder %s53, 0
      %p148 = por %p146, %p147
      %s150 = sadd.s32 %s149, 1
      %p153 = scmp.eq.s32.totalorder %s47, 1
      %p154 = scmp.ne.s32.totalorder %s149, %s151
      %p155 = scmp.eq.s32.totalorder %s47, 0
      %p156 = por %p154, %p155
      %p157 = scmp.ne.s32.totalorder %s149, %s151
      %p158 = scmp.eq.s32.totalorder %s52, 1
      %p159 = por %p157, %p158
      %p160 = scmp.ne.s32.totalorder %s151, %s152
      %p161 = scmp.eq.s32.totalorder %s52, 0
      %p162 = por %p160, %p161
      %p163 = scmp.ne.s32.totalorder %s151, %s152
      %p164 = scmp.eq.s32.totalorder %s53, 1
      %p165 = por %p163, %p164
      %p167 = scmp.ne.s32.totalorder %s152, %s166
      %p168 = scmp.eq.s32.totalorder %s53, 0
      %p169 = por %p167, %p168
      %s171 = sadd.s32 %s170, 1
      %p174 = scmp.eq.s32.totalorder %s47, 1
      %p175 = scmp.ne.s32.totalorder %s170, %s172
      %p176 = scmp.eq.s32.totalorder %s47, 0
      %p177 = por %p175, %p176
      %p178 = scmp.ne.s32.totalorder %s170, %s172
      %p179 = scmp.eq.s32.totalorder %s52, 1
      %p180 = por %p178, %p179
      %p181 = scmp.ne.s32.totalorder %s172, %s173
      %p182 = scmp.eq.s32.totalorder %s52, 0
      %p183 = por %p181, %p182
      %p184 = scmp.ne.s32.totalorder %s172, %s173
      %p185 = scmp.eq.s32.totalorder %s53, 1
      %p186 = por %p184, %p185
      %p188 = scmp.ne.s32.totalorder %s173, %s187
      %p189 = scmp.eq.s32.totalorder %s53, 0
      %p190 = por %p188, %p189
      %s192 = sadd.s32 %s191, 1
      %p195 = scmp.eq.s32.totalorder %s47, 1
      %p196 = scmp.ne.s32.totalorder %s191, %s193
      %p197 = scmp.eq.s32.totalorder %s47, 0
      %p198 = por %p196, %p197
      %p199 = scmp.ne.s32.totalorder %s191, %s193
      %p200 = scmp.eq.s32.totalorder %s52, 1
      %p201 = por %p199, %p200
      %p202 = scmp.ne.s32.totalorder %s193, %s194
      %p203 = scmp.eq.s32.totalorder %s52, 0
      %p204 = por %p202, %p203
      %p205 = scmp.ne.s32.totalorder %s193, %s194
      %p206 = scmp.eq.s32.totalorder %s53, 1
      %p207 = por %p205, %p206
      %p209 = scmp.ne.s32.totalorder %s194, %s208
      %p210 = scmp.eq.s32.totalorder %s53, 0
      %p211 = por %p209, %p210
      %s213 = sadd.s32 %s212, 1
      %p216 = scmp.eq.s32.totalorder %s47, 1
      %p217 = scmp.ne.s32.totalorder %s212, %s214
      %p218 = scmp.eq.s32.totalorder %s47, 0
      %p219 = por %p217, %p218
      %p220 = scmp.ne.s32.totalorder %s212, %s214
      %p221 = scmp.eq.s32.totalorder %s52, 1
      %p222 = por %p220, %p221
      %p223 = scmp.ne.s32.totalorder %s214, %s215
      %p224 = scmp.eq.s32.totalorder %s52, 0
      %p225 = por %p223, %p224
      %p226 = scmp.ne.s32.totalorder %s214, %s215
      %p227 = scmp.eq.s32.totalorder %s53, 1
      %p228 = por %p226, %p227
      %p230 = scmp.ne.s32.totalorder %s215, %s229
      %p231 = scmp.eq.s32.totalorder %s53, 0
      %p232 = por %p230, %p231
      %s234 = sadd.s32 %s233, 1
      %p237 = scmp.eq.s32.totalorder %s47, 1
      %p238 = scmp.ne.s32.totalorder %s233, %s235
      %p239 = scmp.eq.s32.totalorder %s47, 0
      %p240 = por %p238, %p239
      %p241 = scmp.ne.s32.totalorder %s233, %s235
      %p242 = scmp.eq.s32.totalorder %s52, 1
      %p243 = por %p241, %p242
      %p244 = scmp.ne.s32.totalorder %s235, %s236
      %p245 = scmp.eq.s32.totalorder %s52, 0
      %p246 = por %p244, %p245
      %p247 = scmp.ne.s32.totalorder %s235, %s236
      %p248 = scmp.eq.s32.totalorder %s53, 1
      %p249 = por %p247, %p248
      %p251 = scmp.ne.s32.totalorder %s236, %s250
      %p252 = scmp.eq.s32.totalorder %s53, 0
      %p253 = por %p251, %p252
      %s255 = sadd.s32 %s254, 1
      %p258 = scmp.eq.s32.totalorder %s47, 1
      %p259 = scmp.ne.s32.totalorder %s254, %s256
      %p260 = scmp.eq.s32.totalorder %s47, 0
      %p261 = por %p259, %p260
      %p262 = scmp.ne.s32.totalorder %s254, %s256
      %p263 = scmp.eq.s32.totalorder %s52, 1
      %p264 = por %p262, %p263
      %p265 = scmp.ne.s32.totalorder %s256, %s257
      %p266 = scmp.eq.s32.totalorder %s52, 0
      %p267 = por %p265, %p266
      %p268 = scmp.ne.s32.totalorder %s256, %s257
      %p269 = scmp.eq.s32.totalorder %s53, 1
      %p270 = por %p268, %p269
      %p272 = scmp.ne.s32.totalorder %s257, %s271
      %p273 = scmp.eq.s32.totalorder %s53, 0
      %p274 = por %p272, %p273
      %s276 = sadd.s32 %s275, 1
      %p279 = scmp.eq.s32.totalorder %s47, 1
      %p280 = scmp.ne.s32.totalorder %s275, %s277
      %p281 = scmp.eq.s32.totalorder %s47, 0
      %p282 = por %p280, %p281
      %p283 = scmp.ne.s32.totalorder %s275, %s277
      %p284 = scmp.eq.s32.totalorder %s52, 1
      %p285 = por %p283, %p284
      %p286 = scmp.ne.s32.totalorder %s277, %s278
      %p287 = scmp.eq.s32.totalorder %s52, 0
      %p288 = por %p286, %p287
      %p289 = scmp.ne.s32.totalorder %s277, %s278
      %p290 = scmp.eq.s32.totalorder %s53, 1
      %p291 = por %p289, %p290
      %p293 = scmp.ne.s32.totalorder %s278, %s292
      %p294 = scmp.eq.s32.totalorder %s53, 0
      %p295 = por %p293, %p294
      %s297 = sadd.s32 %s296, 1
      %p300 = scmp.eq.s32.totalorder %s47, 1
      %p301 = scmp.ne.s32.totalorder %s296, %s298
      %p302 = scmp.eq.s32.totalorder %s47, 0
      %p303 = por %p301, %p302
      %p304 = scmp.ne.s32.totalorder %s296, %s298
      %p305 = scmp.eq.s32.totalorder %s52, 1
      %p306 = por %p304, %p305
      %p307 = scmp.ne.s32.totalorder %s298, %s299
      %p308 = scmp.eq.s32.totalorder %s52, 0
      %p309 = por %p307, %p308
      %p310 = scmp.ne.s32.totalorder %s298, %s299
      %p311 = scmp.eq.s32.totalorder %s53, 1
      %p312 = por %p310, %p311
      %p314 = scmp.ne.s32.totalorder %s299, %s313
      %p315 = scmp.eq.s32.totalorder %s53, 0
      %p316 = por %p314, %p315
      %s318 = sadd.s32 %s317, 1
      %p321 = scmp.eq.s32.totalorder %s47, 1
      %p322 = scmp.ne.s32.totalorder %s317, %s319
      %p323 = scmp.eq.s32.totalorder %s47, 0
      %p324 = por %p322, %p323
      %p325 = scmp.ne.s32.totalorder %s317, %s319
      %p326 = scmp.eq.s32.totalorder %s52, 1
      %p327 = por %p325, %p326
      %p328 = scmp.ne.s32.totalorder %s319, %s320
      %p329 = scmp.eq.s32.totalorder %s52, 0
      %p330 = por %p328, %p329
      %p331 = scmp.ne.s32.totalorder %s319, %s320
      %p332 = scmp.eq.s32.totalorder %s53, 1
      %p333 = por %p331, %p332
      %p335 = scmp.ne.s32.totalorder %s320, %s334
      %p336 = scmp.eq.s32.totalorder %s53, 0
      %p337 = por %p335, %p336
      %s339 = sadd.s32 %s338, 1
      %p342 = scmp.eq.s32.totalorder %s47, 1
      %p343 = scmp.ne.s32.totalorder %s338, %s340
      %p344 = scmp.eq.s32.totalorder %s47, 0
      %p345 = por %p343, %p344
      %p346 = scmp.ne.s32.totalorder %s338, %s340
      %p347 = scmp.eq.s32.totalorder %s52, 1
      %p348 = por %p346, %p347
      %p349 = scmp.ne.s32.totalorder %s340, %s341
      %p350 = scmp.eq.s32.totalorder %s52, 0
      %p351 = por %p349, %p350
      %p352 = scmp.ne.s32.totalorder %s340, %s341
      %p353 = scmp.eq.s32.totalorder %s53, 1
      %p354 = por %p352, %p353
      %p356 = scmp.ne.s32.totalorder %s341, %s355
      %p357 = scmp.eq.s32.totalorder %s53, 0
      %p358 = por %p356, %p357
      %s360 = sadd.s32 %s359, 1
      %p363 = scmp.eq.s32.totalorder %s47, 1
      %p364 = scmp.ne.s32.totalorder %s359, %s361
      %p365 = scmp.eq.s32.totalorder %s47, 0
      %p366 = por %p364, %p365
      %p367 = scmp.ne.s32.totalorder %s359, %s361
      %p368 = scmp.eq.s32.totalorder %s52, 1
      %p369 = por %p367, %p368
      %p370 = scmp.ne.s32.totalorder %s361, %s362
      %p371 = scmp.eq.s32.totalorder %s52, 0
      %p372 = por %p370, %p371
      %p373 = scmp.ne.s32.totalorder %s361, %s362
      %p374 = scmp.eq.s32.totalorder %s53, 1
      %p375 = por %p373, %p374
      %p377 = scmp.ne.s32.totalorder %s362, %s376
      %p378 = scmp.eq.s32.totalorder %s53, 0
      %p379 = por %p377, %p378
      %s381 = sadd.s32 %s380, 1
      %p384 = scmp.eq.s32.totalorder %s47, 1
      %p385 = scmp.ne.s32.totalorder %s380, %s382
      %p386 = scmp.eq.s32.totalorder %s47, 0
      %p387 = por %p385, %p386
      %p388 = scmp.ne.s32.totalorder %s380, %s382
      %p389 = scmp.eq.s32.totalorder %s52, 1
      %p390 = por %p388, %p389
      %p391 = scmp.ne.s32.totalorder %s382, %s383
      %p392 = scmp.eq.s32.totalorder %s52, 0
      %p393 = por %p391, %p392
      %p394 = scmp.ne.s32.totalorder %s382, %s383
      %p395 = scmp.eq.s32.totalorder %s53, 1
      %p396 = por %p394, %p395
      %p398 = scmp.ne.s32.totalorder %s383, %s397
      %p399 = scmp.eq.s32.totalorder %s53, 0
      %p400 = por %p398, %p399
      %s402 = sadd.s32 %s401, 1
      %p405 = scmp.eq.s32.totalorder %s47, 1
      %p406 = scmp.ne.s32.totalorder %s401, %s403
      %p407 = scmp.eq.s32.totalorder %s47, 0
      %p408 = por %p406, %p407
      %p409 = scmp.ne.s32.totalorder %s401, %s403
      %p410 = scmp.eq.s32.totalorder %s52, 1
      %p411 = por %p409, %p410
      %p412 = scmp.ne.s32.totalorder %s403, %s404
      %p413 = scmp.eq.s32.totalorder %s52, 0
      %p414 = por %p412, %p413
      %p415 = scmp.ne.s32.totalorder %s403, %s404
      %p416 = scmp.eq.s32.totalorder %s53, 1
      %p417 = por %p415, %p416
      %p419 = scmp.ne.s32.totalorder %s404, %s418
      %p420 = scmp.eq.s32.totalorder %s53, 0
      %p421 = por %p419, %p420
      %s423 = sadd.s32 %s422, 1
      %p426 = scmp.eq.s32.totalorder %s47, 1
      %p427 = scmp.ne.s32.totalorder %s422, %s424
      %p428 = scmp.eq.s32.totalorder %s47, 0
      %p429 = por %p427, %p428
      %p430 = scmp.ne.s32.totalorder %s422, %s424
      %p431 = scmp.eq.s32.totalorder %s52, 1
      %p432 = por %p430, %p431
      %p433 = scmp.ne.s32.totalorder %s424, %s425
      %p434 = scmp.eq.s32.totalorder %s52, 0
      %p435 = por %p433, %p434
      %p436 = scmp.ne.s32.totalorder %s424, %s425
      %p437 = scmp.eq.s32.totalorder %s53, 1
      %p438 = por %p436, %p437
      %p440 = scmp.ne.s32.totalorder %s425, %s439
      %p441 = scmp.eq.s32.totalorder %s53, 0
      %p442 = por %p440, %p441
      %s444 = sadd.s32 %s443, 1
      %p447 = scmp.eq.s32.totalorder %s47, 1
      %p448 = scmp.ne.s32.totalorder %s443, %s445
      %p449 = scmp.eq.s32.totalorder %s47, 0
      %p450 = por %p448, %p449
      %p451 = scmp.ne.s32.totalorder %s443, %s445
      %p452 = scmp.eq.s32.totalorder %s52, 1
      %p453 = por %p451, %p452
      %p454 = scmp.ne.s32.totalorder %s445, %s446
      %p455 = scmp.eq.s32.totalorder %s52, 0
      %p456 = por %p454, %p455
      %p457 = scmp.ne.s32.totalorder %s445, %s446
      %p458 = scmp.eq.s32.totalorder %s53, 1
      %p459 = por %p457, %p458
      %p461 = scmp.ne.s32.totalorder %s446, %s460
      %p462 = scmp.eq.s32.totalorder %s53, 0
      %p463 = por %p461, %p462
      %s465 = sadd.s32 %s464, 1
      %p468 = scmp.eq.s32.totalorder %s47, 1
      %p469 = scmp.ne.s32.totalorder %s464, %s466
      %p470 = scmp.eq.s32.totalorder %s47, 0
      %p471 = por %p469, %p470
      %p472 = scmp.ne.s32.totalorder %s464, %s466
      %p473 = scmp.eq.s32.totalorder %s52, 1
      %p474 = por %p472, %p473
      %p475 = scmp.ne.s32.totalorder %s466, %s467
      %p476 = scmp.eq.s32.totalorder %s52, 0
      %p477 = por %p475, %p476
      %p478 = scmp.ne.s32.totalorder %s466, %s467
      %p479 = scmp.eq.s32.totalorder %s53, 1
      %p480 = por %p478, %p479
      %p482 = scmp.ne.s32.totalorder %s467, %s481
      %p483 = scmp.eq.s32.totalorder %s53, 0
      %p484 = por %p482, %p483
      %s486 = sadd.s32 %s485, 1
      %p489 = scmp.eq.s32.totalorder %s47, 1
      %p490 = scmp.ne.s32.totalorder %s485, %s487
      %p491 = scmp.eq.s32.totalorder %s47, 0
      %p492 = por %p490, %p491
      %p493 = scmp.ne.s32.totalorder %s485, %s487
      %p494 = scmp.eq.s32.totalorder %s52, 1
      %p495 = por %p493, %p494
      %p496 = scmp.ne.s32.totalorder %s487, %s488
      %p497 = scmp.eq.s32.totalorder %s52, 0
      %p498 = por %p496, %p497
      %p499 = scmp.ne.s32.totalorder %s487, %s488
      %p500 = scmp.eq.s32.totalorder %s53, 1
      %p501 = por %p499, %p500
      %p503 = scmp.ne.s32.totalorder %s488, %s502
      %p504 = scmp.eq.s32.totalorder %s53, 0
      %p505 = por %p503, %p504
      %s507 = sadd.s32 %s506, 1
      %p510 = scmp.eq.s32.totalorder %s47, 1
      %p511 = scmp.ne.s32.totalorder %s506, %s508
      %p512 = scmp.eq.s32.totalorder %s47, 0
      %p513 = por %p511, %p512
      %p514 = scmp.ne.s32.totalorder %s506, %s508
      %p515 = scmp.eq.s32.totalorder %s52, 1
      %p516 = por %p514, %p515
      %p517 = scmp.ne.s32.totalorder %s508, %s509
      %p518 = scmp.eq.s32.totalorder %s52, 0
      %p519 = por %p517, %p518
      %p520 = scmp.ne.s32.totalorder %s508, %s509
      %p521 = scmp.eq.s32.totalorder %s53, 1
      %p522 = por %p520, %p521
      %p524 = scmp.ne.s32.totalorder %s509, %s523
      %p525 = scmp.eq.s32.totalorder %s53, 0
      %p526 = por %p524, %p525
      %s527 = ssub.s32 %s47, %s54
      %p528 = scmp.eq.s32.totalorder %s527, 0
      %s530 = sadd.s32 %s529, 1
      %s531 = scalar_select %p528, %s529, %s530
      %p534 = pneg %p528
      %p535 = scmp.eq.s32.totalorder %s47, 1
      %p536 = por %p534, %p535
      %p537 = scmp.ne.s32.totalorder %s529, %s532
      %p538 = scmp.eq.s32.totalorder %s47, 0
      %p539 = por %p537, %p538
      %p540 = scmp.ne.s32.totalorder %s529, %s532
      %p541 = scmp.eq.s32.totalorder %s52, 1
      %p542 = por %p540, %p541
      %p543 = scmp.ne.s32.totalorder %s532, %s533
      %p544 = scmp.eq.s32.totalorder %s52, 0
      %p545 = por %p543, %p544
      %p546 = scmp.ne.s32.totalorder %s532, %s533
      %p547 = scmp.eq.s32.totalorder %s53, 1
      %p548 = por %p546, %p547
      %p550 = scmp.ne.s32.totalorder %s533, %s549
      %p551 = scmp.eq.s32.totalorder %s53, 0
      %p552 = por %p550, %p551
      %s553 = ssub.s32 %s47, %s54
      %p554 = scmp.eq.s32.totalorder %s553, 0
      %s556 = sadd.s32 %s555, 1
      %s557 = scalar_select %p554, %s555, %s556
      %p560 = pneg %p554
      %p561 = scmp.eq.s32.totalorder %s47, 1
      %p562 = por %p560, %p561
      %p563 = scmp.ne.s32.totalorder %s555, %s558
      %p564 = scmp.eq.s32.totalorder %s47, 0
      %p565 = por %p563, %p564
      %p566 = scmp.ne.s32.totalorder %s555, %s558
      %p567 = scmp.eq.s32.totalorder %s52, 1
      %p568 = por %p566, %p567
      %p569 = scmp.ne.s32.totalorder %s558, %s559
      %p570 = scmp.eq.s32.totalorder %s52, 0
      %p571 = por %p569, %p570
      %p572 = scmp.ne.s32.totalorder %s558, %s559
      %p573 = scmp.eq.s32.totalorder %s53, 1
      %p574 = por %p572, %p573
      %p576 = scmp.ne.s32.totalorder %s559, %s575
      %p577 = scmp.eq.s32.totalorder %s53, 0
      %p578 = por %p576, %p577
      %p579 = scmp.le.s32.totalorder 1, %s47
      %p580 = scmp.lt.s32.totalorder %s47, 3
      %p581 = pnand %p579, %p580
      %p582 = pneg %p581
      // Predicated region
      $region9: #{vae_forward.1} parent=5 // pred_check
        _
      $region10: #{vae_forward.1} parent=5 // pred_check_branch
        %584 = sbr.rel (%p581) target = $region12
      $region11: #{vae_forward.1} parent=5 // pred_region
        %s585 = ssub.s32 %s47, 1
        // Predicated region
        $region13: #{vae_forward.1} parent=11 // pred_check
          %p586 = pneg %p120
        $region14: #{vae_forward.1} parent=11 // pred_check_branch
          %588 = sbr.rel (%p586) target = $region16
        $region15: #{vae_forward.1} parent=11 // pred_region
          %590 = vsyncadd [#allocation6], 0
          %s591 = sshll.u32 %s2, 4
          %s592 = int_to_ptr.hbm [resolvable:$true] %s591
          %s593 = sshll.u32 [#allocation7], 4
          %s594 = int_to_ptr.vmem [resolvable:$true] %s593
          %599 = dma.hbm_to_vmem [thread:$0]  %s592, 16384, %s594, [#allocation6], 256, 256, 16
        $region16: #{vae_forward.1} parent=11 // pred_fallthru
          _
        // Predicated region
        $region17: #{vae_forward.1} parent=11 // pred_check
          %p600 = pneg %p141
        $region18: #{vae_forward.1} parent=11 // pred_check_branch
          %602 = sbr.rel (%p600) target = $region20
        $region19: #{vae_forward.1} parent=11 // pred_region
          %604 = vsyncadd [#allocation9], 0
          %s606 = sshll.u32 %s3, 4
          %s607 = int_to_ptr.hbm [resolvable:$true] %s606
          %s608 = sshll.u32 [#allocation8], 4
          %s609 = int_to_ptr.vmem [resolvable:$true] %s608
          %611 = dma.hbm_to_vmem [thread:$0]  %s607, 64, %s609, [#allocation9]
        $region20: #{vae_forward.1} parent=11 // pred_fallthru
          _
        // Predicated region
        $region21: #{vae_forward.1} parent=11 // pred_check
          %p612 = pneg %p162
        $region22: #{vae_forward.1} parent=11 // pred_check_branch
          %614 = sbr.rel (%p612) target = $region24
        $region23: #{vae_forward.1} parent=11 // pred_region
          %616 = vsyncadd [#allocation9], 0
          %s617 = sshll.u32 %s4, 4
          %s618 = int_to_ptr.hbm [resolvable:$true] %s617
          %s619 = sshll.u32 [#allocation10], 4
          %s620 = int_to_ptr.vmem [resolvable:$true] %s619
          %625 = dma.hbm_to_vmem [thread:$0]  %s618, 16384, %s620, [#allocation9], 256, 256, 16
        $region24: #{vae_forward.1} parent=11 // pred_fallthru
          _
        // Predicated region
        $region25: #{vae_forward.1} parent=11 // pred_check
          %p626 = pneg %p183
        $region26: #{vae_forward.1} parent=11 // pred_check_branch
          %628 = sbr.rel (%p626) target = $region28
        $region27: #{vae_forward.1} parent=11 // pred_region
          _
        $region28: #{vae_forward.1} parent=11 // pred_fallthru
          _
        // Predicated region
        $region29: #{vae_forward.1} parent=11 // pred_check
          %p629 = pneg %p204
        $region30: #{vae_forward.1} parent=11 // pred_check_branch
          %631 = sbr.rel (%p629) target = $region32
        $region31: #{vae_forward.1} parent=11 // pred_region
          %633 = vsyncadd [#allocation12], 0
          %s634 = sshll.u32 %s6, 4
          %s635 = int_to_ptr.hbm [resolvable:$true] %s634
          %s636 = sshll.u32 [#allocation11], 4
          %s637 = int_to_ptr.vmem [resolvable:$true] %s636
          %642 = dma.hbm_to_vmem [thread:$0]  %s635, 8192, %s637, [#allocation12], 128, 128, 8
        $region32: #{vae_forward.1} parent=11 // pred_fallthru
          _
        // Predicated region
        $region33: #{vae_forward.1} parent=11 // pred_check
          %p643 = pneg %p225
        $region34: #{vae_forward.1} parent=11 // pred_check_branch
          %645 = sbr.rel (%p643) target = $region36
        $region35: #{vae_forward.1} parent=11 // pred_region
          %647 = vsyncadd [#allocation12], 0
          %s649 = sshll.u32 %s7, 4
          %s650 = int_to_ptr.hbm [resolvable:$true] %s649
          %s651 = sshll.u32 [#allocation13], 4
          %s652 = int_to_ptr.vmem [resolvable:$true] %s651
          %654 = dma.hbm_to_vmem [thread:$0]  %s650, 32, %s652, [#allocation12]
        $region36: #{vae_forward.1} parent=11 // pred_fallthru
          _
        // Predicated region
        $region37: #{vae_forward.1} parent=11 // pred_check
          %p655 = pneg %p246
        $region38: #{vae_forward.1} parent=11 // pred_check_branch
          %657 = sbr.rel (%p655) target = $region40
        $region39: #{vae_forward.1} parent=11 // pred_region
          %659 = vsyncadd [#allocation15], 0
          %s660 = sshll.u32 %s8, 4
          %s661 = int_to_ptr.hbm [resolvable:$true] %s660
          %s662 = sshll.u32 [#allocation14], 4
          %s663 = int_to_ptr.vmem [resolvable:$true] %s662
          %668 = dma.hbm_to_vmem [thread:$0]  %s661, 2048, %s663, [#allocation15], 64, 64, 4
        $region40: #{vae_forward.1} parent=11 // pred_fallthru
          _
        // Predicated region
        $region41: #{vae_forward.1} parent=11 // pred_check
          %p669 = pneg %p267
        $region42: #{vae_forward.1} parent=11 // pred_check_branch
          %671 = sbr.rel (%p669) target = $region44
        $region43: #{vae_forward.1} parent=11 // pred_region
          %673 = vsyncadd [#allocation15], 0
          %s675 = sshll.u32 %s9, 4
          %s676 = int_to_ptr.hbm [resolvable:$true] %s675
          %s677 = sshll.u32 [#allocation16], 4
          %s678 = int_to_ptr.vmem [resolvable:$true] %s677
          %680 = dma.hbm_to_vmem [thread:$0]  %s676, 16, %s678, [#allocation15]
        $region44: #{vae_forward.1} parent=11 // pred_fallthru
          _
        // Predicated region
        $region45: #{vae_forward.1} parent=11 // pred_check
          %p681 = pneg %p288
        $region46: #{vae_forward.1} parent=11 // pred_check_branch
          %683 = sbr.rel (%p681) target = $region48
        $region47: #{vae_forward.1} parent=11 // pred_region
          %685 = vsyncadd [#allocation18], 0
          %s686 = sshll.u32 %s10, 4
          %s687 = int_to_ptr.hbm [resolvable:$true] %s686
          %s688 = sshll.u32 [#allocation17], 4
          %s689 = int_to_ptr.vmem [resolvable:$true] %s688
          %694 = dma.hbm_to_vmem [thread:$0]  %s687, 1024, %s689, [#allocation18], 64, 64, 4
        $region48: #{vae_forward.1} parent=11 // pred_fallthru
          _
        // Predicated region
        $region49: #{vae_forward.1} parent=11 // pred_check
          %p695 = pneg %p309
        $region50: #{vae_forward.1} parent=11 // pred_check_branch
          %697 = sbr.rel (%p695) target = $region52
        $region51: #{vae_forward.1} parent=11 // pred_region
          %699 = vsyncadd [#allocation18], 0
          %s701 = sshll.u32 %s11, 4
          %s702 = int_to_ptr.hbm [resolvable:$true] %s701
          %s703 = sshll.u32 [#allocation19], 4
          %s704 = int_to_ptr.vmem [resolvable:$true] %s703
          %706 = dma.hbm_to_vmem [thread:$0]  %s702, 16, %s704, [#allocation18]
        $region52: #{vae_forward.1} parent=11 // pred_fallthru
          _
        // Predicated region
        $region53: #{vae_forward.1} parent=11 // pred_check
          %p707 = pneg %p330
        $region54: #{vae_forward.1} parent=11 // pred_check_branch
          %709 = sbr.rel (%p707) target = $region56
        $region55: #{vae_forward.1} parent=11 // pred_region
          %711 = vsyncadd [#allocation21], 0
          %s712 = sshll.u32 %s12, 4
          %s713 = int_to_ptr.hbm [resolvable:$true] %s712
          %s714 = sshll.u32 [#allocation20], 4
          %s715 = int_to_ptr.vmem [resolvable:$true] %s714
          %720 = dma.hbm_to_vmem [thread:$0]  %s713, 512, %s715, [#allocation21], 64, 64, 4
        $region56: #{vae_forward.1} parent=11 // pred_fallthru
          _
        // Predicated region
        $region57: #{vae_forward.1} parent=11 // pred_check
          %p721 = pneg %p351
        $region58: #{vae_forward.1} parent=11 // pred_check_branch
          %723 = sbr.rel (%p721) target = $region60
        $region59: #{vae_forward.1} parent=11 // pred_region
          %725 = vsyncadd [#allocation21], 0
          %s727 = sshll.u32 %s13, 4
          %s728 = int_to_ptr.hbm [resolvable:$true] %s727
          %s729 = sshll.u32 [#allocation22], 4
          %s730 = int_to_ptr.vmem [resolvable:$true] %s729
          %732 = dma.hbm_to_vmem [thread:$0]  %s728, 16, %s730, [#allocation21]
        $region60: #{vae_forward.1} parent=11 // pred_fallthru
          _
        // Predicated region
        $region61: #{vae_forward.1} parent=11 // pred_check
          %p733 = pneg %p372
        $region62: #{vae_forward.1} parent=11 // pred_check_branch
          %735 = sbr.rel (%p733) target = $region64
        $region63: #{vae_forward.1} parent=11 // pred_region
          %737 = vsyncadd [#allocation24], 0
          %s738 = sshll.u32 %s14, 4
          %s739 = int_to_ptr.hbm [resolvable:$true] %s738
          %s740 = sshll.u32 [#allocation23], 4
          %s741 = int_to_ptr.vmem [resolvable:$true] %s740
          %746 = dma.hbm_to_vmem [thread:$0]  %s739, 2048, %s741, [#allocation24], 128, 128, 8
        $region64: #{vae_forward.1} parent=11 // pred_fallthru
          _
        // Predicated region
        $region65: #{vae_forward.1} parent=11 // pred_check
          %p747 = pneg %p393
        $region66: #{vae_forward.1} parent=11 // pred_check_branch
          %749 = sbr.rel (%p747) target = $region68
        $region67: #{vae_forward.1} parent=11 // pred_region
          %751 = vsyncadd [#allocation24], 0
          %s753 = sshll.u32 %s15, 4
          %s754 = int_to_ptr.hbm [resolvable:$true] %s753
          %s755 = sshll.u32 [#allocation25], 4
          %s756 = int_to_ptr.vmem [resolvable:$true] %s755
          %758 = dma.hbm_to_vmem [thread:$0]  %s754, 32, %s756, [#allocation24]
        $region68: #{vae_forward.1} parent=11 // pred_fallthru
          _
        // Predicated region
        $region69: #{vae_forward.1} parent=11 // pred_check
          %p759 = pneg %p414
        $region70: #{vae_forward.1} parent=11 // pred_check_branch
          %761 = sbr.rel (%p759) target = $region72
        $region71: #{vae_forward.1} parent=11 // pred_region
          %763 = vsyncadd [#allocation27], 0
          %s764 = sshll.u32 %s16, 4
          %s765 = int_to_ptr.hbm [resolvable:$true] %s764
          %s766 = sshll.u32 [#allocation26], 4
          %s767 = int_to_ptr.vmem [resolvable:$true] %s766
          %772 = dma.hbm_to_vmem [thread:$0]  %s765, 8192, %s767, [#allocation27], 256, 256, 16
        $region72: #{vae_forward.1} parent=11 // pred_fallthru
          _
        // Predicated region
        $region73: #{vae_forward.1} parent=11 // pred_check
          %p773 = pneg %p435
        $region74: #{vae_forward.1} parent=11 // pred_check_branch
          %775 = sbr.rel (%p773) target = $region76
        $region75: #{vae_forward.1} parent=11 // pred_region
          _
        $region76: #{vae_forward.1} parent=11 // pred_fallthru
          _
        // Predicated region
        $region77: #{vae_forward.1} parent=11 // pred_check
          %p776 = pneg %p456
        $region78: #{vae_forward.1} parent=11 // pred_check_branch
          %778 = sbr.rel (%p776) target = $region80
        $region79: #{vae_forward.1} parent=11 // pred_region
          %780 = vsyncadd [#allocation27], 0
          %s781 = sshll.u32 %s18, 4
          %s782 = int_to_ptr.hbm [resolvable:$true] %s781
          %s783 = sshll.u32 [#allocation28], 4
          %s784 = int_to_ptr.vmem [resolvable:$true] %s783
          %789 = dma.hbm_to_vmem [thread:$0]  %s782, 16384, %s784, [#allocation27], 256, 256, 16
        $region80: #{vae_forward.1} parent=11 // pred_fallthru
          _
        // Predicated region
        $region81: #{vae_forward.1} parent=11 // pred_check
          %p790 = pneg %p477
        $region82: #{vae_forward.1} parent=11 // pred_check_branch
          %792 = sbr.rel (%p790) target = $region84
        $region83: #{vae_forward.1} parent=11 // pred_region
          _
        $region84: #{vae_forward.1} parent=11 // pred_fallthru
          _
        // Predicated region
        $region85: #{vae_forward.1} parent=11 // pred_check
          %p793 = pneg %p498
        $region86: #{vae_forward.1} parent=11 // pred_check_branch
          %795 = sbr.rel (%p793) target = $region88
        $region87: #{vae_forward.1} parent=11 // pred_region
          %797 = vsyncadd [#allocation30], 0
          %s798 = sshll.u32 %s20, 4
          %s799 = int_to_ptr.hbm [resolvable:$true] %s798
          %s800 = sshll.u32 [#allocation29], 4
          %s801 = int_to_ptr.vmem [resolvable:$true] %s800
          %806 = dma.hbm_to_vmem [thread:$0]  %s799, 16384, %s801, [#allocation30], 256, 256, 16
        $region88: #{vae_forward.1} parent=11 // pred_fallthru
          _
        // Predicated region
        $region89: #{vae_forward.1} parent=11 // pred_check
          %p807 = pneg %p519
        $region90: #{vae_forward.1} parent=11 // pred_check_branch
          %809 = sbr.rel (%p807) target = $region92
        $region91: #{vae_forward.1} parent=11 // pred_region
          _
        $region92: #{vae_forward.1} parent=11 // pred_fallthru
          _
      $region12: #{vae_forward.1} parent=5 // pred_fallthru
        _
      %p810 = scmp.lt.s32.totalorder %s47, 2
      // Predicated region
      $region93: #{vae_forward.1} parent=5 // pred_check
        %p811 = pneg %p810
      $region94: #{vae_forward.1} parent=5 // pred_check_branch
        %813 = sbr.rel (%p811) target = $region96
      $region95: #{vae_forward.1} parent=5 // pred_region
        // Predicated region
        $region97: #{vae_forward.1} parent=95 // pred_check
          %p814 = pneg %p67
        $region98: #{vae_forward.1} parent=95 // pred_check_branch
          %816 = sbr.rel (%p814) target = $region100
        $region99: #{vae_forward.1} parent=95 // pred_region
          %s817 = sand.u32 %s57, 1
          %s818 = scalar_lea.sflag [#allocation3], %s817
          %s819 = sand.u32 %s57, 1
          %s820 = smul.addr %s819, 32
          %s821 = scalar_lea.vmem [#allocation2], %s820
          %823 = vsyncadd %s818, 0
          %s824 = smul.addr %s47, 4
          %s825 = smul.addr %s824, 8
          %s826 = scalar_lea.hbm %s0, %s825
          %s828 = sshll.u32 %s826, 4
          %s829 = int_to_ptr.hbm [resolvable:$true] %s828
          %s830 = sshll.u32 %s821, 4
          %s831 = int_to_ptr.vmem [resolvable:$true] %s830
          %833 = dma.hbm_to_vmem [thread:$0]  %s829, 512, %s831, %s818
        $region100: #{vae_forward.1} parent=95 // pred_fallthru
          _
        // Predicated region
        $region101: #{vae_forward.1} parent=95 // pred_check
          %p834 = pneg %p93
        $region102: #{vae_forward.1} parent=95 // pred_check_branch
          %836 = sbr.rel (%p834) target = $region104
        $region103: #{vae_forward.1} parent=95 // pred_region
          %s837 = sand.u32 %s47, 1
          %s838 = scalar_lea.sflag [#allocation6], %s837
          %s839 = sand.u32 %s83, 1
          %s840 = smul.addr %s839, 8
          %s841 = scalar_lea.vmem [#allocation5], %s840
          %843 = vsyncadd %s838, 0
          %s844 = smul.addr %s47, 8
          %s845 = scalar_lea.hbm %s1, %s844
          %s847 = sshll.u32 %s845, 4
          %s848 = int_to_ptr.hbm [resolvable:$true] %s847
          %s849 = sshll.u32 %s841, 4
          %s850 = int_to_ptr.vmem [resolvable:$true] %s849
          %852 = dma.hbm_to_vmem [thread:$0]  %s848, 128, %s850, %s838
        $region104: #{vae_forward.1} parent=95 // pred_fallthru
          _
      $region96: #{vae_forward.1} parent=5 // pred_fallthru
        _
      %p853 = scmp.le.s32.totalorder 1, %s47
      %p854 = scmp.lt.s32.totalorder %s47, 3
      %p855 = pnand %p853, %p854
      %p856 = pneg %p855
      // Predicated region
      $region105: #{vae_forward.1} parent=5 // pred_check
        _
      $region106: #{vae_forward.1} parent=5 // pred_check_branch
        %858 = sbr.rel (%p855) target = $region108
      $region107: #{vae_forward.1} parent=5 // pred_region
        %s859 = ssub.s32 %s47, 1
        %s860 = sand.u32 %s60, 1
        %s861 = scalar_lea.sflag [#allocation3], %s860
        %s862 = sand.u32 %s60, 1
        %s863 = smul.addr %s862, 32
        %s864 = scalar_lea.vmem [#allocation2], %s863
        // Predicated region
        $region109: #{vae_forward.1} parent=107 // pred_check
          %p865 = pneg %p73
        $region110: #{vae_forward.1} parent=107 // pred_check_branch
          %867 = sbr.rel (%p865) target = $region112
        $region111: #{vae_forward.1} parent=107 // pred_region
          %869 = dma.done %s861, 512
        $region112: #{vae_forward.1} parent=107 // pred_fallthru
          _
        %s870 = sand.u32 %s52, 1
        %s871 = scalar_lea.sflag [#allocation6], %s870
        %s872 = sand.u32 %s86, 1
        %s873 = smul.addr %s872, 8
        %s874 = scalar_lea.vmem [#allocation5], %s873
        // Predicated region
        $region113: #{vae_forward.1} parent=107 // pred_check
          %p875 = pneg %p99
        $region114: #{vae_forward.1} parent=107 // pred_check_branch
          %877 = sbr.rel (%p875) target = $region116
        $region115: #{vae_forward.1} parent=107 // pred_region
          %879 = dma.done %s871, 128
        $region116: #{vae_forward.1} parent=107 // pred_fallthru
          _
        // Predicated region
        $region117: #{vae_forward.1} parent=107 // pred_check
          %p880 = pneg %p120
        $region118: #{vae_forward.1} parent=107 // pred_check_branch
          %882 = sbr.rel (%p880) target = $region120
        $region119: #{vae_forward.1} parent=107 // pred_region
          %884 = dma.done [#allocation6], 16384
        $region120: #{vae_forward.1} parent=107 // pred_fallthru
          _
        // Predicated region
        $region121: #{vae_forward.1} parent=107 // pred_check
          %p885 = pneg %p141
        $region122: #{vae_forward.1} parent=107 // pred_check_branch
          %887 = sbr.rel (%p885) target = $region124
        $region123: #{vae_forward.1} parent=107 // pred_region
          %889 = dma.done [#allocation9], 64
        $region124: #{vae_forward.1} parent=107 // pred_fallthru
          _
        // Predicated region
        $region125: #{vae_forward.1} parent=107 // pred_check
          %p890 = pneg %p162
        $region126: #{vae_forward.1} parent=107 // pred_check_branch
          %892 = sbr.rel (%p890) target = $region128
        $region127: #{vae_forward.1} parent=107 // pred_region
          %894 = dma.done [#allocation9], 16384
        $region128: #{vae_forward.1} parent=107 // pred_fallthru
          _
        // Predicated region
        $region129: #{vae_forward.1} parent=107 // pred_check
          %p895 = pneg %p204
        $region130: #{vae_forward.1} parent=107 // pred_check_branch
          %897 = sbr.rel (%p895) target = $region132
        $region131: #{vae_forward.1} parent=107 // pred_region
          %899 = dma.done [#allocation12], 8192
        $region132: #{vae_forward.1} parent=107 // pred_fallthru
          _
        // Predicated region
        $region133: #{vae_forward.1} parent=107 // pred_check
          %p900 = pneg %p225
        $region134: #{vae_forward.1} parent=107 // pred_check_branch
          %902 = sbr.rel (%p900) target = $region136
        $region135: #{vae_forward.1} parent=107 // pred_region
          %904 = dma.done [#allocation12], 32
        $region136: #{vae_forward.1} parent=107 // pred_fallthru
          _
        // Predicated region
        $region137: #{vae_forward.1} parent=107 // pred_check
          %p905 = pneg %p246
        $region138: #{vae_forward.1} parent=107 // pred_check_branch
          %907 = sbr.rel (%p905) target = $region140
        $region139: #{vae_forward.1} parent=107 // pred_region
          %909 = dma.done [#allocation15], 2048
        $region140: #{vae_forward.1} parent=107 // pred_fallthru
          _
        // Predicated region
        $region141: #{vae_forward.1} parent=107 // pred_check
          %p910 = pneg %p267
        $region142: #{vae_forward.1} parent=107 // pred_check_branch
          %912 = sbr.rel (%p910) target = $region144
        $region143: #{vae_forward.1} parent=107 // pred_region
          %914 = dma.done [#allocation15], 16
        $region144: #{vae_forward.1} parent=107 // pred_fallthru
          _
        // Predicated region
        $region145: #{vae_forward.1} parent=107 // pred_check
          %p915 = pneg %p288
        $region146: #{vae_forward.1} parent=107 // pred_check_branch
          %917 = sbr.rel (%p915) target = $region148
        $region147: #{vae_forward.1} parent=107 // pred_region
          %919 = dma.done [#allocation18], 1024
        $region148: #{vae_forward.1} parent=107 // pred_fallthru
          _
        // Predicated region
        $region149: #{vae_forward.1} parent=107 // pred_check
          %p920 = pneg %p309
        $region150: #{vae_forward.1} parent=107 // pred_check_branch
          %922 = sbr.rel (%p920) target = $region152
        $region151: #{vae_forward.1} parent=107 // pred_region
          %924 = dma.done [#allocation18], 16
        $region152: #{vae_forward.1} parent=107 // pred_fallthru
          _
        // Predicated region
        $region153: #{vae_forward.1} parent=107 // pred_check
          %p925 = pneg %p330
        $region154: #{vae_forward.1} parent=107 // pred_check_branch
          %927 = sbr.rel (%p925) target = $region156
        $region155: #{vae_forward.1} parent=107 // pred_region
          %929 = dma.done [#allocation21], 512
        $region156: #{vae_forward.1} parent=107 // pred_fallthru
          _
        // Predicated region
        $region157: #{vae_forward.1} parent=107 // pred_check
          %p930 = pneg %p351
        $region158: #{vae_forward.1} parent=107 // pred_check_branch
          %932 = sbr.rel (%p930) target = $region160
        $region159: #{vae_forward.1} parent=107 // pred_region
          %934 = dma.done [#allocation21], 16
        $region160: #{vae_forward.1} parent=107 // pred_fallthru
          _
        // Predicated region
        $region161: #{vae_forward.1} parent=107 // pred_check
          %p935 = pneg %p372
        $region162: #{vae_forward.1} parent=107 // pred_check_branch
          %937 = sbr.rel (%p935) target = $region164
        $region163: #{vae_forward.1} parent=107 // pred_region
          %939 = dma.done [#allocation24], 2048
        $region164: #{vae_forward.1} parent=107 // pred_fallthru
          _
        // Predicated region
        $region165: #{vae_forward.1} parent=107 // pred_check
          %p940 = pneg %p393
        $region166: #{vae_forward.1} parent=107 // pred_check_branch
          %942 = sbr.rel (%p940) target = $region168
        $region167: #{vae_forward.1} parent=107 // pred_region
          %944 = dma.done [#allocation24], 32
        $region168: #{vae_forward.1} parent=107 // pred_fallthru
          _
        // Predicated region
        $region169: #{vae_forward.1} parent=107 // pred_check
          %p945 = pneg %p414
        $region170: #{vae_forward.1} parent=107 // pred_check_branch
          %947 = sbr.rel (%p945) target = $region172
        $region171: #{vae_forward.1} parent=107 // pred_region
          %949 = dma.done [#allocation27], 8192
        $region172: #{vae_forward.1} parent=107 // pred_fallthru
          _
        // Predicated region
        $region173: #{vae_forward.1} parent=107 // pred_check
          %p950 = pneg %p456
        $region174: #{vae_forward.1} parent=107 // pred_check_branch
          %952 = sbr.rel (%p950) target = $region176
        $region175: #{vae_forward.1} parent=107 // pred_region
          %954 = dma.done [#allocation27], 16384
        $region176: #{vae_forward.1} parent=107 // pred_fallthru
          _
        // Predicated region
        $region177: #{vae_forward.1} parent=107 // pred_check
          %p955 = pneg %p498
        $region178: #{vae_forward.1} parent=107 // pred_check_branch
          %957 = sbr.rel (%p955) target = $region180
        $region179: #{vae_forward.1} parent=107 // pred_region
          %959 = dma.done [#allocation30], 16384
        $region180: #{vae_forward.1} parent=107 // pred_fallthru
          _
        %s960 = sand.u32 %s60, 1
        %s961 = scalar_lea.sflag [#allocation3], %s960
        %s962 = sand.u32 %s60, 1
        %s963 = smul.addr %s962, 32
        %s964 = scalar_lea.vmem [#allocation2], %s963
        %p965 = pneg %p73
        %p966 = pneg %p70
        %s967 = sand.u32 %s52, 1
        %s968 = scalar_lea.sflag [#allocation6], %s967
        %s969 = sand.u32 %s86, 1
        %s970 = smul.addr %s969, 8
        %s971 = scalar_lea.vmem [#allocation5], %s970
        %p972 = pneg %p99
        %p973 = pneg %p96
        %p974 = pneg %p120
        %p975 = pneg %p117
        %p976 = pneg %p141
        %p977 = pneg %p138
        %p978 = pneg %p162
        %p979 = pneg %p159
        %p980 = pneg %p183
        %p981 = pneg %p180
        %p982 = pneg %p204
        %p983 = pneg %p201
        %p984 = pneg %p225
        %p985 = pneg %p222
        %p986 = pneg %p246
        %p987 = pneg %p243
        %p988 = pneg %p267
        %p989 = pneg %p264
        %p990 = pneg %p288
        %p991 = pneg %p285
        %p992 = pneg %p309
        %p993 = pneg %p306
        %p994 = pneg %p330
        %p995 = pneg %p327
        %p996 = pneg %p351
        %p997 = pneg %p348
        %p998 = pneg %p372
        %p999 = pneg %p369
        %p1000 = pneg %p393
        %p1001 = pneg %p390
        %p1002 = pneg %p414
        %p1003 = pneg %p411
        %p1004 = pneg %p435
        %p1005 = pneg %p432
        %p1006 = pneg %p456
        %p1007 = pneg %p453
        %p1008 = pneg %p477
        %p1009 = pneg %p474
        %p1010 = pneg %p498
        %p1011 = pneg %p495
        %p1012 = pneg %p519
        %p1013 = pneg %p516
        %p1014 = pneg %p545
        %p1015 = pneg %p542
        %s1016 = sand.u32 %s532, 1
        %s1017 = scalar_lea.sflag [#allocation4], %s1016
        %s1018 = sand.u32 %s532, 1
        %s1019 = smul.addr %s1018, 32
        %s1020 = scalar_lea.vmem [#allocation31], %s1019
        %p1021 = pneg %p571
        %p1022 = pneg %p568
        %p1023 = scmp.lt.s32.totalorder %s52, 1
        %s1024 = scalar_select %p1023, %s52, 1
        %s1025 = smul.addr %s1024, 8
        %s1026 = scalar_lea.vmem %s23, %s1025
        %p1027 = scmp.lt.s32.totalorder %s52, 1
        %s1028 = scalar_select %p1027, %s52, 1
        %s1029 = smul.addr %s1028, 8
        %s1030 = scalar_lea.vmem %s23, %s1029
        %v1032 = vld [vmem:[#allocation7] sm:$0xff]
        %v1033 = vld [vmem:[#allocation7 + $0x8] sm:$0xff]
        %v1034 = vld [vmem:[#allocation7 + $0x10] sm:$0xff]
        %v1035 = vld [vmem:[#allocation7 + $0x18] sm:$0xff]
        %v1036 = vld [vmem:[#allocation7 + $0x20] sm:$0xff]
        %v1037 = vld [vmem:[#allocation7 + $0x28] sm:$0xff]
        %v1038 = vld [vmem:[#allocation7 + $0x30] sm:$0xff]
        %v1039 = vld [vmem:[#allocation7 + $0x38] sm:$0xff]
        %v1040 = vld [vmem:[#allocation7 + $0x40] sm:$0xff]
        %v1041 = vld [vmem:[#allocation7 + $0x48] sm:$0xff]
        %v1042 = vld [vmem:[#allocation7 + $0x50] sm:$0xff]
        %v1043 = vld [vmem:[#allocation7 + $0x58] sm:$0xff]
        %v1044 = vld [vmem:[#allocation7 + $0x60] sm:$0xff]
        %v1045 = vld [vmem:[#allocation7 + $0x68] sm:$0xff]
        %v1046 = vld [vmem:[#allocation7 + $0x70] sm:$0xff]
        %v1047 = vld [vmem:[#allocation7 + $0x78] sm:$0xff]
        %v1048 = vld [vmem:[#allocation7 + $0x80] sm:$0xff]
        %v1049 = vld [vmem:[#allocation7 + $0x88] sm:$0xff]
        %v1050 = vld [vmem:[#allocation7 + $0x90] sm:$0xff]
        %v1051 = vld [vmem:[#allocation7 + $0x98] sm:$0xff]
        %v1052 = vld [vmem:[#allocation7 + $0xa0] sm:$0xff]
        %v1053 = vld [vmem:[#allocation7 + $0xa8] sm:$0xff]
        %v1054 = vld [vmem:[#allocation7 + $0xb0] sm:$0xff]
        %v1055 = vld [vmem:[#allocation7 + $0xb8] sm:$0xff]
        %v1056 = vld [vmem:[#allocation7 + $0xc0] sm:$0xff]
        %v1057 = vld [vmem:[#allocation7 + $0xc8] sm:$0xff]
        %v1058 = vld [vmem:[#allocation7 + $0xd0] sm:$0xff]
        %v1059 = vld [vmem:[#allocation7 + $0xd8] sm:$0xff]
        %v1060 = vld [vmem:[#allocation7 + $0xe0] sm:$0xff]
        %v1061 = vld [vmem:[#allocation7 + $0xe8] sm:$0xff]
        %v1062 = vld [vmem:[#allocation7 + $0xf0] sm:$0xff]
        %v1063 = vld [vmem:[#allocation7 + $0xf8] sm:$0xff]
        %v1064 = vld [vmem:[#allocation7 + $0x100] sm:$0xff]
        %v1065 = vld [vmem:[#allocation7 + $0x108] sm:$0xff]
        %v1066 = vld [vmem:[#allocation7 + $0x110] sm:$0xff]
        %v1067 = vld [vmem:[#allocation7 + $0x118] sm:$0xff]
        %v1068 = vld [vmem:[#allocation7 + $0x120] sm:$0xff]
        %v1069 = vld [vmem:[#allocation7 + $0x128] sm:$0xff]
        %v1070 = vld [vmem:[#allocation7 + $0x130] sm:$0xff]
        %v1071 = vld [vmem:[#allocation7 + $0x138] sm:$0xff]
        %v1072 = vld [vmem:[#allocation7 + $0x140] sm:$0xff]
        %v1073 = vld [vmem:[#allocation7 + $0x148] sm:$0xff]
        %v1074 = vld [vmem:[#allocation7 + $0x150] sm:$0xff]
        %v1075 = vld [vmem:[#allocation7 + $0x158] sm:$0xff]
        %v1076 = vld [vmem:[#allocation7 + $0x160] sm:$0xff]
        %v1077 = vld [vmem:[#allocation7 + $0x168] sm:$0xff]
        %v1078 = vld [vmem:[#allocation7 + $0x170] sm:$0xff]
        %v1079 = vld [vmem:[#allocation7 + $0x178] sm:$0xff]
        %v1080 = vld [vmem:[#allocation7 + $0x180] sm:$0xff]
        %v1081 = vld [vmem:[#allocation7 + $0x188] sm:$0xff]
        %v1082 = vld [vmem:[#allocation7 + $0x190] sm:$0xff]
        %v1083 = vld [vmem:[#allocation7 + $0x198] sm:$0xff]
        %v1084 = vld [vmem:[#allocation7 + $0x1a0] sm:$0xff]
        %v1085 = vld [vmem:[#allocation7 + $0x1a8] sm:$0xff]
        %v1086 = vld [vmem:[#allocation7 + $0x1b0] sm:$0xff]
        %v1087 = vld [vmem:[#allocation7 + $0x1b8] sm:$0xff]
        %v1088 = vld [vmem:[#allocation7 + $0x1c0] sm:$0xff]
        %v1089 = vld [vmem:[#allocation7 + $0x1c8] sm:$0xff]
        %v1090 = vld [vmem:[#allocation7 + $0x1d0] sm:$0xff]
        %v1091 = vld [vmem:[#allocation7 + $0x1d8] sm:$0xff]
        %v1092 = vld [vmem:[#allocation7 + $0x1e0] sm:$0xff]
        %v1093 = vld [vmem:[#allocation7 + $0x1e8] sm:$0xff]
        %v1094 = vld [vmem:[#allocation7 + $0x1f0] sm:$0xff]
        %v1095 = vld [vmem:[#allocation7 + $0x1f8] sm:$0xff]
        %v1096 = vld [vmem:[#allocation7 + $0x200] sm:$0xff]
        %v1097 = vld [vmem:[#allocation7 + $0x208] sm:$0xff]
        %v1098 = vld [vmem:[#allocation7 + $0x210] sm:$0xff]
        %v1099 = vld [vmem:[#allocation7 + $0x218] sm:$0xff]
        %v1100 = vld [vmem:[#allocation7 + $0x220] sm:$0xff]
        %v1101 = vld [vmem:[#allocation7 + $0x228] sm:$0xff]
        %v1102 = vld [vmem:[#allocation7 + $0x230] sm:$0xff]
        %v1103 = vld [vmem:[#allocation7 + $0x238] sm:$0xff]
        %v1104 = vld [vmem:[#allocation7 + $0x240] sm:$0xff]
        %v1105 = vld [vmem:[#allocation7 + $0x248] sm:$0xff]
        %v1106 = vld [vmem:[#allocation7 + $0x250] sm:$0xff]
        %v1107 = vld [vmem:[#allocation7 + $0x258] sm:$0xff]
        %v1108 = vld [vmem:[#allocation7 + $0x260] sm:$0xff]
        %v1109 = vld [vmem:[#allocation7 + $0x268] sm:$0xff]
        %v1110 = vld [vmem:[#allocation7 + $0x270] sm:$0xff]
        %v1111 = vld [vmem:[#allocation7 + $0x278] sm:$0xff]
        %v1112 = vld [vmem:[#allocation7 + $0x280] sm:$0xff]
        %v1113 = vld [vmem:[#allocation7 + $0x288] sm:$0xff]
        %v1114 = vld [vmem:[#allocation7 + $0x290] sm:$0xff]
        %v1115 = vld [vmem:[#allocation7 + $0x298] sm:$0xff]
        %v1116 = vld [vmem:[#allocation7 + $0x2a0] sm:$0xff]
        %v1117 = vld [vmem:[#allocation7 + $0x2a8] sm:$0xff]
        %v1118 = vld [vmem:[#allocation7 + $0x2b0] sm:$0xff]
        %v1119 = vld [vmem:[#allocation7 + $0x2b8] sm:$0xff]
        %v1120 = vld [vmem:[#allocation7 + $0x2c0] sm:$0xff]
        %v1121 = vld [vmem:[#allocation7 + $0x2c8] sm:$0xff]
        %v1122 = vld [vmem:[#allocation7 + $0x2d0] sm:$0xff]
        %v1123 = vld [vmem:[#allocation7 + $0x2d8] sm:$0xff]
        %v1124 = vld [vmem:[#allocation7 + $0x2e0] sm:$0xff]
        %v1125 = vld [vmem:[#allocation7 + $0x2e8] sm:$0xff]
        %v1126 = vld [vmem:[#allocation7 + $0x2f0] sm:$0xff]
        %v1127 = vld [vmem:[#allocation7 + $0x2f8] sm:$0xff]
        %v1128 = vld [vmem:[#allocation7 + $0x300] sm:$0xff]
        %v1129 = vld [vmem:[#allocation7 + $0x308] sm:$0xff]
        %v1130 = vld [vmem:[#allocation7 + $0x310] sm:$0xff]
        %v1131 = vld [vmem:[#allocation7 + $0x318] sm:$0xff]
        %v1132 = vld [vmem:[#allocation7 + $0x320] sm:$0xff]
        %v1133 = vld [vmem:[#allocation7 + $0x328] sm:$0xff]
        %v1134 = vld [vmem:[#allocation7 + $0x330] sm:$0xff]
        %v1135 = vld [vmem:[#allocation7 + $0x338] sm:$0xff]
        %v1136 = vld [vmem:[#allocation7 + $0x340] sm:$0xff]
        %v1137 = vld [vmem:[#allocation7 + $0x348] sm:$0xff]
        %v1138 = vld [vmem:[#allocation7 + $0x350] sm:$0xff]
        %v1139 = vld [vmem:[#allocation7 + $0x358] sm:$0xff]
        %v1140 = vld [vmem:[#allocation7 + $0x360] sm:$0xff]
        %v1141 = vld [vmem:[#allocation7 + $0x368] sm:$0xff]
        %v1142 = vld [vmem:[#allocation7 + $0x370] sm:$0xff]
        %v1143 = vld [vmem:[#allocation7 + $0x378] sm:$0xff]
        %v1144 = vld [vmem:[#allocation7 + $0x380] sm:$0xff]
        %v1145 = vld [vmem:[#allocation7 + $0x388] sm:$0xff]
        %v1146 = vld [vmem:[#allocation7 + $0x390] sm:$0xff]
        %v1147 = vld [vmem:[#allocation7 + $0x398] sm:$0xff]
        %v1148 = vld [vmem:[#allocation7 + $0x3a0] sm:$0xff]
        %v1149 = vld [vmem:[#allocation7 + $0x3a8] sm:$0xff]
        %v1150 = vld [vmem:[#allocation7 + $0x3b0] sm:$0xff]
        %v1151 = vld [vmem:[#allocation7 + $0x3b8] sm:$0xff]
        %v1152 = vld [vmem:[#allocation7 + $0x3c0] sm:$0xff]
        %v1153 = vld [vmem:[#allocation7 + $0x3c8] sm:$0xff]
        %v1154 = vld [vmem:[#allocation7 + $0x3d0] sm:$0xff]
        %v1155 = vld [vmem:[#allocation7 + $0x3d8] sm:$0xff]
        %v1156 = vld [vmem:[#allocation7 + $0x3e0] sm:$0xff]
        %v1157 = vld [vmem:[#allocation7 + $0x3e8] sm:$0xff]
        %v1158 = vld [vmem:[#allocation7 + $0x3f0] sm:$0xff]
        %v1159 = vld [vmem:[#allocation7 + $0x3f8] sm:$0xff]
        %v1160 = vld [vmem:[#allocation8] sm:$0xf]
        %v1161 = vld [vmem:[#allocation10] sm:$0xff]
        %v1162 = vld [vmem:[#allocation10 + $0x8] sm:$0xff]
        %v1163 = vld [vmem:[#allocation10 + $0x10] sm:$0xff]
        %v1164 = vld [vmem:[#allocation10 + $0x18] sm:$0xff]
        %v1165 = vld [vmem:[#allocation10 + $0x20] sm:$0xff]
        %v1166 = vld [vmem:[#allocation10 + $0x28] sm:$0xff]
        %v1167 = vld [vmem:[#allocation10 + $0x30] sm:$0xff]
        %v1168 = vld [vmem:[#allocation10 + $0x38] sm:$0xff]
        %v1169 = vld [vmem:[#allocation10 + $0x40] sm:$0xff]
        %v1170 = vld [vmem:[#allocation10 + $0x48] sm:$0xff]
        %v1171 = vld [vmem:[#allocation10 + $0x50] sm:$0xff]
        %v1172 = vld [vmem:[#allocation10 + $0x58] sm:$0xff]
        %v1173 = vld [vmem:[#allocation10 + $0x60] sm:$0xff]
        %v1174 = vld [vmem:[#allocation10 + $0x68] sm:$0xff]
        %v1175 = vld [vmem:[#allocation10 + $0x70] sm:$0xff]
        %v1176 = vld [vmem:[#allocation10 + $0x78] sm:$0xff]
        %v1177 = vld [vmem:[#allocation10 + $0x80] sm:$0xff]
        %v1178 = vld [vmem:[#allocation10 + $0x88] sm:$0xff]
        %v1179 = vld [vmem:[#allocation10 + $0x90] sm:$0xff]
        %v1180 = vld [vmem:[#allocation10 + $0x98] sm:$0xff]
        %v1181 = vld [vmem:[#allocation10 + $0xa0] sm:$0xff]
        %v1182 = vld [vmem:[#allocation10 + $0xa8] sm:$0xff]
        %v1183 = vld [vmem:[#allocation10 + $0xb0] sm:$0xff]
        %v1184 = vld [vmem:[#allocation10 + $0xb8] sm:$0xff]
        %v1185 = vld [vmem:[#allocation10 + $0xc0] sm:$0xff]
        %v1186 = vld [vmem:[#allocation10 + $0xc8] sm:$0xff]
        %v1187 = vld [vmem:[#allocation10 + $0xd0] sm:$0xff]
        %v1188 = vld [vmem:[#allocation10 + $0xd8] sm:$0xff]
        %v1189 = vld [vmem:[#allocation10 + $0xe0] sm:$0xff]
        %v1190 = vld [vmem:[#allocation10 + $0xe8] sm:$0xff]
        %v1191 = vld [vmem:[#allocation10 + $0xf0] sm:$0xff]
        %v1192 = vld [vmem:[#allocation10 + $0xf8] sm:$0xff]
        %v1193 = vld [vmem:[#allocation10 + $0x100] sm:$0xff]
        %v1194 = vld [vmem:[#allocation10 + $0x108] sm:$0xff]
        %v1195 = vld [vmem:[#allocation10 + $0x110] sm:$0xff]
        %v1196 = vld [vmem:[#allocation10 + $0x118] sm:$0xff]
        %v1197 = vld [vmem:[#allocation10 + $0x120] sm:$0xff]
        %v1198 = vld [vmem:[#allocation10 + $0x128] sm:$0xff]
        %v1199 = vld [vmem:[#allocation10 + $0x130] sm:$0xff]
        %v1200 = vld [vmem:[#allocation10 + $0x138] sm:$0xff]
        %v1201 = vld [vmem:[#allocation10 + $0x140] sm:$0xff]
        %v1202 = vld [vmem:[#allocation10 + $0x148] sm:$0xff]
        %v1203 = vld [vmem:[#allocation10 + $0x150] sm:$0xff]
        %v1204 = vld [vmem:[#allocation10 + $0x158] sm:$0xff]
        %v1205 = vld [vmem:[#allocation10 + $0x160] sm:$0xff]
        %v1206 = vld [vmem:[#allocation10 + $0x168] sm:$0xff]
        %v1207 = vld [vmem:[#allocation10 + $0x170] sm:$0xff]
        %v1208 = vld [vmem:[#allocation10 + $0x178] sm:$0xff]
        %v1209 = vld [vmem:[#allocation10 + $0x180] sm:$0xff]
        %v1210 = vld [vmem:[#allocation10 + $0x188] sm:$0xff]
        %v1211 = vld [vmem:[#allocation10 + $0x190] sm:$0xff]
        %v1212 = vld [vmem:[#allocation10 + $0x198] sm:$0xff]
        %v1213 = vld [vmem:[#allocation10 + $0x1a0] sm:$0xff]
        %v1214 = vld [vmem:[#allocation10 + $0x1a8] sm:$0xff]
        %v1215 = vld [vmem:[#allocation10 + $0x1b0] sm:$0xff]
        %v1216 = vld [vmem:[#allocation10 + $0x1b8] sm:$0xff]
        %v1217 = vld [vmem:[#allocation10 + $0x1c0] sm:$0xff]
        %v1218 = vld [vmem:[#allocation10 + $0x1c8] sm:$0xff]
        %v1219 = vld [vmem:[#allocation10 + $0x1d0] sm:$0xff]
        %v1220 = vld [vmem:[#allocation10 + $0x1d8] sm:$0xff]
        %v1221 = vld [vmem:[#allocation10 + $0x1e0] sm:$0xff]
        %v1222 = vld [vmem:[#allocation10 + $0x1e8] sm:$0xff]
        %v1223 = vld [vmem:[#allocation10 + $0x1f0] sm:$0xff]
        %v1224 = vld [vmem:[#allocation10 + $0x1f8] sm:$0xff]
        %v1225 = vld [vmem:[#allocation10 + $0x200] sm:$0xff]
        %v1226 = vld [vmem:[#allocation10 + $0x208] sm:$0xff]
        %v1227 = vld [vmem:[#allocation10 + $0x210] sm:$0xff]
        %v1228 = vld [vmem:[#allocation10 + $0x218] sm:$0xff]
        %v1229 = vld [vmem:[#allocation10 + $0x220] sm:$0xff]
        %v1230 = vld [vmem:[#allocation10 + $0x228] sm:$0xff]
        %v1231 = vld [vmem:[#allocation10 + $0x230] sm:$0xff]
        %v1232 = vld [vmem:[#allocation10 + $0x238] sm:$0xff]
        %v1233 = vld [vmem:[#allocation10 + $0x240] sm:$0xff]
        %v1234 = vld [vmem:[#allocation10 + $0x248] sm:$0xff]
        %v1235 = vld [vmem:[#allocation10 + $0x250] sm:$0xff]
        %v1236 = vld [vmem:[#allocation10 + $0x258] sm:$0xff]
        %v1237 = vld [vmem:[#allocation10 + $0x260] sm:$0xff]
        %v1238 = vld [vmem:[#allocation10 + $0x268] sm:$0xff]
        %v1239 = vld [vmem:[#allocation10 + $0x270] sm:$0xff]
        %v1240 = vld [vmem:[#allocation10 + $0x278] sm:$0xff]
        %v1241 = vld [vmem:[#allocation10 + $0x280] sm:$0xff]
        %v1242 = vld [vmem:[#allocation10 + $0x288] sm:$0xff]
        %v1243 = vld [vmem:[#allocation10 + $0x290] sm:$0xff]
        %v1244 = vld [vmem:[#allocation10 + $0x298] sm:$0xff]
        %v1245 = vld [vmem:[#allocation10 + $0x2a0] sm:$0xff]
        %v1246 = vld [vmem:[#allocation10 + $0x2a8] sm:$0xff]
        %v1247 = vld [vmem:[#allocation10 + $0x2b0] sm:$0xff]
        %v1248 = vld [vmem:[#allocation10 + $0x2b8] sm:$0xff]
        %v1249 = vld [vmem:[#allocation10 + $0x2c0] sm:$0xff]
        %v1250 = vld [vmem:[#allocation10 + $0x2c8] sm:$0xff]
        %v1251 = vld [vmem:[#allocation10 + $0x2d0] sm:$0xff]
        %v1252 = vld [vmem:[#allocation10 + $0x2d8] sm:$0xff]
        %v1253 = vld [vmem:[#allocation10 + $0x2e0] sm:$0xff]
        %v1254 = vld [vmem:[#allocation10 + $0x2e8] sm:$0xff]
        %v1255 = vld [vmem:[#allocation10 + $0x2f0] sm:$0xff]
        %v1256 = vld [vmem:[#allocation10 + $0x2f8] sm:$0xff]
        %v1257 = vld [vmem:[#allocation10 + $0x300] sm:$0xff]
        %v1258 = vld [vmem:[#allocation10 + $0x308] sm:$0xff]
        %v1259 = vld [vmem:[#allocation10 + $0x310] sm:$0xff]
        %v1260 = vld [vmem:[#allocation10 + $0x318] sm:$0xff]
        %v1261 = vld [vmem:[#allocation10 + $0x320] sm:$0xff]
        %v1262 = vld [vmem:[#allocation10 + $0x328] sm:$0xff]
        %v1263 = vld [vmem:[#allocation10 + $0x330] sm:$0xff]
        %v1264 = vld [vmem:[#allocation10 + $0x338] sm:$0xff]
        %v1265 = vld [vmem:[#allocation10 + $0x340] sm:$0xff]
        %v1266 = vld [vmem:[#allocation10 + $0x348] sm:$0xff]
        %v1267 = vld [vmem:[#allocation10 + $0x350] sm:$0xff]
        %v1268 = vld [vmem:[#allocation10 + $0x358] sm:$0xff]
        %v1269 = vld [vmem:[#allocation10 + $0x360] sm:$0xff]
        %v1270 = vld [vmem:[#allocation10 + $0x368] sm:$0xff]
        %v1271 = vld [vmem:[#allocation10 + $0x370] sm:$0xff]
        %v1272 = vld [vmem:[#allocation10 + $0x378] sm:$0xff]
        %v1273 = vld [vmem:[#allocation10 + $0x380] sm:$0xff]
        %v1274 = vld [vmem:[#allocation10 + $0x388] sm:$0xff]
        %v1275 = vld [vmem:[#allocation10 + $0x390] sm:$0xff]
        %v1276 = vld [vmem:[#allocation10 + $0x398] sm:$0xff]
        %v1277 = vld [vmem:[#allocation10 + $0x3a0] sm:$0xff]
        %v1278 = vld [vmem:[#allocation10 + $0x3a8] sm:$0xff]
        %v1279 = vld [vmem:[#allocation10 + $0x3b0] sm:$0xff]
        %v1280 = vld [vmem:[#allocation10 + $0x3b8] sm:$0xff]
        %v1281 = vld [vmem:[#allocation10 + $0x3c0] sm:$0xff]
        %v1282 = vld [vmem:[#allocation10 + $0x3c8] sm:$0xff]
        %v1283 = vld [vmem:[#allocation10 + $0x3d0] sm:$0xff]
        %v1284 = vld [vmem:[#allocation10 + $0x3d8] sm:$0xff]
        %v1285 = vld [vmem:[#allocation10 + $0x3e0] sm:$0xff]
        %v1286 = vld [vmem:[#allocation10 + $0x3e8] sm:$0xff]
        %v1287 = vld [vmem:[#allocation10 + $0x3f0] sm:$0xff]
        %v1288 = vld [vmem:[#allocation10 + $0x3f8] sm:$0xff]
        %v1289 = vld [vmem:[%s5] sm:$0xf]
        %v1290 = vld [vmem:[#allocation11] sm:$0xff]
        %v1291 = vld [vmem:[#allocation11 + $0x8] sm:$0xff]
        %v1292 = vld [vmem:[#allocation11 + $0x10] sm:$0xff]
        %v1293 = vld [vmem:[#allocation11 + $0x18] sm:$0xff]
        %v1294 = vld [vmem:[#allocation11 + $0x20] sm:$0xff]
        %v1295 = vld [vmem:[#allocation11 + $0x28] sm:$0xff]
        %v1296 = vld [vmem:[#allocation11 + $0x30] sm:$0xff]
        %v1297 = vld [vmem:[#allocation11 + $0x38] sm:$0xff]
        %v1298 = vld [vmem:[#allocation11 + $0x40] sm:$0xff]
        %v1299 = vld [vmem:[#allocation11 + $0x48] sm:$0xff]
        %v1300 = vld [vmem:[#allocation11 + $0x50] sm:$0xff]
        %v1301 = vld [vmem:[#allocation11 + $0x58] sm:$0xff]
        %v1302 = vld [vmem:[#allocation11 + $0x60] sm:$0xff]
        %v1303 = vld [vmem:[#allocation11 + $0x68] sm:$0xff]
        %v1304 = vld [vmem:[#allocation11 + $0x70] sm:$0xff]
        %v1305 = vld [vmem:[#allocation11 + $0x78] sm:$0xff]
        %v1306 = vld [vmem:[#allocation11 + $0x80] sm:$0xff]
        %v1307 = vld [vmem:[#allocation11 + $0x88] sm:$0xff]
        %v1308 = vld [vmem:[#allocation11 + $0x90] sm:$0xff]
        %v1309 = vld [vmem:[#allocation11 + $0x98] sm:$0xff]
        %v1310 = vld [vmem:[#allocation11 + $0xa0] sm:$0xff]
        %v1311 = vld [vmem:[#allocation11 + $0xa8] sm:$0xff]
        %v1312 = vld [vmem:[#allocation11 + $0xb0] sm:$0xff]
        %v1313 = vld [vmem:[#allocation11 + $0xb8] sm:$0xff]
        %v1314 = vld [vmem:[#allocation11 + $0xc0] sm:$0xff]
        %v1315 = vld [vmem:[#allocation11 + $0xc8] sm:$0xff]
        %v1316 = vld [vmem:[#allocation11 + $0xd0] sm:$0xff]
        %v1317 = vld [vmem:[#allocation11 + $0xd8] sm:$0xff]
        %v1318 = vld [vmem:[#allocation11 + $0xe0] sm:$0xff]
        %v1319 = vld [vmem:[#allocation11 + $0xe8] sm:$0xff]
        %v1320 = vld [vmem:[#allocation11 + $0xf0] sm:$0xff]
        %v1321 = vld [vmem:[#allocation11 + $0xf8] sm:$0xff]
        %v1322 = vld [vmem:[#allocation11 + $0x100] sm:$0xff]
        %v1323 = vld [vmem:[#allocation11 + $0x108] sm:$0xff]
        %v1324 = vld [vmem:[#allocation11 + $0x110] sm:$0xff]
        %v1325 = vld [vmem:[#allocation11 + $0x118] sm:$0xff]
        %v1326 = vld [vmem:[#allocation11 + $0x120] sm:$0xff]
        %v1327 = vld [vmem:[#allocation11 + $0x128] sm:$0xff]
        %v1328 = vld [vmem:[#allocation11 + $0x130] sm:$0xff]
        %v1329 = vld [vmem:[#allocation11 + $0x138] sm:$0xff]
        %v1330 = vld [vmem:[#allocation11 + $0x140] sm:$0xff]
        %v1331 = vld [vmem:[#allocation11 + $0x148] sm:$0xff]
        %v1332 = vld [vmem:[#allocation11 + $0x150] sm:$0xff]
        %v1333 = vld [vmem:[#allocation11 + $0x158] sm:$0xff]
        %v1334 = vld [vmem:[#allocation11 + $0x160] sm:$0xff]
        %v1335 = vld [vmem:[#allocation11 + $0x168] sm:$0xff]
        %v1336 = vld [vmem:[#allocation11 + $0x170] sm:$0xff]
        %v1337 = vld [vmem:[#allocation11 + $0x178] sm:$0xff]
        %v1338 = vld [vmem:[#allocation11 + $0x180] sm:$0xff]
        %v1339 = vld [vmem:[#allocation11 + $0x188] sm:$0xff]
        %v1340 = vld [vmem:[#allocation11 + $0x190] sm:$0xff]
        %v1341 = vld [vmem:[#allocation11 + $0x198] sm:$0xff]
        %v1342 = vld [vmem:[#allocation11 + $0x1a0] sm:$0xff]
        %v1343 = vld [vmem:[#allocation11 + $0x1a8] sm:$0xff]
        %v1344 = vld [vmem:[#allocation11 + $0x1b0] sm:$0xff]
        %v1345 = vld [vmem:[#allocation11 + $0x1b8] sm:$0xff]
        %v1346 = vld [vmem:[#allocation11 + $0x1c0] sm:$0xff]
        %v1347 = vld [vmem:[#allocation11 + $0x1c8] sm:$0xff]
        %v1348 = vld [vmem:[#allocation11 + $0x1d0] sm:$0xff]
        %v1349 = vld [vmem:[#allocation11 + $0x1d8] sm:$0xff]
        %v1350 = vld [vmem:[#allocation11 + $0x1e0] sm:$0xff]
        %v1351 = vld [vmem:[#allocation11 + $0x1e8] sm:$0xff]
        %v1352 = vld [vmem:[#allocation11 + $0x1f0] sm:$0xff]
        %v1353 = vld [vmem:[#allocation11 + $0x1f8] sm:$0xff]
        %v1354 = vld [vmem:[#allocation13] sm:$0x3]
        %v1355 = vld [vmem:[#allocation14] sm:$0xf]
        %v1356 = vld [vmem:[#allocation14 + $0x4] sm:$0xf]
        %v1357 = vld [vmem:[#allocation14 + $0x8] sm:$0xf]
        %v1358 = vld [vmem:[#allocation14 + $0xc] sm:$0xf]
        %v1359 = vld [vmem:[#allocation14 + $0x10] sm:$0xf]
        %v1360 = vld [vmem:[#allocation14 + $0x14] sm:$0xf]
        %v1361 = vld [vmem:[#allocation14 + $0x18] sm:$0xf]
        %v1362 = vld [vmem:[#allocation14 + $0x1c] sm:$0xf]
        %v1363 = vld [vmem:[#allocation14 + $0x20] sm:$0xf]
        %v1364 = vld [vmem:[#allocation14 + $0x24] sm:$0xf]
        %v1365 = vld [vmem:[#allocation14 + $0x28] sm:$0xf]
        %v1366 = vld [vmem:[#allocation14 + $0x2c] sm:$0xf]
        %v1367 = vld [vmem:[#allocation14 + $0x30] sm:$0xf]
        %v1368 = vld [vmem:[#allocation14 + $0x34] sm:$0xf]
        %v1369 = vld [vmem:[#allocation14 + $0x38] sm:$0xf]
        %v1370 = vld [vmem:[#allocation14 + $0x3c] sm:$0xf]
        %v1371 = vld [vmem:[#allocation14 + $0x40] sm:$0xf]
        %v1372 = vld [vmem:[#allocation14 + $0x44] sm:$0xf]
        %v1373 = vld [vmem:[#allocation14 + $0x48] sm:$0xf]
        %v1374 = vld [vmem:[#allocation14 + $0x4c] sm:$0xf]
        %v1375 = vld [vmem:[#allocation14 + $0x50] sm:$0xf]
        %v1376 = vld [vmem:[#allocation14 + $0x54] sm:$0xf]
        %v1377 = vld [vmem:[#allocation14 + $0x58] sm:$0xf]
        %v1378 = vld [vmem:[#allocation14 + $0x5c] sm:$0xf]
        %v1379 = vld [vmem:[#allocation14 + $0x60] sm:$0xf]
        %v1380 = vld [vmem:[#allocation14 + $0x64] sm:$0xf]
        %v1381 = vld [vmem:[#allocation14 + $0x68] sm:$0xf]
        %v1382 = vld [vmem:[#allocation14 + $0x6c] sm:$0xf]
        %v1383 = vld [vmem:[#allocation14 + $0x70] sm:$0xf]
        %v1384 = vld [vmem:[#allocation14 + $0x74] sm:$0xf]
        %v1385 = vld [vmem:[#allocation14 + $0x78] sm:$0xf]
        %v1386 = vld [vmem:[#allocation14 + $0x7c] sm:$0xf]
        %v1387 = vld [vmem:[#allocation16] sm:$0x1]
        %v1388 = vld [vmem:[#allocation17] sm:$0xf]
        %v1389 = vld [vmem:[#allocation17 + $0x4] sm:$0xf]
        %v1390 = vld [vmem:[#allocation17 + $0x8] sm:$0xf]
        %v1391 = vld [vmem:[#allocation17 + $0xc] sm:$0xf]
        %v1392 = vld [vmem:[#allocation17 + $0x10] sm:$0xf]
        %v1393 = vld [vmem:[#allocation17 + $0x14] sm:$0xf]
        %v1394 = vld [vmem:[#allocation17 + $0x18] sm:$0xf]
        %v1395 = vld [vmem:[#allocation17 + $0x1c] sm:$0xf]
        %v1396 = vld [vmem:[#allocation17 + $0x20] sm:$0xf]
        %v1397 = vld [vmem:[#allocation17 + $0x24] sm:$0xf]
        %v1398 = vld [vmem:[#allocation17 + $0x28] sm:$0xf]
        %v1399 = vld [vmem:[#allocation17 + $0x2c] sm:$0xf]
        %v1400 = vld [vmem:[#allocation17 + $0x30] sm:$0xf]
        %v1401 = vld [vmem:[#allocation17 + $0x34] sm:$0xf]
        %v1402 = vld [vmem:[#allocation17 + $0x38] sm:$0xf]
        %v1403 = vld [vmem:[#allocation17 + $0x3c] sm:$0xf]
        %v1404 = vld [vmem:[#allocation19] sm:$0x1]
        %v1405 = vld [vmem:[#allocation20] sm:$0xf]
        %v1406 = vld [vmem:[#allocation20 + $0x4] sm:$0xf]
        %v1407 = vld [vmem:[#allocation20 + $0x8] sm:$0xf]
        %v1408 = vld [vmem:[#allocation20 + $0xc] sm:$0xf]
        %v1409 = vld [vmem:[#allocation20 + $0x10] sm:$0xf]
        %v1410 = vld [vmem:[#allocation20 + $0x14] sm:$0xf]
        %v1411 = vld [vmem:[#allocation20 + $0x18] sm:$0xf]
        %v1412 = vld [vmem:[#allocation20 + $0x1c] sm:$0xf]
        %v1413 = vld [vmem:[#allocation22] sm:$0x1]
        %v1414 = vld [vmem:[#allocation23] sm:$0xff]
        %v1415 = vld [vmem:[#allocation23 + $0x8] sm:$0xff]
        %v1416 = vld [vmem:[#allocation23 + $0x10] sm:$0xff]
        %v1417 = vld [vmem:[#allocation23 + $0x18] sm:$0xff]
        %v1418 = vld [vmem:[#allocation23 + $0x20] sm:$0xff]
        %v1419 = vld [vmem:[#allocation23 + $0x28] sm:$0xff]
        %v1420 = vld [vmem:[#allocation23 + $0x30] sm:$0xff]
        %v1421 = vld [vmem:[#allocation23 + $0x38] sm:$0xff]
        %v1422 = vld [vmem:[#allocation23 + $0x40] sm:$0xff]
        %v1423 = vld [vmem:[#allocation23 + $0x48] sm:$0xff]
        %v1424 = vld [vmem:[#allocation23 + $0x50] sm:$0xff]
        %v1425 = vld [vmem:[#allocation23 + $0x58] sm:$0xff]
        %v1426 = vld [vmem:[#allocation23 + $0x60] sm:$0xff]
        %v1427 = vld [vmem:[#allocation23 + $0x68] sm:$0xff]
        %v1428 = vld [vmem:[#allocation23 + $0x70] sm:$0xff]
        %v1429 = vld [vmem:[#allocation23 + $0x78] sm:$0xff]
        %v1430 = vld [vmem:[#allocation25] sm:$0x3]
        %v1431 = vld [vmem:[#allocation26] sm:$0xff]
        %v1432 = vld [vmem:[#allocation26 + $0x8] sm:$0xff]
        %v1433 = vld [vmem:[#allocation26 + $0x10] sm:$0xff]
        %v1434 = vld [vmem:[#allocation26 + $0x18] sm:$0xff]
        %v1435 = vld [vmem:[#allocation26 + $0x20] sm:$0xff]
        %v1436 = vld [vmem:[#allocation26 + $0x28] sm:$0xff]
        %v1437 = vld [vmem:[#allocation26 + $0x30] sm:$0xff]
        %v1438 = vld [vmem:[#allocation26 + $0x38] sm:$0xff]
        %v1439 = vld [vmem:[#allocation26 + $0x40] sm:$0xff]
        %v1440 = vld [vmem:[#allocation26 + $0x48] sm:$0xff]
        %v1441 = vld [vmem:[#allocation26 + $0x50] sm:$0xff]
        %v1442 = vld [vmem:[#allocation26 + $0x58] sm:$0xff]
        %v1443 = vld [vmem:[#allocation26 + $0x60] sm:$0xff]
        %v1444 = vld [vmem:[#allocation26 + $0x68] sm:$0xff]
        %v1445 = vld [vmem:[#allocation26 + $0x70] sm:$0xff]
        %v1446 = vld [vmem:[#allocation26 + $0x78] sm:$0xff]
        %v1447 = vld [vmem:[#allocation26 + $0x80] sm:$0xff]
        %v1448 = vld [vmem:[#allocation26 + $0x88] sm:$0xff]
        %v1449 = vld [vmem:[#allocation26 + $0x90] sm:$0xff]
        %v1450 = vld [vmem:[#allocation26 + $0x98] sm:$0xff]
        %v1451 = vld [vmem:[#allocation26 + $0xa0] sm:$0xff]
        %v1452 = vld [vmem:[#allocation26 + $0xa8] sm:$0xff]
        %v1453 = vld [vmem:[#allocation26 + $0xb0] sm:$0xff]
        %v1454 = vld [vmem:[#allocation26 + $0xb8] sm:$0xff]
        %v1455 = vld [vmem:[#allocation26 + $0xc0] sm:$0xff]
        %v1456 = vld [vmem:[#allocation26 + $0xc8] sm:$0xff]
        %v1457 = vld [vmem:[#allocation26 + $0xd0] sm:$0xff]
        %v1458 = vld [vmem:[#allocation26 + $0xd8] sm:$0xff]
        %v1459 = vld [vmem:[#allocation26 + $0xe0] sm:$0xff]
        %v1460 = vld [vmem:[#allocation26 + $0xe8] sm:$0xff]
        %v1461 = vld [vmem:[#allocation26 + $0xf0] sm:$0xff]
        %v1462 = vld [vmem:[#allocation26 + $0xf8] sm:$0xff]
        %v1463 = vld [vmem:[#allocation26 + $0x100] sm:$0xff]
        %v1464 = vld [vmem:[#allocation26 + $0x108] sm:$0xff]
        %v1465 = vld [vmem:[#allocation26 + $0x110] sm:$0xff]
        %v1466 = vld [vmem:[#allocation26 + $0x118] sm:$0xff]
        %v1467 = vld [vmem:[#allocation26 + $0x120] sm:$0xff]
        %v1468 = vld [vmem:[#allocation26 + $0x128] sm:$0xff]
        %v1469 = vld [vmem:[#allocation26 + $0x130] sm:$0xff]
        %v1470 = vld [vmem:[#allocation26 + $0x138] sm:$0xff]
        %v1471 = vld [vmem:[#allocation26 + $0x140] sm:$0xff]
        %v1472 = vld [vmem:[#allocation26 + $0x148] sm:$0xff]
        %v1473 = vld [vmem:[#allocation26 + $0x150] sm:$0xff]
        %v1474 = vld [vmem:[#allocation26 + $0x158] sm:$0xff]
        %v1475 = vld [vmem:[#allocation26 + $0x160] sm:$0xff]
        %v1476 = vld [vmem:[#allocation26 + $0x168] sm:$0xff]
        %v1477 = vld [vmem:[#allocation26 + $0x170] sm:$0xff]
        %v1478 = vld [vmem:[#allocation26 + $0x178] sm:$0xff]
        %v1479 = vld [vmem:[#allocation26 + $0x180] sm:$0xff]
        %v1480 = vld [vmem:[#allocation26 + $0x188] sm:$0xff]
        %v1481 = vld [vmem:[#allocation26 + $0x190] sm:$0xff]
        %v1482 = vld [vmem:[#allocation26 + $0x198] sm:$0xff]
        %v1483 = vld [vmem:[#allocation26 + $0x1a0] sm:$0xff]
        %v1484 = vld [vmem:[#allocation26 + $0x1a8] sm:$0xff]
        %v1485 = vld [vmem:[#allocation26 + $0x1b0] sm:$0xff]
        %v1486 = vld [vmem:[#allocation26 + $0x1b8] sm:$0xff]
        %v1487 = vld [vmem:[#allocation26 + $0x1c0] sm:$0xff]
        %v1488 = vld [vmem:[#allocation26 + $0x1c8] sm:$0xff]
        %v1489 = vld [vmem:[#allocation26 + $0x1d0] sm:$0xff]
        %v1490 = vld [vmem:[#allocation26 + $0x1d8] sm:$0xff]
        %v1491 = vld [vmem:[#allocation26 + $0x1e0] sm:$0xff]
        %v1492 = vld [vmem:[#allocation26 + $0x1e8] sm:$0xff]
        %v1493 = vld [vmem:[#allocation26 + $0x1f0] sm:$0xff]
        %v1494 = vld [vmem:[#allocation26 + $0x1f8] sm:$0xff]
        %v1495 = vld [vmem:[%s17] sm:$0xf]
        %v1496 = vld [vmem:[#allocation28] sm:$0xff]
        %v1497 = vld [vmem:[#allocation28 + $0x8] sm:$0xff]
        %v1498 = vld [vmem:[#allocation28 + $0x10] sm:$0xff]
        %v1499 = vld [vmem:[#allocation28 + $0x18] sm:$0xff]
        %v1500 = vld [vmem:[#allocation28 + $0x20] sm:$0xff]
        %v1501 = vld [vmem:[#allocation28 + $0x28] sm:$0xff]
        %v1502 = vld [vmem:[#allocation28 + $0x30] sm:$0xff]
        %v1503 = vld [vmem:[#allocation28 + $0x38] sm:$0xff]
        %v1504 = vld [vmem:[#allocation28 + $0x40] sm:$0xff]
        %v1505 = vld [vmem:[#allocation28 + $0x48] sm:$0xff]
        %v1506 = vld [vmem:[#allocation28 + $0x50] sm:$0xff]
        %v1507 = vld [vmem:[#allocation28 + $0x58] sm:$0xff]
        %v1508 = vld [vmem:[#allocation28 + $0x60] sm:$0xff]
        %v1509 = vld [vmem:[#allocation28 + $0x68] sm:$0xff]
        %v1510 = vld [vmem:[#allocation28 + $0x70] sm:$0xff]
        %v1511 = vld [vmem:[#allocation28 + $0x78] sm:$0xff]
        %v1512 = vld [vmem:[#allocation28 + $0x80] sm:$0xff]
        %v1513 = vld [vmem:[#allocation28 + $0x88] sm:$0xff]
        %v1514 = vld [vmem:[#allocation28 + $0x90] sm:$0xff]
        %v1515 = vld [vmem:[#allocation28 + $0x98] sm:$0xff]
        %v1516 = vld [vmem:[#allocation28 + $0xa0] sm:$0xff]
        %v1517 = vld [vmem:[#allocation28 + $0xa8] sm:$0xff]
        %v1518 = vld [vmem:[#allocation28 + $0xb0] sm:$0xff]
        %v1519 = vld [vmem:[#allocation28 + $0xb8] sm:$0xff]
        %v1520 = vld [vmem:[#allocation28 + $0xc0] sm:$0xff]
        %v1521 = vld [vmem:[#allocation28 + $0xc8] sm:$0xff]
        %v1522 = vld [vmem:[#allocation28 + $0xd0] sm:$0xff]
        %v1523 = vld [vmem:[#allocation28 + $0xd8] sm:$0xff]
        %v1524 = vld [vmem:[#allocation28 + $0xe0] sm:$0xff]
        %v1525 = vld [vmem:[#allocation28 + $0xe8] sm:$0xff]
        %v1526 = vld [vmem:[#allocation28 + $0xf0] sm:$0xff]
        %v1527 = vld [vmem:[#allocation28 + $0xf8] sm:$0xff]
        %v1528 = vld [vmem:[#allocation28 + $0x100] sm:$0xff]
        %v1529 = vld [vmem:[#allocation28 + $0x108] sm:$0xff]
        %v1530 = vld [vmem:[#allocation28 + $0x110] sm:$0xff]
        %v1531 = vld [vmem:[#allocation28 + $0x118] sm:$0xff]
        %v1532 = vld [vmem:[#allocation28 + $0x120] sm:$0xff]
        %v1533 = vld [vmem:[#allocation28 + $0x128] sm:$0xff]
        %v1534 = vld [vmem:[#allocation28 + $0x130] sm:$0xff]
        %v1535 = vld [vmem:[#allocation28 + $0x138] sm:$0xff]
        %v1536 = vld [vmem:[#allocation28 + $0x140] sm:$0xff]
        %v1537 = vld [vmem:[#allocation28 + $0x148] sm:$0xff]
        %v1538 = vld [vmem:[#allocation28 + $0x150] sm:$0xff]
        %v1539 = vld [vmem:[#allocation28 + $0x158] sm:$0xff]
        %v1540 = vld [vmem:[#allocation28 + $0x160] sm:$0xff]
        %v1541 = vld [vmem:[#allocation28 + $0x168] sm:$0xff]
        %v1542 = vld [vmem:[#allocation28 + $0x170] sm:$0xff]
        %v1543 = vld [vmem:[#allocation28 + $0x178] sm:$0xff]
        %v1544 = vld [vmem:[#allocation28 + $0x180] sm:$0xff]
        %v1545 = vld [vmem:[#allocation28 + $0x188] sm:$0xff]
        %v1546 = vld [vmem:[#allocation28 + $0x190] sm:$0xff]
        %v1547 = vld [vmem:[#allocation28 + $0x198] sm:$0xff]
        %v1548 = vld [vmem:[#allocation28 + $0x1a0] sm:$0xff]
        %v1549 = vld [vmem:[#allocation28 + $0x1a8] sm:$0xff]
        %v1550 = vld [vmem:[#allocation28 + $0x1b0] sm:$0xff]
        %v1551 = vld [vmem:[#allocation28 + $0x1b8] sm:$0xff]
        %v1552 = vld [vmem:[#allocation28 + $0x1c0] sm:$0xff]
        %v1553 = vld [vmem:[#allocation28 + $0x1c8] sm:$0xff]
        %v1554 = vld [vmem:[#allocation28 + $0x1d0] sm:$0xff]
        %v1555 = vld [vmem:[#allocation28 + $0x1d8] sm:$0xff]
        %v1556 = vld [vmem:[#allocation28 + $0x1e0] sm:$0xff]
        %v1557 = vld [vmem:[#allocation28 + $0x1e8] sm:$0xff]
        %v1558 = vld [vmem:[#allocation28 + $0x1f0] sm:$0xff]
        %v1559 = vld [vmem:[#allocation28 + $0x1f8] sm:$0xff]
        %v1560 = vld [vmem:[#allocation28 + $0x200] sm:$0xff]
        %v1561 = vld [vmem:[#allocation28 + $0x208] sm:$0xff]
        %v1562 = vld [vmem:[#allocation28 + $0x210] sm:$0xff]
        %v1563 = vld [vmem:[#allocation28 + $0x218] sm:$0xff]
        %v1564 = vld [vmem:[#allocation28 + $0x220] sm:$0xff]
        %v1565 = vld [vmem:[#allocation28 + $0x228] sm:$0xff]
        %v1566 = vld [vmem:[#allocation28 + $0x230] sm:$0xff]
        %v1567 = vld [vmem:[#allocation28 + $0x238] sm:$0xff]
        %v1568 = vld [vmem:[#allocation28 + $0x240] sm:$0xff]
        %v1569 = vld [vmem:[#allocation28 + $0x248] sm:$0xff]
        %v1570 = vld [vmem:[#allocation28 + $0x250] sm:$0xff]
        %v1571 = vld [vmem:[#allocation28 + $0x258] sm:$0xff]
        %v1572 = vld [vmem:[#allocation28 + $0x260] sm:$0xff]
        %v1573 = vld [vmem:[#allocation28 + $0x268] sm:$0xff]
        %v1574 = vld [vmem:[#allocation28 + $0x270] sm:$0xff]
        %v1575 = vld [vmem:[#allocation28 + $0x278] sm:$0xff]
        %v1576 = vld [vmem:[#allocation28 + $0x280] sm:$0xff]
        %v1577 = vld [vmem:[#allocation28 + $0x288] sm:$0xff]
        %v1578 = vld [vmem:[#allocation28 + $0x290] sm:$0xff]
        %v1579 = vld [vmem:[#allocation28 + $0x298] sm:$0xff]
        %v1580 = vld [vmem:[#allocation28 + $0x2a0] sm:$0xff]
        %v1581 = vld [vmem:[#allocation28 + $0x2a8] sm:$0xff]
        %v1582 = vld [vmem:[#allocation28 + $0x2b0] sm:$0xff]
        %v1583 = vld [vmem:[#allocation28 + $0x2b8] sm:$0xff]
        %v1584 = vld [vmem:[#allocation28 + $0x2c0] sm:$0xff]
        %v1585 = vld [vmem:[#allocation28 + $0x2c8] sm:$0xff]
        %v1586 = vld [vmem:[#allocation28 + $0x2d0] sm:$0xff]
        %v1587 = vld [vmem:[#allocation28 + $0x2d8] sm:$0xff]
        %v1588 = vld [vmem:[#allocation28 + $0x2e0] sm:$0xff]
        %v1589 = vld [vmem:[#allocation28 + $0x2e8] sm:$0xff]
        %v1590 = vld [vmem:[#allocation28 + $0x2f0] sm:$0xff]
        %v1591 = vld [vmem:[#allocation28 + $0x2f8] sm:$0xff]
        %v1592 = vld [vmem:[#allocation28 + $0x300] sm:$0xff]
        %v1593 = vld [vmem:[#allocation28 + $0x308] sm:$0xff]
        %v1594 = vld [vmem:[#allocation28 + $0x310] sm:$0xff]
        %v1595 = vld [vmem:[#allocation28 + $0x318] sm:$0xff]
        %v1596 = vld [vmem:[#allocation28 + $0x320] sm:$0xff]
        %v1597 = vld [vmem:[#allocation28 + $0x328] sm:$0xff]
        %v1598 = vld [vmem:[#allocation28 + $0x330] sm:$0xff]
        %v1599 = vld [vmem:[#allocation28 + $0x338] sm:$0xff]
        %v1600 = vld [vmem:[#allocation28 + $0x340] sm:$0xff]
        %v1601 = vld [vmem:[#allocation28 + $0x348] sm:$0xff]
        %v1602 = vld [vmem:[#allocation28 + $0x350] sm:$0xff]
        %v1603 = vld [vmem:[#allocation28 + $0x358] sm:$0xff]
        %v1604 = vld [vmem:[#allocation28 + $0x360] sm:$0xff]
        %v1605 = vld [vmem:[#allocation28 + $0x368] sm:$0xff]
        %v1606 = vld [vmem:[#allocation28 + $0x370] sm:$0xff]
        %v1607 = vld [vmem:[#allocation28 + $0x378] sm:$0xff]
        %v1608 = vld [vmem:[#allocation28 + $0x380] sm:$0xff]
        %v1609 = vld [vmem:[#allocation28 + $0x388] sm:$0xff]
        %v1610 = vld [vmem:[#allocation28 + $0x390] sm:$0xff]
        %v1611 = vld [vmem:[#allocation28 + $0x398] sm:$0xff]
        %v1612 = vld [vmem:[#allocation28 + $0x3a0] sm:$0xff]
        %v1613 = vld [vmem:[#allocation28 + $0x3a8] sm:$0xff]
        %v1614 = vld [vmem:[#allocation28 + $0x3b0] sm:$0xff]
        %v1615 = vld [vmem:[#allocation28 + $0x3b8] sm:$0xff]
        %v1616 = vld [vmem:[#allocation28 + $0x3c0] sm:$0xff]
        %v1617 = vld [vmem:[#allocation28 + $0x3c8] sm:$0xff]
        %v1618 = vld [vmem:[#allocation28 + $0x3d0] sm:$0xff]
        %v1619 = vld [vmem:[#allocation28 + $0x3d8] sm:$0xff]
        %v1620 = vld [vmem:[#allocation28 + $0x3e0] sm:$0xff]
        %v1621 = vld [vmem:[#allocation28 + $0x3e8] sm:$0xff]
        %v1622 = vld [vmem:[#allocation28 + $0x3f0] sm:$0xff]
        %v1623 = vld [vmem:[#allocation28 + $0x3f8] sm:$0xff]
        %v1624 = vld [vmem:[%s19] sm:$0xf]
        %v1625 = vld [vmem:[#allocation29] sm:$0xff]
        %v1626 = vld [vmem:[#allocation29 + $0x8] sm:$0xff]
        %v1627 = vld [vmem:[#allocation29 + $0x10] sm:$0xff]
        %v1628 = vld [vmem:[#allocation29 + $0x18] sm:$0xff]
        %v1629 = vld [vmem:[#allocation29 + $0x20] sm:$0xff]
        %v1630 = vld [vmem:[#allocation29 + $0x28] sm:$0xff]
        %v1631 = vld [vmem:[#allocation29 + $0x30] sm:$0xff]
        %v1632 = vld [vmem:[#allocation29 + $0x38] sm:$0xff]
        %v1633 = vld [vmem:[#allocation29 + $0x40] sm:$0xff]
        %v1634 = vld [vmem:[#allocation29 + $0x48] sm:$0xff]
        %v1635 = vld [vmem:[#allocation29 + $0x50] sm:$0xff]
        %v1636 = vld [vmem:[#allocation29 + $0x58] sm:$0xff]
        %v1637 = vld [vmem:[#allocation29 + $0x60] sm:$0xff]
        %v1638 = vld [vmem:[#allocation29 + $0x68] sm:$0xff]
        %v1639 = vld [vmem:[#allocation29 + $0x70] sm:$0xff]
        %v1640 = vld [vmem:[#allocation29 + $0x78] sm:$0xff]
        %v1641 = vld [vmem:[#allocation29 + $0x80] sm:$0xff]
        %v1642 = vld [vmem:[#allocation29 + $0x88] sm:$0xff]
        %v1643 = vld [vmem:[#allocation29 + $0x90] sm:$0xff]
        %v1644 = vld [vmem:[#allocation29 + $0x98] sm:$0xff]
        %v1645 = vld [vmem:[#allocation29 + $0xa0] sm:$0xff]
        %v1646 = vld [vmem:[#allocation29 + $0xa8] sm:$0xff]
        %v1647 = vld [vmem:[#allocation29 + $0xb0] sm:$0xff]
        %v1648 = vld [vmem:[#allocation29 + $0xb8] sm:$0xff]
        %v1649 = vld [vmem:[#allocation29 + $0xc0] sm:$0xff]
        %v1650 = vld [vmem:[#allocation29 + $0xc8] sm:$0xff]
        %v1651 = vld [vmem:[#allocation29 + $0xd0] sm:$0xff]
        %v1652 = vld [vmem:[#allocation29 + $0xd8] sm:$0xff]
        %v1653 = vld [vmem:[#allocation29 + $0xe0] sm:$0xff]
        %v1654 = vld [vmem:[#allocation29 + $0xe8] sm:$0xff]
        %v1655 = vld [vmem:[#allocation29 + $0xf0] sm:$0xff]
        %v1656 = vld [vmem:[#allocation29 + $0xf8] sm:$0xff]
        %v1657 = vld [vmem:[#allocation29 + $0x100] sm:$0xff]
        %v1658 = vld [vmem:[#allocation29 + $0x108] sm:$0xff]
        %v1659 = vld [vmem:[#allocation29 + $0x110] sm:$0xff]
        %v1660 = vld [vmem:[#allocation29 + $0x118] sm:$0xff]
        %v1661 = vld [vmem:[#allocation29 + $0x120] sm:$0xff]
        %v1662 = vld [vmem:[#allocation29 + $0x128] sm:$0xff]
        %v1663 = vld [vmem:[#allocation29 + $0x130] sm:$0xff]
        %v1664 = vld [vmem:[#allocation29 + $0x138] sm:$0xff]
        %v1665 = vld [vmem:[#allocation29 + $0x140] sm:$0xff]
        %v1666 = vld [vmem:[#allocation29 + $0x148] sm:$0xff]
        %v1667 = vld [vmem:[#allocation29 + $0x150] sm:$0xff]
        %v1668 = vld [vmem:[#allocation29 + $0x158] sm:$0xff]
        %v1669 = vld [vmem:[#allocation29 + $0x160] sm:$0xff]
        %v1670 = vld [vmem:[#allocation29 + $0x168] sm:$0xff]
        %v1671 = vld [vmem:[#allocation29 + $0x170] sm:$0xff]
        %v1672 = vld [vmem:[#allocation29 + $0x178] sm:$0xff]
        %v1673 = vld [vmem:[#allocation29 + $0x180] sm:$0xff]
        %v1674 = vld [vmem:[#allocation29 + $0x188] sm:$0xff]
        %v1675 = vld [vmem:[#allocation29 + $0x190] sm:$0xff]
        %v1676 = vld [vmem:[#allocation29 + $0x198] sm:$0xff]
        %v1677 = vld [vmem:[#allocation29 + $0x1a0] sm:$0xff]
        %v1678 = vld [vmem:[#allocation29 + $0x1a8] sm:$0xff]
        %v1679 = vld [vmem:[#allocation29 + $0x1b0] sm:$0xff]
        %v1680 = vld [vmem:[#allocation29 + $0x1b8] sm:$0xff]
        %v1681 = vld [vmem:[#allocation29 + $0x1c0] sm:$0xff]
        %v1682 = vld [vmem:[#allocation29 + $0x1c8] sm:$0xff]
        %v1683 = vld [vmem:[#allocation29 + $0x1d0] sm:$0xff]
        %v1684 = vld [vmem:[#allocation29 + $0x1d8] sm:$0xff]
        %v1685 = vld [vmem:[#allocation29 + $0x1e0] sm:$0xff]
        %v1686 = vld [vmem:[#allocation29 + $0x1e8] sm:$0xff]
        %v1687 = vld [vmem:[#allocation29 + $0x1f0] sm:$0xff]
        %v1688 = vld [vmem:[#allocation29 + $0x1f8] sm:$0xff]
        %v1689 = vld [vmem:[#allocation29 + $0x200] sm:$0xff]
        %v1690 = vld [vmem:[#allocation29 + $0x208] sm:$0xff]
        %v1691 = vld [vmem:[#allocation29 + $0x210] sm:$0xff]
        %v1692 = vld [vmem:[#allocation29 + $0x218] sm:$0xff]
        %v1693 = vld [vmem:[#allocation29 + $0x220] sm:$0xff]
        %v1694 = vld [vmem:[#allocation29 + $0x228] sm:$0xff]
        %v1695 = vld [vmem:[#allocation29 + $0x230] sm:$0xff]
        %v1696 = vld [vmem:[#allocation29 + $0x238] sm:$0xff]
        %v1697 = vld [vmem:[#allocation29 + $0x240] sm:$0xff]
        %v1698 = vld [vmem:[#allocation29 + $0x248] sm:$0xff]
        %v1699 = vld [vmem:[#allocation29 + $0x250] sm:$0xff]
        %v1700 = vld [vmem:[#allocation29 + $0x258] sm:$0xff]
        %v1701 = vld [vmem:[#allocation29 + $0x260] sm:$0xff]
        %v1702 = vld [vmem:[#allocation29 + $0x268] sm:$0xff]
        %v1703 = vld [vmem:[#allocation29 + $0x270] sm:$0xff]
        %v1704 = vld [vmem:[#allocation29 + $0x278] sm:$0xff]
        %v1705 = vld [vmem:[#allocation29 + $0x280] sm:$0xff]
        %v1706 = vld [vmem:[#allocation29 + $0x288] sm:$0xff]
        %v1707 = vld [vmem:[#allocation29 + $0x290] sm:$0xff]
        %v1708 = vld [vmem:[#allocation29 + $0x298] sm:$0xff]
        %v1709 = vld [vmem:[#allocation29 + $0x2a0] sm:$0xff]
        %v1710 = vld [vmem:[#allocation29 + $0x2a8] sm:$0xff]
        %v1711 = vld [vmem:[#allocation29 + $0x2b0] sm:$0xff]
        %v1712 = vld [vmem:[#allocation29 + $0x2b8] sm:$0xff]
        %v1713 = vld [vmem:[#allocation29 + $0x2c0] sm:$0xff]
        %v1714 = vld [vmem:[#allocation29 + $0x2c8] sm:$0xff]
        %v1715 = vld [vmem:[#allocation29 + $0x2d0] sm:$0xff]
        %v1716 = vld [vmem:[#allocation29 + $0x2d8] sm:$0xff]
        %v1717 = vld [vmem:[#allocation29 + $0x2e0] sm:$0xff]
        %v1718 = vld [vmem:[#allocation29 + $0x2e8] sm:$0xff]
        %v1719 = vld [vmem:[#allocation29 + $0x2f0] sm:$0xff]
        %v1720 = vld [vmem:[#allocation29 + $0x2f8] sm:$0xff]
        %v1721 = vld [vmem:[#allocation29 + $0x300] sm:$0xff]
        %v1722 = vld [vmem:[#allocation29 + $0x308] sm:$0xff]
        %v1723 = vld [vmem:[#allocation29 + $0x310] sm:$0xff]
        %v1724 = vld [vmem:[#allocation29 + $0x318] sm:$0xff]
        %v1725 = vld [vmem:[#allocation29 + $0x320] sm:$0xff]
        %v1726 = vld [vmem:[#allocation29 + $0x328] sm:$0xff]
        %v1727 = vld [vmem:[#allocation29 + $0x330] sm:$0xff]
        %v1728 = vld [vmem:[#allocation29 + $0x338] sm:$0xff]
        %v1729 = vld [vmem:[#allocation29 + $0x340] sm:$0xff]
        %v1730 = vld [vmem:[#allocation29 + $0x348] sm:$0xff]
        %v1731 = vld [vmem:[#allocation29 + $0x350] sm:$0xff]
        %v1732 = vld [vmem:[#allocation29 + $0x358] sm:$0xff]
        %v1733 = vld [vmem:[#allocation29 + $0x360] sm:$0xff]
        %v1734 = vld [vmem:[#allocation29 + $0x368] sm:$0xff]
        %v1735 = vld [vmem:[#allocation29 + $0x370] sm:$0xff]
        %v1736 = vld [vmem:[#allocation29 + $0x378] sm:$0xff]
        %v1737 = vld [vmem:[#allocation29 + $0x380] sm:$0xff]
        %v1738 = vld [vmem:[#allocation29 + $0x388] sm:$0xff]
        %v1739 = vld [vmem:[#allocation29 + $0x390] sm:$0xff]
        %v1740 = vld [vmem:[#allocation29 + $0x398] sm:$0xff]
        %v1741 = vld [vmem:[#allocation29 + $0x3a0] sm:$0xff]
        %v1742 = vld [vmem:[#allocation29 + $0x3a8] sm:$0xff]
        %v1743 = vld [vmem:[#allocation29 + $0x3b0] sm:$0xff]
        %v1744 = vld [vmem:[#allocation29 + $0x3b8] sm:$0xff]
        %v1745 = vld [vmem:[#allocation29 + $0x3c0] sm:$0xff]
        %v1746 = vld [vmem:[#allocation29 + $0x3c8] sm:$0xff]
        %v1747 = vld [vmem:[#allocation29 + $0x3d0] sm:$0xff]
        %v1748 = vld [vmem:[#allocation29 + $0x3d8] sm:$0xff]
        %v1749 = vld [vmem:[#allocation29 + $0x3e0] sm:$0xff]
        %v1750 = vld [vmem:[#allocation29 + $0x3e8] sm:$0xff]
        %v1751 = vld [vmem:[#allocation29 + $0x3f0] sm:$0xff]
        %v1752 = vld [vmem:[#allocation29 + $0x3f8] sm:$0xff]
        %v1753 = vld [vmem:[%s21] sm:$0xf]
        %v1754 = vld [vmem:[%s864] sm:$0xff]
        %v1755 = vld [vmem:[%s864 + $0x8] sm:$0xff]
        %v1756 = vld [vmem:[%s864 + $0x10] sm:$0xff]
        %v1757 = vld [vmem:[%s864 + $0x18] sm:$0xff]
        %v1758 = vld [vmem:[%s874] sm:$0xff]
        %v1759 = vpack.c.bf16 %v1754, %v1754
        %v1760 = vpack.c.bf16 %v1755, %v1755
        %v1761 = vpack.c.bf16 %v1756, %v1756
        %v1762 = vpack.c.bf16 %v1757, %v1757
        %v1764 = vperm.slane %v1160, 0
        %v1765 = vperm.slane %v1160, 1
        %v1766 = vperm.slane %v1160, 2
        %v1767 = vperm.slane %v1160, 3
        %v1900 = vunpack.c.l.b16 %v1032
        %v1901 = vunpack.c.h.b16 %v1032
        %v1902 = vunpack.c.l.b16 %v1033
        %v1903 = vunpack.c.h.b16 %v1033
        %v1904 = vunpack.c.l.b16 %v1034
        %v1905 = vunpack.c.h.b16 %v1034
        %v1906 = vunpack.c.l.b16 %v1035
        %v1907 = vunpack.c.h.b16 %v1035
        %v1908 = vunpack.c.l.b16 %v1036
        %v1909 = vunpack.c.h.b16 %v1036
        %v1910 = vunpack.c.l.b16 %v1037
        %v1911 = vunpack.c.h.b16 %v1037
        %v1912 = vunpack.c.l.b16 %v1038
        %v1913 = vunpack.c.h.b16 %v1038
        %v1914 = vunpack.c.l.b16 %v1039
        %v1915 = vunpack.c.h.b16 %v1039
        %v1916 = vunpack.c.l.b16 %v1040
        %v1917 = vunpack.c.h.b16 %v1040
        %v1918 = vunpack.c.l.b16 %v1041
        %v1919 = vunpack.c.h.b16 %v1041
        %v1920 = vunpack.c.l.b16 %v1042
        %v1921 = vunpack.c.h.b16 %v1042
        %v1922 = vunpack.c.l.b16 %v1043
        %v1923 = vunpack.c.h.b16 %v1043
        %v1924 = vunpack.c.l.b16 %v1044
        %v1925 = vunpack.c.h.b16 %v1044
        %v1926 = vunpack.c.l.b16 %v1045
        %v1927 = vunpack.c.h.b16 %v1045
        %v1928 = vunpack.c.l.b16 %v1046
        %v1929 = vunpack.c.h.b16 %v1046
        %v1930 = vunpack.c.l.b16 %v1047
        %v1931 = vunpack.c.h.b16 %v1047
        %v1932 = vunpack.c.l.b16 %v1048
        %v1933 = vunpack.c.h.b16 %v1048
        %v1934 = vunpack.c.l.b16 %v1049
        %v1935 = vunpack.c.h.b16 %v1049
        %v1936 = vunpack.c.l.b16 %v1050
        %v1937 = vunpack.c.h.b16 %v1050
        %v1938 = vunpack.c.l.b16 %v1051
        %v1939 = vunpack.c.h.b16 %v1051
        %v1940 = vunpack.c.l.b16 %v1052
        %v1941 = vunpack.c.h.b16 %v1052
        %v1942 = vunpack.c.l.b16 %v1053
        %v1943 = vunpack.c.h.b16 %v1053
        %v1944 = vunpack.c.l.b16 %v1054
        %v1945 = vunpack.c.h.b16 %v1054
        %v1946 = vunpack.c.l.b16 %v1055
        %v1947 = vunpack.c.h.b16 %v1055
        %v1948 = vunpack.c.l.b16 %v1056
        %v1949 = vunpack.c.h.b16 %v1056
        %v1950 = vunpack.c.l.b16 %v1057
        %v1951 = vunpack.c.h.b16 %v1057
        %v1952 = vunpack.c.l.b16 %v1058
        %v1953 = vunpack.c.h.b16 %v1058
        %v1954 = vunpack.c.l.b16 %v1059
        %v1955 = vunpack.c.h.b16 %v1059
        %v1956 = vunpack.c.l.b16 %v1060
        %v1957 = vunpack.c.h.b16 %v1060
        %v1958 = vunpack.c.l.b16 %v1061
        %v1959 = vunpack.c.h.b16 %v1061
        %v1960 = vunpack.c.l.b16 %v1062
        %v1961 = vunpack.c.h.b16 %v1062
        %v1962 = vunpack.c.l.b16 %v1063
        %v1963 = vunpack.c.h.b16 %v1063
        %v1964 = vunpack.c.l.b16 %v1064
        %v1965 = vunpack.c.h.b16 %v1064
        %v1966 = vunpack.c.l.b16 %v1065
        %v1967 = vunpack.c.h.b16 %v1065
        %v1968 = vunpack.c.l.b16 %v1066
        %v1969 = vunpack.c.h.b16 %v1066
        %v1970 = vunpack.c.l.b16 %v1067
        %v1971 = vunpack.c.h.b16 %v1067
        %v1972 = vunpack.c.l.b16 %v1068
        %v1973 = vunpack.c.h.b16 %v1068
        %v1974 = vunpack.c.l.b16 %v1069
        %v1975 = vunpack.c.h.b16 %v1069
        %v1976 = vunpack.c.l.b16 %v1070
        %v1977 = vunpack.c.h.b16 %v1070
        %v1978 = vunpack.c.l.b16 %v1071
        %v1979 = vunpack.c.h.b16 %v1071
        %v1980 = vunpack.c.l.b16 %v1072
        %v1981 = vunpack.c.h.b16 %v1072
        %v1982 = vunpack.c.l.b16 %v1073
        %v1983 = vunpack.c.h.b16 %v1073
        %v1984 = vunpack.c.l.b16 %v1074
        %v1985 = vunpack.c.h.b16 %v1074
        %v1986 = vunpack.c.l.b16 %v1075
        %v1987 = vunpack.c.h.b16 %v1075
        %v1988 = vunpack.c.l.b16 %v1076
        %v1989 = vunpack.c.h.b16 %v1076
        %v1990 = vunpack.c.l.b16 %v1077
        %v1991 = vunpack.c.h.b16 %v1077
        %v1992 = vunpack.c.l.b16 %v1078
        %v1993 = vunpack.c.h.b16 %v1078
        %v1994 = vunpack.c.l.b16 %v1079
        %v1995 = vunpack.c.h.b16 %v1079
        %v1996 = vunpack.c.l.b16 %v1080
        %v1997 = vunpack.c.h.b16 %v1080
        %v1998 = vunpack.c.l.b16 %v1081
        %v1999 = vunpack.c.h.b16 %v1081
        %v2000 = vunpack.c.l.b16 %v1082
        %v2001 = vunpack.c.h.b16 %v1082
        %v2002 = vunpack.c.l.b16 %v1083
        %v2003 = vunpack.c.h.b16 %v1083
        %v2004 = vunpack.c.l.b16 %v1084
        %v2005 = vunpack.c.h.b16 %v1084
        %v2006 = vunpack.c.l.b16 %v1085
        %v2007 = vunpack.c.h.b16 %v1085
        %v2008 = vunpack.c.l.b16 %v1086
        %v2009 = vunpack.c.h.b16 %v1086
        %v2010 = vunpack.c.l.b16 %v1087
        %v2011 = vunpack.c.h.b16 %v1087
        %v2012 = vunpack.c.l.b16 %v1088
        %v2013 = vunpack.c.h.b16 %v1088
        %v2014 = vunpack.c.l.b16 %v1089
        %v2015 = vunpack.c.h.b16 %v1089
        %v2016 = vunpack.c.l.b16 %v1090
        %v2017 = vunpack.c.h.b16 %v1090
        %v2018 = vunpack.c.l.b16 %v1091
        %v2019 = vunpack.c.h.b16 %v1091
        %v2020 = vunpack.c.l.b16 %v1092
        %v2021 = vunpack.c.h.b16 %v1092
        %v2022 = vunpack.c.l.b16 %v1093
        %v2023 = vunpack.c.h.b16 %v1093
        %v2024 = vunpack.c.l.b16 %v1094
        %v2025 = vunpack.c.h.b16 %v1094
        %v2026 = vunpack.c.l.b16 %v1095
        %v2027 = vunpack.c.h.b16 %v1095
        %v2028 = vunpack.c.l.b16 %v1096
        %v2029 = vunpack.c.h.b16 %v1096
        %v2030 = vunpack.c.l.b16 %v1097
        %v2031 = vunpack.c.h.b16 %v1097
        %v2032 = vunpack.c.l.b16 %v1098
        %v2033 = vunpack.c.h.b16 %v1098
        %v2034 = vunpack.c.l.b16 %v1099
        %v2035 = vunpack.c.h.b16 %v1099
        %v2036 = vunpack.c.l.b16 %v1100
        %v2037 = vunpack.c.h.b16 %v1100
        %v2038 = vunpack.c.l.b16 %v1101
        %v2039 = vunpack.c.h.b16 %v1101
        %v2040 = vunpack.c.l.b16 %v1102
        %v2041 = vunpack.c.h.b16 %v1102
        %v2042 = vunpack.c.l.b16 %v1103
        %v2043 = vunpack.c.h.b16 %v1103
        %v2044 = vunpack.c.l.b16 %v1104
        %v2045 = vunpack.c.h.b16 %v1104
        %v2046 = vunpack.c.l.b16 %v1105
        %v2047 = vunpack.c.h.b16 %v1105
        %v2048 = vunpack.c.l.b16 %v1106
        %v2049 = vunpack.c.h.b16 %v1106
        %v2050 = vunpack.c.l.b16 %v1107
        %v2051 = vunpack.c.h.b16 %v1107
        %v2052 = vunpack.c.l.b16 %v1108
        %v2053 = vunpack.c.h.b16 %v1108
        %v2054 = vunpack.c.l.b16 %v1109
        %v2055 = vunpack.c.h.b16 %v1109
        %v2056 = vunpack.c.l.b16 %v1110
        %v2057 = vunpack.c.h.b16 %v1110
        %v2058 = vunpack.c.l.b16 %v1111
        %v2059 = vunpack.c.h.b16 %v1111
        %v2060 = vunpack.c.l.b16 %v1112
        %v2061 = vunpack.c.h.b16 %v1112
        %v2062 = vunpack.c.l.b16 %v1113
        %v2063 = vunpack.c.h.b16 %v1113
        %v2064 = vunpack.c.l.b16 %v1114
        %v2065 = vunpack.c.h.b16 %v1114
        %v2066 = vunpack.c.l.b16 %v1115
        %v2067 = vunpack.c.h.b16 %v1115
        %v2068 = vunpack.c.l.b16 %v1116
        %v2069 = vunpack.c.h.b16 %v1116
        %v2070 = vunpack.c.l.b16 %v1117
        %v2071 = vunpack.c.h.b16 %v1117
        %v2072 = vunpack.c.l.b16 %v1118
        %v2073 = vunpack.c.h.b16 %v1118
        %v2074 = vunpack.c.l.b16 %v1119
        %v2075 = vunpack.c.h.b16 %v1119
        %v2076 = vunpack.c.l.b16 %v1120
        %v2077 = vunpack.c.h.b16 %v1120
        %v2078 = vunpack.c.l.b16 %v1121
        %v2079 = vunpack.c.h.b16 %v1121
        %v2080 = vunpack.c.l.b16 %v1122
        %v2081 = vunpack.c.h.b16 %v1122
        %v2082 = vunpack.c.l.b16 %v1123
        %v2083 = vunpack.c.h.b16 %v1123
        %v2084 = vunpack.c.l.b16 %v1124
        %v2085 = vunpack.c.h.b16 %v1124
        %v2086 = vunpack.c.l.b16 %v1125
        %v2087 = vunpack.c.h.b16 %v1125
        %v2088 = vunpack.c.l.b16 %v1126
        %v2089 = vunpack.c.h.b16 %v1126
        %v2090 = vunpack.c.l.b16 %v1127
        %v2091 = vunpack.c.h.b16 %v1127
        %v2092 = vunpack.c.l.b16 %v1128
        %v2093 = vunpack.c.h.b16 %v1128
        %v2094 = vunpack.c.l.b16 %v1129
        %v2095 = vunpack.c.h.b16 %v1129
        %v2096 = vunpack.c.l.b16 %v1130
        %v2097 = vunpack.c.h.b16 %v1130
        %v2098 = vunpack.c.l.b16 %v1131
        %v2099 = vunpack.c.h.b16 %v1131
        %v2100 = vunpack.c.l.b16 %v1132
        %v2101 = vunpack.c.h.b16 %v1132
        %v2102 = vunpack.c.l.b16 %v1133
        %v2103 = vunpack.c.h.b16 %v1133
        %v2104 = vunpack.c.l.b16 %v1134
        %v2105 = vunpack.c.h.b16 %v1134
        %v2106 = vunpack.c.l.b16 %v1135
        %v2107 = vunpack.c.h.b16 %v1135
        %v2108 = vunpack.c.l.b16 %v1136
        %v2109 = vunpack.c.h.b16 %v1136
        %v2110 = vunpack.c.l.b16 %v1137
        %v2111 = vunpack.c.h.b16 %v1137
        %v2112 = vunpack.c.l.b16 %v1138
        %v2113 = vunpack.c.h.b16 %v1138
        %v2114 = vunpack.c.l.b16 %v1139
        %v2115 = vunpack.c.h.b16 %v1139
        %v2116 = vunpack.c.l.b16 %v1140
        %v2117 = vunpack.c.h.b16 %v1140
        %v2118 = vunpack.c.l.b16 %v1141
        %v2119 = vunpack.c.h.b16 %v1141
        %v2120 = vunpack.c.l.b16 %v1142
        %v2121 = vunpack.c.h.b16 %v1142
        %v2122 = vunpack.c.l.b16 %v1143
        %v2123 = vunpack.c.h.b16 %v1143
        %v2124 = vunpack.c.l.b16 %v1144
        %v2125 = vunpack.c.h.b16 %v1144
        %v2126 = vunpack.c.l.b16 %v1145
        %v2127 = vunpack.c.h.b16 %v1145
        %v2128 = vunpack.c.l.b16 %v1146
        %v2129 = vunpack.c.h.b16 %v1146
        %v2130 = vunpack.c.l.b16 %v1147
        %v2131 = vunpack.c.h.b16 %v1147
        %v2132 = vunpack.c.l.b16 %v1148
        %v2133 = vunpack.c.h.b16 %v1148
        %v2134 = vunpack.c.l.b16 %v1149
        %v2135 = vunpack.c.h.b16 %v1149
        %v2136 = vunpack.c.l.b16 %v1150
        %v2137 = vunpack.c.h.b16 %v1150
        %v2138 = vunpack.c.l.b16 %v1151
        %v2139 = vunpack.c.h.b16 %v1151
        %v2140 = vunpack.c.l.b16 %v1152
        %v2141 = vunpack.c.h.b16 %v1152
        %v2142 = vunpack.c.l.b16 %v1153
        %v2143 = vunpack.c.h.b16 %v1153
        %v2144 = vunpack.c.l.b16 %v1154
        %v2145 = vunpack.c.h.b16 %v1154
        %v2146 = vunpack.c.l.b16 %v1155
        %v2147 = vunpack.c.h.b16 %v1155
        %v2148 = vunpack.c.l.b16 %v1156
        %v2149 = vunpack.c.h.b16 %v1156
        %v2150 = vunpack.c.l.b16 %v1157
        %v2151 = vunpack.c.h.b16 %v1157
        %v2152 = vunpack.c.l.b16 %v1158
        %v2153 = vunpack.c.h.b16 %v1158
        %v2154 = vunpack.c.l.b16 %v1159
        %v2155 = vunpack.c.h.b16 %v1159
        %v2156 = vpack.c.b16 %v1904, %v1900
        %v2157 = vpack.c.b16 %v1905, %v1901
        %v2158 = vpack.c.b16 %v1906, %v1902
        %v2159 = vpack.c.b16 %v1907, %v1903
        %v2160 = vpack.c.b16 %v1912, %v1908
        %v2161 = vpack.c.b16 %v1913, %v1909
        %v2162 = vpack.c.b16 %v1914, %v1910
        %v2163 = vpack.c.b16 %v1915, %v1911
        %v2164 = vpack.c.b16 %v1920, %v1916
        %v2165 = vpack.c.b16 %v1921, %v1917
        %v2166 = vpack.c.b16 %v1922, %v1918
        %v2167 = vpack.c.b16 %v1923, %v1919
        %v2168 = vpack.c.b16 %v1928, %v1924
        %v2169 = vpack.c.b16 %v1929, %v1925
        %v2170 = vpack.c.b16 %v1930, %v1926
        %v2171 = vpack.c.b16 %v1931, %v1927
        %v2172 = vpack.c.b16 %v1936, %v1932
        %v2173 = vpack.c.b16 %v1937, %v1933
        %v2174 = vpack.c.b16 %v1938, %v1934
        %v2175 = vpack.c.b16 %v1939, %v1935
        %v2176 = vpack.c.b16 %v1944, %v1940
        %v2177 = vpack.c.b16 %v1945, %v1941
        %v2178 = vpack.c.b16 %v1946, %v1942
        %v2179 = vpack.c.b16 %v1947, %v1943
        %v2180 = vpack.c.b16 %v1952, %v1948
        %v2181 = vpack.c.b16 %v1953, %v1949
        %v2182 = vpack.c.b16 %v1954, %v1950
        %v2183 = vpack.c.b16 %v1955, %v1951
        %v2184 = vpack.c.b16 %v1960, %v1956
        %v2185 = vpack.c.b16 %v1961, %v1957
        %v2186 = vpack.c.b16 %v1962, %v1958
        %v2187 = vpack.c.b16 %v1963, %v1959
        %v2188 = vpack.c.b16 %v1968, %v1964
        %v2189 = vpack.c.b16 %v1969, %v1965
        %v2190 = vpack.c.b16 %v1970, %v1966
        %v2191 = vpack.c.b16 %v1971, %v1967
        %v2192 = vpack.c.b16 %v1976, %v1972
        %v2193 = vpack.c.b16 %v1977, %v1973
        %v2194 = vpack.c.b16 %v1978, %v1974
        %v2195 = vpack.c.b16 %v1979, %v1975
        %v2196 = vpack.c.b16 %v1984, %v1980
        %v2197 = vpack.c.b16 %v1985, %v1981
        %v2198 = vpack.c.b16 %v1986, %v1982
        %v2199 = vpack.c.b16 %v1987, %v1983
        %v2200 = vpack.c.b16 %v1992, %v1988
        %v2201 = vpack.c.b16 %v1993, %v1989
        %v2202 = vpack.c.b16 %v1994, %v1990
        %v2203 = vpack.c.b16 %v1995, %v1991
        %v2204 = vpack.c.b16 %v2000, %v1996
        %v2205 = vpack.c.b16 %v2001, %v1997
        %v2206 = vpack.c.b16 %v2002, %v1998
        %v2207 = vpack.c.b16 %v2003, %v1999
        %v2208 = vpack.c.b16 %v2008, %v2004
        %v2209 = vpack.c.b16 %v2009, %v2005
        %v2210 = vpack.c.b16 %v2010, %v2006
        %v2211 = vpack.c.b16 %v2011, %v2007
        %v2212 = vpack.c.b16 %v2016, %v2012
        %v2213 = vpack.c.b16 %v2017, %v2013
        %v2214 = vpack.c.b16 %v2018, %v2014
        %v2215 = vpack.c.b16 %v2019, %v2015
        %v2216 = vpack.c.b16 %v2024, %v2020
        %v2217 = vpack.c.b16 %v2025, %v2021
        %v2218 = vpack.c.b16 %v2026, %v2022
        %v2219 = vpack.c.b16 %v2027, %v2023
        %v2220 = vpack.c.b16 %v2032, %v2028
        %v2221 = vpack.c.b16 %v2033, %v2029
        %v2222 = vpack.c.b16 %v2034, %v2030
        %v2223 = vpack.c.b16 %v2035, %v2031
        %v2224 = vpack.c.b16 %v2040, %v2036
        %v2225 = vpack.c.b16 %v2041, %v2037
        %v2226 = vpack.c.b16 %v2042, %v2038
        %v2227 = vpack.c.b16 %v2043, %v2039
        %v2228 = vpack.c.b16 %v2048, %v2044
        %v2229 = vpack.c.b16 %v2049, %v2045
        %v2230 = vpack.c.b16 %v2050, %v2046
        %v2231 = vpack.c.b16 %v2051, %v2047
        %v2232 = vpack.c.b16 %v2056, %v2052
        %v2233 = vpack.c.b16 %v2057, %v2053
        %v2234 = vpack.c.b16 %v2058, %v2054
        %v2235 = vpack.c.b16 %v2059, %v2055
        %v2236 = vpack.c.b16 %v2064, %v2060
        %v2237 = vpack.c.b16 %v2065, %v2061
        %v2238 = vpack.c.b16 %v2066, %v2062
        %v2239 = vpack.c.b16 %v2067, %v2063
        %v2240 = vpack.c.b16 %v2072, %v2068
        %v2241 = vpack.c.b16 %v2073, %v2069
        %v2242 = vpack.c.b16 %v2074, %v2070
        %v2243 = vpack.c.b16 %v2075, %v2071
        %v2244 = vpack.c.b16 %v2080, %v2076
        %v2245 = vpack.c.b16 %v2081, %v2077
        %v2246 = vpack.c.b16 %v2082, %v2078
        %v2247 = vpack.c.b16 %v2083, %v2079
        %v2248 = vpack.c.b16 %v2088, %v2084
        %v2249 = vpack.c.b16 %v2089, %v2085
        %v2250 = vpack.c.b16 %v2090, %v2086
        %v2251 = vpack.c.b16 %v2091, %v2087
        %v2252 = vpack.c.b16 %v2096, %v2092
        %v2253 = vpack.c.b16 %v2097, %v2093
        %v2254 = vpack.c.b16 %v2098, %v2094
        %v2255 = vpack.c.b16 %v2099, %v2095
        %v2256 = vpack.c.b16 %v2104, %v2100
        %v2257 = vpack.c.b16 %v2105, %v2101
        %v2258 = vpack.c.b16 %v2106, %v2102
        %v2259 = vpack.c.b16 %v2107, %v2103
        %v2260 = vpack.c.b16 %v2112, %v2108
        %v2261 = vpack.c.b16 %v2113, %v2109
        %v2262 = vpack.c.b16 %v2114, %v2110
        %v2263 = vpack.c.b16 %v2115, %v2111
        %v2264 = vpack.c.b16 %v2120, %v2116
        %v2265 = vpack.c.b16 %v2121, %v2117
        %v2266 = vpack.c.b16 %v2122, %v2118
        %v2267 = vpack.c.b16 %v2123, %v2119
        %v2268 = vpack.c.b16 %v2128, %v2124
        %v2269 = vpack.c.b16 %v2129, %v2125
        %v2270 = vpack.c.b16 %v2130, %v2126
        %v2271 = vpack.c.b16 %v2131, %v2127
        %v2272 = vpack.c.b16 %v2136, %v2132
        %v2273 = vpack.c.b16 %v2137, %v2133
        %v2274 = vpack.c.b16 %v2138, %v2134
        %v2275 = vpack.c.b16 %v2139, %v2135
        %v2276 = vpack.c.b16 %v2144, %v2140
        %v2277 = vpack.c.b16 %v2145, %v2141
        %v2278 = vpack.c.b16 %v2146, %v2142
        %v2279 = vpack.c.b16 %v2147, %v2143
        %v2280 = vpack.c.b16 %v2152, %v2148
        %v2281 = vpack.c.b16 %v2153, %v2149
        %v2282 = vpack.c.b16 %v2154, %v2150
        %v2283 = vpack.c.b16 %v2155, %v2151
        %2412 = vmatpush.bf16.msra.mxu0 %v2184
        %2413 = vmatpush.bf16.msra.mxu0 %v2180
        %2414 = vmatpush.bf16.msra.mxu0 %v2176
        %2415 = vmatpush.bf16.msra.mxu0 %v2172
        %2416 = vmatpush.bf16.msra.mxu0 %v2168
        %2417 = vmatpush.bf16.msra.mxu0 %v2164
        %2418 = vmatpush.bf16.msra.mxu0 %v2160
        %2419 = vmatpush.bf16.msra.mxu0 %v2156
        %2420 = vmatmul.bf16.gmra.mxu0 %v1759
        %v2421 = vpop.f32.mrf.mxu0
        %v2422 = vadd.f32 %v1764, %v2421
        %v2423 = vpop.f32.mrf.mxu0
        %2424 = vdwg.mxu0
        %2425 = vmatpush.bf16.msra.mxu0 %v2216
        %2426 = vmatpush.bf16.msra.mxu0 %v2212
        %2427 = vmatpush.bf16.msra.mxu0 %v2208
        %2428 = vmatpush.bf16.msra.mxu0 %v2204
        %2429 = vmatpush.bf16.msra.mxu0 %v2200
        %2430 = vmatpush.bf16.msra.mxu0 %v2196
        %2431 = vmatpush.bf16.msra.mxu0 %v2192
        %2432 = vmatpush.bf16.msra.mxu0 %v2188
        %2433 = vmatmul.bf16.gmra.mxu0 %v1760
        %v2434 = vpop.f32.mrf.mxu0
        %v2435 = vadd.f32 %v2422, %v2434
        %v2436 = vpop.f32.mrf.mxu0
        %2437 = vdwg.mxu0
        %2438 = vmatpush.bf16.msra.mxu0 %v2248
        %2439 = vmatpush.bf16.msra.mxu0 %v2244
        %2440 = vmatpush.bf16.msra.mxu0 %v2240
        %2441 = vmatpush.bf16.msra.mxu0 %v2236
        %2442 = vmatpush.bf16.msra.mxu0 %v2232
        %2443 = vmatpush.bf16.msra.mxu0 %v2228
        %2444 = vmatpush.bf16.msra.mxu0 %v2224
        %2445 = vmatpush.bf16.msra.mxu0 %v2220
        %2446 = vmatmul.bf16.gmra.mxu0 %v1761
        %v2447 = vpop.f32.mrf.mxu0
        %v2448 = vadd.f32 %v2435, %v2447
        %v2449 = vpop.f32.mrf.mxu0
        %2450 = vdwg.mxu0
        %2451 = vmatpush.bf16.msra.mxu0 %v2280
        %2452 = vmatpush.bf16.msra.mxu0 %v2276
        %2453 = vmatpush.bf16.msra.mxu0 %v2272
        %2454 = vmatpush.bf16.msra.mxu0 %v2268
        %2455 = vmatpush.bf16.msra.mxu0 %v2264
        %2456 = vmatpush.bf16.msra.mxu0 %v2260
        %2457 = vmatpush.bf16.msra.mxu0 %v2256
        %2458 = vmatpush.bf16.msra.mxu0 %v2252
        %2459 = vmatmul.bf16.gmra.mxu0 %v1762
        %v2460 = vpop.f32.mrf.mxu0
        %v2461 = vadd.f32 %v2448, %v2460
        %v2462 = vpop.f32.mrf.mxu0
        %2463 = vdwg.mxu0
        %2464 = vmatpush.bf16.msra.mxu0 %v2185
        %2465 = vmatpush.bf16.msra.mxu0 %v2181
        %2466 = vmatpush.bf16.msra.mxu0 %v2177
        %2467 = vmatpush.bf16.msra.mxu0 %v2173
        %2468 = vmatpush.bf16.msra.mxu0 %v2169
        %2469 = vmatpush.bf16.msra.mxu0 %v2165
        %2470 = vmatpush.bf16.msra.mxu0 %v2161
        %2471 = vmatpush.bf16.msra.mxu0 %v2157
        %2472 = vmatmul.bf16.gmra.mxu0 %v1759
        %v2473 = vpop.f32.mrf.mxu0
        %v2474 = vadd.f32 %v1765, %v2473
        %v2475 = vpop.f32.mrf.mxu0
        %2476 = vdwg.mxu0
        %2477 = vmatpush.bf16.msra.mxu0 %v2217
        %2478 = vmatpush.bf16.msra.mxu0 %v2213
        %2479 = vmatpush.bf16.msra.mxu0 %v2209
        %2480 = vmatpush.bf16.msra.mxu0 %v2205
        %2481 = vmatpush.bf16.msra.mxu0 %v2201
        %2482 = vmatpush.bf16.msra.mxu0 %v2197
        %2483 = vmatpush.bf16.msra.mxu0 %v2193
        %2484 = vmatpush.bf16.msra.mxu0 %v2189
        %2485 = vmatmul.bf16.gmra.mxu0 %v1760
        %v2486 = vpop.f32.mrf.mxu0
        %v2487 = vadd.f32 %v2474, %v2486
        %v2488 = vpop.f32.mrf.mxu0
        %2489 = vdwg.mxu0
        %2490 = vmatpush.bf16.msra.mxu0 %v2249
        %2491 = vmatpush.bf16.msra.mxu0 %v2245
        %2492 = vmatpush.bf16.msra.mxu0 %v2241
        %2493 = vmatpush.bf16.msra.mxu0 %v2237
        %2494 = vmatpush.bf16.msra.mxu0 %v2233
        %2495 = vmatpush.bf16.msra.mxu0 %v2229
        %2496 = vmatpush.bf16.msra.mxu0 %v2225
        %2497 = vmatpush.bf16.msra.mxu0 %v2221
        %2498 = vmatmul.bf16.gmra.mxu0 %v1761
        %v2499 = vpop.f32.mrf.mxu0
        %v2500 = vadd.f32 %v2487, %v2499
        %v2501 = vpop.f32.mrf.mxu0
        %2502 = vdwg.mxu0
        %2503 = vmatpush.bf16.msra.mxu0 %v2281
        %2504 = vmatpush.bf16.msra.mxu0 %v2277
        %2505 = vmatpush.bf16.msra.mxu0 %v2273
        %2506 = vmatpush.bf16.msra.mxu0 %v2269
        %2507 = vmatpush.bf16.msra.mxu0 %v2265
        %2508 = vmatpush.bf16.msra.mxu0 %v2261
        %2509 = vmatpush.bf16.msra.mxu0 %v2257
        %2510 = vmatpush.bf16.msra.mxu0 %v2253
        %2511 = vmatmul.bf16.gmra.mxu0 %v1762
        %v2512 = vpop.f32.mrf.mxu0
        %v2513 = vadd.f32 %v2500, %v2512
        %v2514 = vpop.f32.mrf.mxu0
        %2515 = vdwg.mxu0
        %2516 = vmatpush.bf16.msra.mxu0 %v2186
        %2517 = vmatpush.bf16.msra.mxu0 %v2182
        %2518 = vmatpush.bf16.msra.mxu0 %v2178
        %2519 = vmatpush.bf16.msra.mxu0 %v2174
        %2520 = vmatpush.bf16.msra.mxu0 %v2170
        %2521 = vmatpush.bf16.msra.mxu0 %v2166
        %2522 = vmatpush.bf16.msra.mxu0 %v2162
        %2523 = vmatpush.bf16.msra.mxu0 %v2158
        %2524 = vmatmul.bf16.gmra.mxu0 %v1759
        %v2525 = vpop.f32.mrf.mxu0
        %v2526 = vadd.f32 %v1766, %v2525
        %v2527 = vpop.f32.mrf.mxu0
        %2528 = vdwg.mxu0
        %2529 = vmatpush.bf16.msra.mxu0 %v2218
        %2530 = vmatpush.bf16.msra.mxu0 %v2214
        %2531 = vmatpush.bf16.msra.mxu0 %v2210
        %2532 = vmatpush.bf16.msra.mxu0 %v2206
        %2533 = vmatpush.bf16.msra.mxu0 %v2202
        %2534 = vmatpush.bf16.msra.mxu0 %v2198
        %2535 = vmatpush.bf16.msra.mxu0 %v2194
        %2536 = vmatpush.bf16.msra.mxu0 %v2190
        %2537 = vmatmul.bf16.gmra.mxu0 %v1760
        %v2538 = vpop.f32.mrf.mxu0
        %v2539 = vadd.f32 %v2526, %v2538
        %v2540 = vpop.f32.mrf.mxu0
        %2541 = vdwg.mxu0
        %2542 = vmatpush.bf16.msra.mxu0 %v2250
        %2543 = vmatpush.bf16.msra.mxu0 %v2246
        %2544 = vmatpush.bf16.msra.mxu0 %v2242
        %2545 = vmatpush.bf16.msra.mxu0 %v2238
        %2546 = vmatpush.bf16.msra.mxu0 %v2234
        %2547 = vmatpush.bf16.msra.mxu0 %v2230
        %2548 = vmatpush.bf16.msra.mxu0 %v2226
        %2549 = vmatpush.bf16.msra.mxu0 %v2222
        %2550 = vmatmul.bf16.gmra.mxu0 %v1761
        %v2551 = vpop.f32.mrf.mxu0
        %v2552 = vadd.f32 %v2539, %v2551
        %v2553 = vpop.f32.mrf.mxu0
        %2554 = vdwg.mxu0
        %2555 = vmatpush.bf16.msra.mxu0 %v2282
        %2556 = vmatpush.bf16.msra.mxu0 %v2278
        %2557 = vmatpush.bf16.msra.mxu0 %v2274
        %2558 = vmatpush.bf16.msra.mxu0 %v2270
        %2559 = vmatpush.bf16.msra.mxu0 %v2266
        %2560 = vmatpush.bf16.msra.mxu0 %v2262
        %2561 = vmatpush.bf16.msra.mxu0 %v2258
        %2562 = vmatpush.bf16.msra.mxu0 %v2254
        %2563 = vmatmul.bf16.gmra.mxu0 %v1762
        %v2564 = vpop.f32.mrf.mxu0
        %v2565 = vadd.f32 %v2552, %v2564
        %v2566 = vpop.f32.mrf.mxu0
        %2567 = vdwg.mxu0
        %2568 = vmatpush.bf16.msra.mxu0 %v2187
        %2569 = vmatpush.bf16.msra.mxu0 %v2183
        %2570 = vmatpush.bf16.msra.mxu0 %v2179
        %2571 = vmatpush.bf16.msra.mxu0 %v2175
        %2572 = vmatpush.bf16.msra.mxu0 %v2171
        %2573 = vmatpush.bf16.msra.mxu0 %v2167
        %2574 = vmatpush.bf16.msra.mxu0 %v2163
        %2575 = vmatpush.bf16.msra.mxu0 %v2159
        %2576 = vmatmul.bf16.gmra.mxu0 %v1759
        %v2577 = vpop.f32.mrf.mxu0
        %v2578 = vadd.f32 %v1767, %v2577
        %v2579 = vpop.f32.mrf.mxu0
        %2580 = vdwg.mxu0
        %2581 = vmatpush.bf16.msra.mxu0 %v2219
        %2582 = vmatpush.bf16.msra.mxu0 %v2215
        %2583 = vmatpush.bf16.msra.mxu0 %v2211
        %2584 = vmatpush.bf16.msra.mxu0 %v2207
        %2585 = vmatpush.bf16.msra.mxu0 %v2203
        %2586 = vmatpush.bf16.msra.mxu0 %v2199
        %2587 = vmatpush.bf16.msra.mxu0 %v2195
        %2588 = vmatpush.bf16.msra.mxu0 %v2191
        %2589 = vmatmul.bf16.gmra.mxu0 %v1760
        %v2590 = vpop.f32.mrf.mxu0
        %v2591 = vadd.f32 %v2578, %v2590
        %v2592 = vpop.f32.mrf.mxu0
        %2593 = vdwg.mxu0
        %2594 = vmatpush.bf16.msra.mxu0 %v2251
        %2595 = vmatpush.bf16.msra.mxu0 %v2247
        %2596 = vmatpush.bf16.msra.mxu0 %v2243
        %2597 = vmatpush.bf16.msra.mxu0 %v2239
        %2598 = vmatpush.bf16.msra.mxu0 %v2235
        %2599 = vmatpush.bf16.msra.mxu0 %v2231
        %2600 = vmatpush.bf16.msra.mxu0 %v2227
        %2601 = vmatpush.bf16.msra.mxu0 %v2223
        %2602 = vmatmul.bf16.gmra.mxu0 %v1761
        %v2603 = vpop.f32.mrf.mxu0
        %v2604 = vadd.f32 %v2591, %v2603
        %v2605 = vpop.f32.mrf.mxu0
        %2606 = vdwg.mxu0
        %2607 = vmatpush.bf16.msra.mxu0 %v2283
        %2608 = vmatpush.bf16.msra.mxu0 %v2279
        %2609 = vmatpush.bf16.msra.mxu0 %v2275
        %2610 = vmatpush.bf16.msra.mxu0 %v2271
        %2611 = vmatpush.bf16.msra.mxu0 %v2267
        %2612 = vmatpush.bf16.msra.mxu0 %v2263
        %2613 = vmatpush.bf16.msra.mxu0 %v2259
        %2614 = vmatpush.bf16.msra.mxu0 %v2255
        %2615 = vmatmul.bf16.gmra.mxu0 %v1762
        %v2616 = vpop.f32.mrf.mxu0
        %v2617 = vadd.f32 %v2604, %v2616
        %v2618 = vpop.f32.mrf.mxu0
        %2619 = vdwg.mxu0
        %vm2620 = vcmp.gt.f32.partialorder %v2461, 0.0
        %vm2621 = vcmp.gt.f32.partialorder %v2513, 0.0
        %vm2622 = vcmp.gt.f32.partialorder %v2565, 0.0
        %vm2623 = vcmp.gt.f32.partialorder %v2617, 0.0
        %v2624 = vmul.f32 %v2461, 0.5
        %v2625 = vmul.f32 %v2513, 0.5
        %v2626 = vmul.f32 %v2565, 0.5
        %v2627 = vmul.f32 %v2617, 0.5
        %v2628 = vsel %vm2620, %v2461, %v2624
        %v2629 = vsel %vm2621, %v2513, %v2625
        %v2630 = vsel %vm2622, %v2565, %v2626
        %v2631 = vsel %vm2623, %v2617, %v2627
        %v2632 = vpack.c.bf16 %v2628, %v2628
        %v2633 = vpack.c.bf16 %v2629, %v2629
        %v2634 = vpack.c.bf16 %v2630, %v2630
        %v2635 = vpack.c.bf16 %v2631, %v2631
        %v2637 = vperm.slane %v1289, 0
        %v2638 = vperm.slane %v1289, 1
        %v2639 = vperm.slane %v1289, 2
        %v2640 = vperm.slane %v1289, 3
        %v2773 = vunpack.c.l.b16 %v1161
        %v2774 = vunpack.c.h.b16 %v1161
        %v2775 = vunpack.c.l.b16 %v1162
        %v2776 = vunpack.c.h.b16 %v1162
        %v2777 = vunpack.c.l.b16 %v1163
        %v2778 = vunpack.c.h.b16 %v1163
        %v2779 = vunpack.c.l.b16 %v1164
        %v2780 = vunpack.c.h.b16 %v1164
        %v2781 = vunpack.c.l.b16 %v1165
        %v2782 = vunpack.c.h.b16 %v1165
        %v2783 = vunpack.c.l.b16 %v1166
        %v2784 = vunpack.c.h.b16 %v1166
        %v2785 = vunpack.c.l.b16 %v1167
        %v2786 = vunpack.c.h.b16 %v1167
        %v2787 = vunpack.c.l.b16 %v1168
        %v2788 = vunpack.c.h.b16 %v1168
        %v2789 = vunpack.c.l.b16 %v1169
        %v2790 = vunpack.c.h.b16 %v1169
        %v2791 = vunpack.c.l.b16 %v1170
        %v2792 = vunpack.c.h.b16 %v1170
        %v2793 = vunpack.c.l.b16 %v1171
        %v2794 = vunpack.c.h.b16 %v1171
        %v2795 = vunpack.c.l.b16 %v1172
        %v2796 = vunpack.c.h.b16 %v1172
        %v2797 = vunpack.c.l.b16 %v1173
        %v2798 = vunpack.c.h.b16 %v1173
        %v2799 = vunpack.c.l.b16 %v1174
        %v2800 = vunpack.c.h.b16 %v1174
        %v2801 = vunpack.c.l.b16 %v1175
        %v2802 = vunpack.c.h.b16 %v1175
        %v2803 = vunpack.c.l.b16 %v1176
        %v2804 = vunpack.c.h.b16 %v1176
        %v2805 = vunpack.c.l.b16 %v1177
        %v2806 = vunpack.c.h.b16 %v1177
        %v2807 = vunpack.c.l.b16 %v1178
        %v2808 = vunpack.c.h.b16 %v1178
        %v2809 = vunpack.c.l.b16 %v1179
        %v2810 = vunpack.c.h.b16 %v1179
        %v2811 = vunpack.c.l.b16 %v1180
        %v2812 = vunpack.c.h.b16 %v1180
        %v2813 = vunpack.c.l.b16 %v1181
        %v2814 = vunpack.c.h.b16 %v1181
        %v2815 = vunpack.c.l.b16 %v1182
        %v2816 = vunpack.c.h.b16 %v1182
        %v2817 = vunpack.c.l.b16 %v1183
        %v2818 = vunpack.c.h.b16 %v1183
        %v2819 = vunpack.c.l.b16 %v1184
        %v2820 = vunpack.c.h.b16 %v1184
        %v2821 = vunpack.c.l.b16 %v1185
        %v2822 = vunpack.c.h.b16 %v1185
        %v2823 = vunpack.c.l.b16 %v1186
        %v2824 = vunpack.c.h.b16 %v1186
        %v2825 = vunpack.c.l.b16 %v1187
        %v2826 = vunpack.c.h.b16 %v1187
        %v2827 = vunpack.c.l.b16 %v1188
        %v2828 = vunpack.c.h.b16 %v1188
        %v2829 = vunpack.c.l.b16 %v1189
        %v2830 = vunpack.c.h.b16 %v1189
        %v2831 = vunpack.c.l.b16 %v1190
        %v2832 = vunpack.c.h.b16 %v1190
        %v2833 = vunpack.c.l.b16 %v1191
        %v2834 = vunpack.c.h.b16 %v1191
        %v2835 = vunpack.c.l.b16 %v1192
        %v2836 = vunpack.c.h.b16 %v1192
        %v2837 = vunpack.c.l.b16 %v1193
        %v2838 = vunpack.c.h.b16 %v1193
        %v2839 = vunpack.c.l.b16 %v1194
        %v2840 = vunpack.c.h.b16 %v1194
        %v2841 = vunpack.c.l.b16 %v1195
        %v2842 = vunpack.c.h.b16 %v1195
        %v2843 = vunpack.c.l.b16 %v1196
        %v2844 = vunpack.c.h.b16 %v1196
        %v2845 = vunpack.c.l.b16 %v1197
        %v2846 = vunpack.c.h.b16 %v1197
        %v2847 = vunpack.c.l.b16 %v1198
        %v2848 = vunpack.c.h.b16 %v1198
        %v2849 = vunpack.c.l.b16 %v1199
        %v2850 = vunpack.c.h.b16 %v1199
        %v2851 = vunpack.c.l.b16 %v1200
        %v2852 = vunpack.c.h.b16 %v1200
        %v2853 = vunpack.c.l.b16 %v1201
        %v2854 = vunpack.c.h.b16 %v1201
        %v2855 = vunpack.c.l.b16 %v1202
        %v2856 = vunpack.c.h.b16 %v1202
        %v2857 = vunpack.c.l.b16 %v1203
        %v2858 = vunpack.c.h.b16 %v1203
        %v2859 = vunpack.c.l.b16 %v1204
        %v2860 = vunpack.c.h.b16 %v1204
        %v2861 = vunpack.c.l.b16 %v1205
        %v2862 = vunpack.c.h.b16 %v1205
        %v2863 = vunpack.c.l.b16 %v1206
        %v2864 = vunpack.c.h.b16 %v1206
        %v2865 = vunpack.c.l.b16 %v1207
        %v2866 = vunpack.c.h.b16 %v1207
        %v2867 = vunpack.c.l.b16 %v1208
        %v2868 = vunpack.c.h.b16 %v1208
        %v2869 = vunpack.c.l.b16 %v1209
        %v2870 = vunpack.c.h.b16 %v1209
        %v2871 = vunpack.c.l.b16 %v1210
        %v2872 = vunpack.c.h.b16 %v1210
        %v2873 = vunpack.c.l.b16 %v1211
        %v2874 = vunpack.c.h.b16 %v1211
        %v2875 = vunpack.c.l.b16 %v1212
        %v2876 = vunpack.c.h.b16 %v1212
        %v2877 = vunpack.c.l.b16 %v1213
        %v2878 = vunpack.c.h.b16 %v1213
        %v2879 = vunpack.c.l.b16 %v1214
        %v2880 = vunpack.c.h.b16 %v1214
        %v2881 = vunpack.c.l.b16 %v1215
        %v2882 = vunpack.c.h.b16 %v1215
        %v2883 = vunpack.c.l.b16 %v1216
        %v2884 = vunpack.c.h.b16 %v1216
        %v2885 = vunpack.c.l.b16 %v1217
        %v2886 = vunpack.c.h.b16 %v1217
        %v2887 = vunpack.c.l.b16 %v1218
        %v2888 = vunpack.c.h.b16 %v1218
        %v2889 = vunpack.c.l.b16 %v1219
        %v2890 = vunpack.c.h.b16 %v1219
        %v2891 = vunpack.c.l.b16 %v1220
        %v2892 = vunpack.c.h.b16 %v1220
        %v2893 = vunpack.c.l.b16 %v1221
        %v2894 = vunpack.c.h.b16 %v1221
        %v2895 = vunpack.c.l.b16 %v1222
        %v2896 = vunpack.c.h.b16 %v1222
        %v2897 = vunpack.c.l.b16 %v1223
        %v2898 = vunpack.c.h.b16 %v1223
        %v2899 = vunpack.c.l.b16 %v1224
        %v2900 = vunpack.c.h.b16 %v1224
        %v2901 = vunpack.c.l.b16 %v1225
        %v2902 = vunpack.c.h.b16 %v1225
        %v2903 = vunpack.c.l.b16 %v1226
        %v2904 = vunpack.c.h.b16 %v1226
        %v2905 = vunpack.c.l.b16 %v1227
        %v2906 = vunpack.c.h.b16 %v1227
        %v2907 = vunpack.c.l.b16 %v1228
        %v2908 = vunpack.c.h.b16 %v1228
        %v2909 = vunpack.c.l.b16 %v1229
        %v2910 = vunpack.c.h.b16 %v1229
        %v2911 = vunpack.c.l.b16 %v1230
        %v2912 = vunpack.c.h.b16 %v1230
        %v2913 = vunpack.c.l.b16 %v1231
        %v2914 = vunpack.c.h.b16 %v1231
        %v2915 = vunpack.c.l.b16 %v1232
        %v2916 = vunpack.c.h.b16 %v1232
        %v2917 = vunpack.c.l.b16 %v1233
        %v2918 = vunpack.c.h.b16 %v1233
        %v2919 = vunpack.c.l.b16 %v1234
        %v2920 = vunpack.c.h.b16 %v1234
        %v2921 = vunpack.c.l.b16 %v1235
        %v2922 = vunpack.c.h.b16 %v1235
        %v2923 = vunpack.c.l.b16 %v1236
        %v2924 = vunpack.c.h.b16 %v1236
        %v2925 = vunpack.c.l.b16 %v1237
        %v2926 = vunpack.c.h.b16 %v1237
        %v2927 = vunpack.c.l.b16 %v1238
        %v2928 = vunpack.c.h.b16 %v1238
        %v2929 = vunpack.c.l.b16 %v1239
        %v2930 = vunpack.c.h.b16 %v1239
        %v2931 = vunpack.c.l.b16 %v1240
        %v2932 = vunpack.c.h.b16 %v1240
        %v2933 = vunpack.c.l.b16 %v1241
        %v2934 = vunpack.c.h.b16 %v1241
        %v2935 = vunpack.c.l.b16 %v1242
        %v2936 = vunpack.c.h.b16 %v1242
        %v2937 = vunpack.c.l.b16 %v1243
        %v2938 = vunpack.c.h.b16 %v1243
        %v2939 = vunpack.c.l.b16 %v1244
        %v2940 = vunpack.c.h.b16 %v1244
        %v2941 = vunpack.c.l.b16 %v1245
        %v2942 = vunpack.c.h.b16 %v1245
        %v2943 = vunpack.c.l.b16 %v1246
        %v2944 = vunpack.c.h.b16 %v1246
        %v2945 = vunpack.c.l.b16 %v1247
        %v2946 = vunpack.c.h.b16 %v1247
        %v2947 = vunpack.c.l.b16 %v1248
        %v2948 = vunpack.c.h.b16 %v1248
        %v2949 = vunpack.c.l.b16 %v1249
        %v2950 = vunpack.c.h.b16 %v1249
        %v2951 = vunpack.c.l.b16 %v1250
        %v2952 = vunpack.c.h.b16 %v1250
        %v2953 = vunpack.c.l.b16 %v1251
        %v2954 = vunpack.c.h.b16 %v1251
        %v2955 = vunpack.c.l.b16 %v1252
        %v2956 = vunpack.c.h.b16 %v1252
        %v2957 = vunpack.c.l.b16 %v1253
        %v2958 = vunpack.c.h.b16 %v1253
        %v2959 = vunpack.c.l.b16 %v1254
        %v2960 = vunpack.c.h.b16 %v1254
        %v2961 = vunpack.c.l.b16 %v1255
        %v2962 = vunpack.c.h.b16 %v1255
        %v2963 = vunpack.c.l.b16 %v1256
        %v2964 = vunpack.c.h.b16 %v1256
        %v2965 = vunpack.c.l.b16 %v1257
        %v2966 = vunpack.c.h.b16 %v1257
        %v2967 = vunpack.c.l.b16 %v1258
        %v2968 = vunpack.c.h.b16 %v1258
        %v2969 = vunpack.c.l.b16 %v1259
        %v2970 = vunpack.c.h.b16 %v1259
        %v2971 = vunpack.c.l.b16 %v1260
        %v2972 = vunpack.c.h.b16 %v1260
        %v2973 = vunpack.c.l.b16 %v1261
        %v2974 = vunpack.c.h.b16 %v1261
        %v2975 = vunpack.c.l.b16 %v1262
        %v2976 = vunpack.c.h.b16 %v1262
        %v2977 = vunpack.c.l.b16 %v1263
        %v2978 = vunpack.c.h.b16 %v1263
        %v2979 = vunpack.c.l.b16 %v1264
        %v2980 = vunpack.c.h.b16 %v1264
        %v2981 = vunpack.c.l.b16 %v1265
        %v2982 = vunpack.c.h.b16 %v1265
        %v2983 = vunpack.c.l.b16 %v1266
        %v2984 = vunpack.c.h.b16 %v1266
        %v2985 = vunpack.c.l.b16 %v1267
        %v2986 = vunpack.c.h.b16 %v1267
        %v2987 = vunpack.c.l.b16 %v1268
        %v2988 = vunpack.c.h.b16 %v1268
        %v2989 = vunpack.c.l.b16 %v1269
        %v2990 = vunpack.c.h.b16 %v1269
        %v2991 = vunpack.c.l.b16 %v1270
        %v2992 = vunpack.c.h.b16 %v1270
        %v2993 = vunpack.c.l.b16 %v1271
        %v2994 = vunpack.c.h.b16 %v1271
        %v2995 = vunpack.c.l.b16 %v1272
        %v2996 = vunpack.c.h.b16 %v1272
        %v2997 = vunpack.c.l.b16 %v1273
        %v2998 = vunpack.c.h.b16 %v1273
        %v2999 = vunpack.c.l.b16 %v1274
        %v3000 = vunpack.c.h.b16 %v1274
        %v3001 = vunpack.c.l.b16 %v1275
        %v3002 = vunpack.c.h.b16 %v1275
        %v3003 = vunpack.c.l.b16 %v1276
        %v3004 = vunpack.c.h.b16 %v1276
        %v3005 = vunpack.c.l.b16 %v1277
        %v3006 = vunpack.c.h.b16 %v1277
        %v3007 = vunpack.c.l.b16 %v1278
        %v3008 = vunpack.c.h.b16 %v1278
        %v3009 = vunpack.c.l.b16 %v1279
        %v3010 = vunpack.c.h.b16 %v1279
        %v3011 = vunpack.c.l.b16 %v1280
        %v3012 = vunpack.c.h.b16 %v1280
        %v3013 = vunpack.c.l.b16 %v1281
        %v3014 = vunpack.c.h.b16 %v1281
        %v3015 = vunpack.c.l.b16 %v1282
        %v3016 = vunpack.c.h.b16 %v1282
        %v3017 = vunpack.c.l.b16 %v1283
        %v3018 = vunpack.c.h.b16 %v1283
        %v3019 = vunpack.c.l.b16 %v1284
        %v3020 = vunpack.c.h.b16 %v1284
        %v3021 = vunpack.c.l.b16 %v1285
        %v3022 = vunpack.c.h.b16 %v1285
        %v3023 = vunpack.c.l.b16 %v1286
        %v3024 = vunpack.c.h.b16 %v1286
        %v3025 = vunpack.c.l.b16 %v1287
        %v3026 = vunpack.c.h.b16 %v1287
        %v3027 = vunpack.c.l.b16 %v1288
        %v3028 = vunpack.c.h.b16 %v1288
        %v3029 = vpack.c.b16 %v2777, %v2773
        %v3030 = vpack.c.b16 %v2778, %v2774
        %v3031 = vpack.c.b16 %v2779, %v2775
        %v3032 = vpack.c.b16 %v2780, %v2776
        %v3033 = vpack.c.b16 %v2785, %v2781
        %v3034 = vpack.c.b16 %v2786, %v2782
        %v3035 = vpack.c.b16 %v2787, %v2783
        %v3036 = vpack.c.b16 %v2788, %v2784
        %v3037 = vpack.c.b16 %v2793, %v2789
        %v3038 = vpack.c.b16 %v2794, %v2790
        %v3039 = vpack.c.b16 %v2795, %v2791
        %v3040 = vpack.c.b16 %v2796, %v2792
        %v3041 = vpack.c.b16 %v2801, %v2797
        %v3042 = vpack.c.b16 %v2802, %v2798
        %v3043 = vpack.c.b16 %v2803, %v2799
        %v3044 = vpack.c.b16 %v2804, %v2800
        %v3045 = vpack.c.b16 %v2809, %v2805
        %v3046 = vpack.c.b16 %v2810, %v2806
        %v3047 = vpack.c.b16 %v2811, %v2807
        %v3048 = vpack.c.b16 %v2812, %v2808
        %v3049 = vpack.c.b16 %v2817, %v2813
        %v3050 = vpack.c.b16 %v2818, %v2814
        %v3051 = vpack.c.b16 %v2819, %v2815
        %v3052 = vpack.c.b16 %v2820, %v2816
        %v3053 = vpack.c.b16 %v2825, %v2821
        %v3054 = vpack.c.b16 %v2826, %v2822
        %v3055 = vpack.c.b16 %v2827, %v2823
        %v3056 = vpack.c.b16 %v2828, %v2824
        %v3057 = vpack.c.b16 %v2833, %v2829
        %v3058 = vpack.c.b16 %v2834, %v2830
        %v3059 = vpack.c.b16 %v2835, %v2831
        %v3060 = vpack.c.b16 %v2836, %v2832
        %v3061 = vpack.c.b16 %v2841, %v2837
        %v3062 = vpack.c.b16 %v2842, %v2838
        %v3063 = vpack.c.b16 %v2843, %v2839
        %v3064 = vpack.c.b16 %v2844, %v2840
        %v3065 = vpack.c.b16 %v2849, %v2845
        %v3066 = vpack.c.b16 %v2850, %v2846
        %v3067 = vpack.c.b16 %v2851, %v2847
        %v3068 = vpack.c.b16 %v2852, %v2848
        %v3069 = vpack.c.b16 %v2857, %v2853
        %v3070 = vpack.c.b16 %v2858, %v2854
        %v3071 = vpack.c.b16 %v2859, %v2855
        %v3072 = vpack.c.b16 %v2860, %v2856
        %v3073 = vpack.c.b16 %v2865, %v2861
        %v3074 = vpack.c.b16 %v2866, %v2862
        %v3075 = vpack.c.b16 %v2867, %v2863
        %v3076 = vpack.c.b16 %v2868, %v2864
        %v3077 = vpack.c.b16 %v2873, %v2869
        %v3078 = vpack.c.b16 %v2874, %v2870
        %v3079 = vpack.c.b16 %v2875, %v2871
        %v3080 = vpack.c.b16 %v2876, %v2872
        %v3081 = vpack.c.b16 %v2881, %v2877
        %v3082 = vpack.c.b16 %v2882, %v2878
        %v3083 = vpack.c.b16 %v2883, %v2879
        %v3084 = vpack.c.b16 %v2884, %v2880
        %v3085 = vpack.c.b16 %v2889, %v2885
        %v3086 = vpack.c.b16 %v2890, %v2886
        %v3087 = vpack.c.b16 %v2891, %v2887
        %v3088 = vpack.c.b16 %v2892, %v2888
        %v3089 = vpack.c.b16 %v2897, %v2893
        %v3090 = vpack.c.b16 %v2898, %v2894
        %v3091 = vpack.c.b16 %v2899, %v2895
        %v3092 = vpack.c.b16 %v2900, %v2896
        %v3093 = vpack.c.b16 %v2905, %v2901
        %v3094 = vpack.c.b16 %v2906, %v2902
        %v3095 = vpack.c.b16 %v2907, %v2903
        %v3096 = vpack.c.b16 %v2908, %v2904
        %v3097 = vpack.c.b16 %v2913, %v2909
        %v3098 = vpack.c.b16 %v2914, %v2910
        %v3099 = vpack.c.b16 %v2915, %v2911
        %v3100 = vpack.c.b16 %v2916, %v2912
        %v3101 = vpack.c.b16 %v2921, %v2917
        %v3102 = vpack.c.b16 %v2922, %v2918
        %v3103 = vpack.c.b16 %v2923, %v2919
        %v3104 = vpack.c.b16 %v2924, %v2920
        %v3105 = vpack.c.b16 %v2929, %v2925
        %v3106 = vpack.c.b16 %v2930, %v2926
        %v3107 = vpack.c.b16 %v2931, %v2927
        %v3108 = vpack.c.b16 %v2932, %v2928
        %v3109 = vpack.c.b16 %v2937, %v2933
        %v3110 = vpack.c.b16 %v2938, %v2934
        %v3111 = vpack.c.b16 %v2939, %v2935
        %v3112 = vpack.c.b16 %v2940, %v2936
        %v3113 = vpack.c.b16 %v2945, %v2941
        %v3114 = vpack.c.b16 %v2946, %v2942
        %v3115 = vpack.c.b16 %v2947, %v2943
        %v3116 = vpack.c.b16 %v2948, %v2944
        %v3117 = vpack.c.b16 %v2953, %v2949
        %v3118 = vpack.c.b16 %v2954, %v2950
        %v3119 = vpack.c.b16 %v2955, %v2951
        %v3120 = vpack.c.b16 %v2956, %v2952
        %v3121 = vpack.c.b16 %v2961, %v2957
        %v3122 = vpack.c.b16 %v2962, %v2958
        %v3123 = vpack.c.b16 %v2963, %v2959
        %v3124 = vpack.c.b16 %v2964, %v2960
        %v3125 = vpack.c.b16 %v2969, %v2965
        %v3126 = vpack.c.b16 %v2970, %v2966
        %v3127 = vpack.c.b16 %v2971, %v2967
        %v3128 = vpack.c.b16 %v2972, %v2968
        %v3129 = vpack.c.b16 %v2977, %v2973
        %v3130 = vpack.c.b16 %v2978, %v2974
        %v3131 = vpack.c.b16 %v2979, %v2975
        %v3132 = vpack.c.b16 %v2980, %v2976
        %v3133 = vpack.c.b16 %v2985, %v2981
        %v3134 = vpack.c.b16 %v2986, %v2982
        %v3135 = vpack.c.b16 %v2987, %v2983
        %v3136 = vpack.c.b16 %v2988, %v2984
        %v3137 = vpack.c.b16 %v2993, %v2989
        %v3138 = vpack.c.b16 %v2994, %v2990
        %v3139 = vpack.c.b16 %v2995, %v2991
        %v3140 = vpack.c.b16 %v2996, %v2992
        %v3141 = vpack.c.b16 %v3001, %v2997
        %v3142 = vpack.c.b16 %v3002, %v2998
        %v3143 = vpack.c.b16 %v3003, %v2999
        %v3144 = vpack.c.b16 %v3004, %v3000
        %v3145 = vpack.c.b16 %v3009, %v3005
        %v3146 = vpack.c.b16 %v3010, %v3006
        %v3147 = vpack.c.b16 %v3011, %v3007
        %v3148 = vpack.c.b16 %v3012, %v3008
        %v3149 = vpack.c.b16 %v3017, %v3013
        %v3150 = vpack.c.b16 %v3018, %v3014
        %v3151 = vpack.c.b16 %v3019, %v3015
        %v3152 = vpack.c.b16 %v3020, %v3016
        %v3153 = vpack.c.b16 %v3025, %v3021
        %v3154 = vpack.c.b16 %v3026, %v3022
        %v3155 = vpack.c.b16 %v3027, %v3023
        %v3156 = vpack.c.b16 %v3028, %v3024
        %3285 = vmatpush.bf16.msra.mxu0 %v3057
        %3286 = vmatpush.bf16.msra.mxu0 %v3053
        %3287 = vmatpush.bf16.msra.mxu0 %v3049
        %3288 = vmatpush.bf16.msra.mxu0 %v3045
        %3289 = vmatpush.bf16.msra.mxu0 %v3041
        %3290 = vmatpush.bf16.msra.mxu0 %v3037
        %3291 = vmatpush.bf16.msra.mxu0 %v3033
        %3292 = vmatpush.bf16.msra.mxu0 %v3029
        %3293 = vmatmul.bf16.gmra.mxu0 %v2632
        %v3294 = vpop.f32.mrf.mxu0
        %v3295 = vadd.f32 %v2637, %v3294
        %v3296 = vpop.f32.mrf.mxu0
        %3297 = vdwg.mxu0
        %3298 = vmatpush.bf16.msra.mxu0 %v3089
        %3299 = vmatpush.bf16.msra.mxu0 %v3085
        %3300 = vmatpush.bf16.msra.mxu0 %v3081
        %3301 = vmatpush.bf16.msra.mxu0 %v3077
        %3302 = vmatpush.bf16.msra.mxu0 %v3073
        %3303 = vmatpush.bf16.msra.mxu0 %v3069
        %3304 = vmatpush.bf16.msra.mxu0 %v3065
        %3305 = vmatpush.bf16.msra.mxu0 %v3061
        %3306 = vmatmul.bf16.gmra.mxu0 %v2633
        %v3307 = vpop.f32.mrf.mxu0
        %v3308 = vadd.f32 %v3295, %v3307
        %v3309 = vpop.f32.mrf.mxu0
        %3310 = vdwg.mxu0
        %3311 = vmatpush.bf16.msra.mxu0 %v3121
        %3312 = vmatpush.bf16.msra.mxu0 %v3117
        %3313 = vmatpush.bf16.msra.mxu0 %v3113
        %3314 = vmatpush.bf16.msra.mxu0 %v3109
        %3315 = vmatpush.bf16.msra.mxu0 %v3105
        %3316 = vmatpush.bf16.msra.mxu0 %v3101
        %3317 = vmatpush.bf16.msra.mxu0 %v3097
        %3318 = vmatpush.bf16.msra.mxu0 %v3093
        %3319 = vmatmul.bf16.gmra.mxu0 %v2634
        %v3320 = vpop.f32.mrf.mxu0
        %v3321 = vadd.f32 %v3308, %v3320
        %v3322 = vpop.f32.mrf.mxu0
        %3323 = vdwg.mxu0
        %3324 = vmatpush.bf16.msra.mxu0 %v3153
        %3325 = vmatpush.bf16.msra.mxu0 %v3149
        %3326 = vmatpush.bf16.msra.mxu0 %v3145
        %3327 = vmatpush.bf16.msra.mxu0 %v3141
        %3328 = vmatpush.bf16.msra.mxu0 %v3137
        %3329 = vmatpush.bf16.msra.mxu0 %v3133
        %3330 = vmatpush.bf16.msra.mxu0 %v3129
        %3331 = vmatpush.bf16.msra.mxu0 %v3125
        %3332 = vmatmul.bf16.gmra.mxu0 %v2635
        %v3333 = vpop.f32.mrf.mxu0
        %v3334 = vadd.f32 %v3321, %v3333
        %v3335 = vpop.f32.mrf.mxu0
        %3336 = vdwg.mxu0
        %3337 = vmatpush.bf16.msra.mxu0 %v3058
        %3338 = vmatpush.bf16.msra.mxu0 %v3054
        %3339 = vmatpush.bf16.msra.mxu0 %v3050
        %3340 = vmatpush.bf16.msra.mxu0 %v3046
        %3341 = vmatpush.bf16.msra.mxu0 %v3042
        %3342 = vmatpush.bf16.msra.mxu0 %v3038
        %3343 = vmatpush.bf16.msra.mxu0 %v3034
        %3344 = vmatpush.bf16.msra.mxu0 %v3030
        %3345 = vmatmul.bf16.gmra.mxu0 %v2632
        %v3346 = vpop.f32.mrf.mxu0
        %v3347 = vadd.f32 %v2638, %v3346
        %v3348 = vpop.f32.mrf.mxu0
        %3349 = vdwg.mxu0
        %3350 = vmatpush.bf16.msra.mxu0 %v3090
        %3351 = vmatpush.bf16.msra.mxu0 %v3086
        %3352 = vmatpush.bf16.msra.mxu0 %v3082
        %3353 = vmatpush.bf16.msra.mxu0 %v3078
        %3354 = vmatpush.bf16.msra.mxu0 %v3074
        %3355 = vmatpush.bf16.msra.mxu0 %v3070
        %3356 = vmatpush.bf16.msra.mxu0 %v3066
        %3357 = vmatpush.bf16.msra.mxu0 %v3062
        %3358 = vmatmul.bf16.gmra.mxu0 %v2633
        %v3359 = vpop.f32.mrf.mxu0
        %v3360 = vadd.f32 %v3347, %v3359
        %v3361 = vpop.f32.mrf.mxu0
        %3362 = vdwg.mxu0
        %3363 = vmatpush.bf16.msra.mxu0 %v3122
        %3364 = vmatpush.bf16.msra.mxu0 %v3118
        %3365 = vmatpush.bf16.msra.mxu0 %v3114
        %3366 = vmatpush.bf16.msra.mxu0 %v3110
        %3367 = vmatpush.bf16.msra.mxu0 %v3106
        %3368 = vmatpush.bf16.msra.mxu0 %v3102
        %3369 = vmatpush.bf16.msra.mxu0 %v3098
        %3370 = vmatpush.bf16.msra.mxu0 %v3094
        %3371 = vmatmul.bf16.gmra.mxu0 %v2634
        %v3372 = vpop.f32.mrf.mxu0
        %v3373 = vadd.f32 %v3360, %v3372
        %v3374 = vpop.f32.mrf.mxu0
        %3375 = vdwg.mxu0
        %3376 = vmatpush.bf16.msra.mxu0 %v3154
        %3377 = vmatpush.bf16.msra.mxu0 %v3150
        %3378 = vmatpush.bf16.msra.mxu0 %v3146
        %3379 = vmatpush.bf16.msra.mxu0 %v3142
        %3380 = vmatpush.bf16.msra.mxu0 %v3138
        %3381 = vmatpush.bf16.msra.mxu0 %v3134
        %3382 = vmatpush.bf16.msra.mxu0 %v3130
        %3383 = vmatpush.bf16.msra.mxu0 %v3126
        %3384 = vmatmul.bf16.gmra.mxu0 %v2635
        %v3385 = vpop.f32.mrf.mxu0
        %v3386 = vadd.f32 %v3373, %v3385
        %v3387 = vpop.f32.mrf.mxu0
        %3388 = vdwg.mxu0
        %3389 = vmatpush.bf16.msra.mxu0 %v3059
        %3390 = vmatpush.bf16.msra.mxu0 %v3055
        %3391 = vmatpush.bf16.msra.mxu0 %v3051
        %3392 = vmatpush.bf16.msra.mxu0 %v3047
        %3393 = vmatpush.bf16.msra.mxu0 %v3043
        %3394 = vmatpush.bf16.msra.mxu0 %v3039
        %3395 = vmatpush.bf16.msra.mxu0 %v3035
        %3396 = vmatpush.bf16.msra.mxu0 %v3031
        %3397 = vmatmul.bf16.gmra.mxu0 %v2632
        %v3398 = vpop.f32.mrf.mxu0
        %v3399 = vadd.f32 %v2639, %v3398
        %v3400 = vpop.f32.mrf.mxu0
        %3401 = vdwg.mxu0
        %3402 = vmatpush.bf16.msra.mxu0 %v3091
        %3403 = vmatpush.bf16.msra.mxu0 %v3087
        %3404 = vmatpush.bf16.msra.mxu0 %v3083
        %3405 = vmatpush.bf16.msra.mxu0 %v3079
        %3406 = vmatpush.bf16.msra.mxu0 %v3075
        %3407 = vmatpush.bf16.msra.mxu0 %v3071
        %3408 = vmatpush.bf16.msra.mxu0 %v3067
        %3409 = vmatpush.bf16.msra.mxu0 %v3063
        %3410 = vmatmul.bf16.gmra.mxu0 %v2633
        %v3411 = vpop.f32.mrf.mxu0
        %v3412 = vadd.f32 %v3399, %v3411
        %v3413 = vpop.f32.mrf.mxu0
        %3414 = vdwg.mxu0
        %3415 = vmatpush.bf16.msra.mxu0 %v3123
        %3416 = vmatpush.bf16.msra.mxu0 %v3119
        %3417 = vmatpush.bf16.msra.mxu0 %v3115
        %3418 = vmatpush.bf16.msra.mxu0 %v3111
        %3419 = vmatpush.bf16.msra.mxu0 %v3107
        %3420 = vmatpush.bf16.msra.mxu0 %v3103
        %3421 = vmatpush.bf16.msra.mxu0 %v3099
        %3422 = vmatpush.bf16.msra.mxu0 %v3095
        %3423 = vmatmul.bf16.gmra.mxu0 %v2634
        %v3424 = vpop.f32.mrf.mxu0
        %v3425 = vadd.f32 %v3412, %v3424
        %v3426 = vpop.f32.mrf.mxu0
        %3427 = vdwg.mxu0
        %3428 = vmatpush.bf16.msra.mxu0 %v3155
        %3429 = vmatpush.bf16.msra.mxu0 %v3151
        %3430 = vmatpush.bf16.msra.mxu0 %v3147
        %3431 = vmatpush.bf16.msra.mxu0 %v3143
        %3432 = vmatpush.bf16.msra.mxu0 %v3139
        %3433 = vmatpush.bf16.msra.mxu0 %v3135
        %3434 = vmatpush.bf16.msra.mxu0 %v3131
        %3435 = vmatpush.bf16.msra.mxu0 %v3127
        %3436 = vmatmul.bf16.gmra.mxu0 %v2635
        %v3437 = vpop.f32.mrf.mxu0
        %v3438 = vadd.f32 %v3425, %v3437
        %v3439 = vpop.f32.mrf.mxu0
        %3440 = vdwg.mxu0
        %3441 = vmatpush.bf16.msra.mxu0 %v3060
        %3442 = vmatpush.bf16.msra.mxu0 %v3056
        %3443 = vmatpush.bf16.msra.mxu0 %v3052
        %3444 = vmatpush.bf16.msra.mxu0 %v3048
        %3445 = vmatpush.bf16.msra.mxu0 %v3044
        %3446 = vmatpush.bf16.msra.mxu0 %v3040
        %3447 = vmatpush.bf16.msra.mxu0 %v3036
        %3448 = vmatpush.bf16.msra.mxu0 %v3032
        %3449 = vmatmul.bf16.gmra.mxu0 %v2632
        %v3450 = vpop.f32.mrf.mxu0
        %v3451 = vadd.f32 %v2640, %v3450
        %v3452 = vpop.f32.mrf.mxu0
        %3453 = vdwg.mxu0
        %3454 = vmatpush.bf16.msra.mxu0 %v3092
        %3455 = vmatpush.bf16.msra.mxu0 %v3088
        %3456 = vmatpush.bf16.msra.mxu0 %v3084
        %3457 = vmatpush.bf16.msra.mxu0 %v3080
        %3458 = vmatpush.bf16.msra.mxu0 %v3076
        %3459 = vmatpush.bf16.msra.mxu0 %v3072
        %3460 = vmatpush.bf16.msra.mxu0 %v3068
        %3461 = vmatpush.bf16.msra.mxu0 %v3064
        %3462 = vmatmul.bf16.gmra.mxu0 %v2633
        %v3463 = vpop.f32.mrf.mxu0
        %v3464 = vadd.f32 %v3451, %v3463
        %v3465 = vpop.f32.mrf.mxu0
        %3466 = vdwg.mxu0
        %3467 = vmatpush.bf16.msra.mxu0 %v3124
        %3468 = vmatpush.bf16.msra.mxu0 %v3120
        %3469 = vmatpush.bf16.msra.mxu0 %v3116
        %3470 = vmatpush.bf16.msra.mxu0 %v3112
        %3471 = vmatpush.bf16.msra.mxu0 %v3108
        %3472 = vmatpush.bf16.msra.mxu0 %v3104
        %3473 = vmatpush.bf16.msra.mxu0 %v3100
        %3474 = vmatpush.bf16.msra.mxu0 %v3096
        %3475 = vmatmul.bf16.gmra.mxu0 %v2634
        %v3476 = vpop.f32.mrf.mxu0
        %v3477 = vadd.f32 %v3464, %v3476
        %v3478 = vpop.f32.mrf.mxu0
        %3479 = vdwg.mxu0
        %3480 = vmatpush.bf16.msra.mxu0 %v3156
        %3481 = vmatpush.bf16.msra.mxu0 %v3152
        %3482 = vmatpush.bf16.msra.mxu0 %v3148
        %3483 = vmatpush.bf16.msra.mxu0 %v3144
        %3484 = vmatpush.bf16.msra.mxu0 %v3140
        %3485 = vmatpush.bf16.msra.mxu0 %v3136
        %3486 = vmatpush.bf16.msra.mxu0 %v3132
        %3487 = vmatpush.bf16.msra.mxu0 %v3128
        %3488 = vmatmul.bf16.gmra.mxu0 %v2635
        %v3489 = vpop.f32.mrf.mxu0
        %v3490 = vadd.f32 %v3477, %v3489
        %v3491 = vpop.f32.mrf.mxu0
        %3492 = vdwg.mxu0
        %vm3493 = vcmp.gt.f32.partialorder %v3334, 0.0
        %vm3494 = vcmp.gt.f32.partialorder %v3386, 0.0
        %vm3495 = vcmp.gt.f32.partialorder %v3438, 0.0
        %vm3496 = vcmp.gt.f32.partialorder %v3490, 0.0
        %v3497 = vmul.f32 %v3334, 0.5
        %v3498 = vmul.f32 %v3386, 0.5
        %v3499 = vmul.f32 %v3438, 0.5
        %v3500 = vmul.f32 %v3490, 0.5
        %v3501 = vsel %vm3493, %v3334, %v3497
        %v3502 = vsel %vm3494, %v3386, %v3498
        %v3503 = vsel %vm3495, %v3438, %v3499
        %v3504 = vsel %vm3496, %v3490, %v3500
        %v3505 = vpack.c.bf16 %v3501, %v3501
        %v3506 = vpack.c.bf16 %v3502, %v3502
        %v3507 = vpack.c.bf16 %v3503, %v3503
        %v3508 = vpack.c.bf16 %v3504, %v3504
        %v3510 = vperm.slane %v1354, 0
        %v3511 = vperm.slane %v1354, 1
        %v3578 = vunpack.c.l.b16 %v1290
        %v3579 = vunpack.c.h.b16 %v1290
        %v3580 = vunpack.c.l.b16 %v1291
        %v3581 = vunpack.c.h.b16 %v1291
        %v3582 = vunpack.c.l.b16 %v1292
        %v3583 = vunpack.c.h.b16 %v1292
        %v3584 = vunpack.c.l.b16 %v1293
        %v3585 = vunpack.c.h.b16 %v1293
        %v3586 = vunpack.c.l.b16 %v1294
        %v3587 = vunpack.c.h.b16 %v1294
        %v3588 = vunpack.c.l.b16 %v1295
        %v3589 = vunpack.c.h.b16 %v1295
        %v3590 = vunpack.c.l.b16 %v1296
        %v3591 = vunpack.c.h.b16 %v1296
        %v3592 = vunpack.c.l.b16 %v1297
        %v3593 = vunpack.c.h.b16 %v1297
        %v3594 = vunpack.c.l.b16 %v1298
        %v3595 = vunpack.c.h.b16 %v1298
        %v3596 = vunpack.c.l.b16 %v1299
        %v3597 = vunpack.c.h.b16 %v1299
        %v3598 = vunpack.c.l.b16 %v1300
        %v3599 = vunpack.c.h.b16 %v1300
        %v3600 = vunpack.c.l.b16 %v1301
        %v3601 = vunpack.c.h.b16 %v1301
        %v3602 = vunpack.c.l.b16 %v1302
        %v3603 = vunpack.c.h.b16 %v1302
        %v3604 = vunpack.c.l.b16 %v1303
        %v3605 = vunpack.c.h.b16 %v1303
        %v3606 = vunpack.c.l.b16 %v1304
        %v3607 = vunpack.c.h.b16 %v1304
        %v3608 = vunpack.c.l.b16 %v1305
        %v3609 = vunpack.c.h.b16 %v1305
        %v3610 = vunpack.c.l.b16 %v1306
        %v3611 = vunpack.c.h.b16 %v1306
        %v3612 = vunpack.c.l.b16 %v1307
        %v3613 = vunpack.c.h.b16 %v1307
        %v3614 = vunpack.c.l.b16 %v1308
        %v3615 = vunpack.c.h.b16 %v1308
        %v3616 = vunpack.c.l.b16 %v1309
        %v3617 = vunpack.c.h.b16 %v1309
        %v3618 = vunpack.c.l.b16 %v1310
        %v3619 = vunpack.c.h.b16 %v1310
        %v3620 = vunpack.c.l.b16 %v1311
        %v3621 = vunpack.c.h.b16 %v1311
        %v3622 = vunpack.c.l.b16 %v1312
        %v3623 = vunpack.c.h.b16 %v1312
        %v3624 = vunpack.c.l.b16 %v1313
        %v3625 = vunpack.c.h.b16 %v1313
        %v3626 = vunpack.c.l.b16 %v1314
        %v3627 = vunpack.c.h.b16 %v1314
        %v3628 = vunpack.c.l.b16 %v1315
        %v3629 = vunpack.c.h.b16 %v1315
        %v3630 = vunpack.c.l.b16 %v1316
        %v3631 = vunpack.c.h.b16 %v1316
        %v3632 = vunpack.c.l.b16 %v1317
        %v3633 = vunpack.c.h.b16 %v1317
        %v3634 = vunpack.c.l.b16 %v1318
        %v3635 = vunpack.c.h.b16 %v1318
        %v3636 = vunpack.c.l.b16 %v1319
        %v3637 = vunpack.c.h.b16 %v1319
        %v3638 = vunpack.c.l.b16 %v1320
        %v3639 = vunpack.c.h.b16 %v1320
        %v3640 = vunpack.c.l.b16 %v1321
        %v3641 = vunpack.c.h.b16 %v1321
        %v3642 = vunpack.c.l.b16 %v1322
        %v3643 = vunpack.c.h.b16 %v1322
        %v3644 = vunpack.c.l.b16 %v1323
        %v3645 = vunpack.c.h.b16 %v1323
        %v3646 = vunpack.c.l.b16 %v1324
        %v3647 = vunpack.c.h.b16 %v1324
        %v3648 = vunpack.c.l.b16 %v1325
        %v3649 = vunpack.c.h.b16 %v1325
        %v3650 = vunpack.c.l.b16 %v1326
        %v3651 = vunpack.c.h.b16 %v1326
        %v3652 = vunpack.c.l.b16 %v1327
        %v3653 = vunpack.c.h.b16 %v1327
        %v3654 = vunpack.c.l.b16 %v1328
        %v3655 = vunpack.c.h.b16 %v1328
        %v3656 = vunpack.c.l.b16 %v1329
        %v3657 = vunpack.c.h.b16 %v1329
        %v3658 = vunpack.c.l.b16 %v1330
        %v3659 = vunpack.c.h.b16 %v1330
        %v3660 = vunpack.c.l.b16 %v1331
        %v3661 = vunpack.c.h.b16 %v1331
        %v3662 = vunpack.c.l.b16 %v1332
        %v3663 = vunpack.c.h.b16 %v1332
        %v3664 = vunpack.c.l.b16 %v1333
        %v3665 = vunpack.c.h.b16 %v1333
        %v3666 = vunpack.c.l.b16 %v1334
        %v3667 = vunpack.c.h.b16 %v1334
        %v3668 = vunpack.c.l.b16 %v1335
        %v3669 = vunpack.c.h.b16 %v1335
        %v3670 = vunpack.c.l.b16 %v1336
        %v3671 = vunpack.c.h.b16 %v1336
        %v3672 = vunpack.c.l.b16 %v1337
        %v3673 = vunpack.c.h.b16 %v1337
        %v3674 = vunpack.c.l.b16 %v1338
        %v3675 = vunpack.c.h.b16 %v1338
        %v3676 = vunpack.c.l.b16 %v1339
        %v3677 = vunpack.c.h.b16 %v1339
        %v3678 = vunpack.c.l.b16 %v1340
        %v3679 = vunpack.c.h.b16 %v1340
        %v3680 = vunpack.c.l.b16 %v1341
        %v3681 = vunpack.c.h.b16 %v1341
        %v3682 = vunpack.c.l.b16 %v1342
        %v3683 = vunpack.c.h.b16 %v1342
        %v3684 = vunpack.c.l.b16 %v1343
        %v3685 = vunpack.c.h.b16 %v1343
        %v3686 = vunpack.c.l.b16 %v1344
        %v3687 = vunpack.c.h.b16 %v1344
        %v3688 = vunpack.c.l.b16 %v1345
        %v3689 = vunpack.c.h.b16 %v1345
        %v3690 = vunpack.c.l.b16 %v1346
        %v3691 = vunpack.c.h.b16 %v1346
        %v3692 = vunpack.c.l.b16 %v1347
        %v3693 = vunpack.c.h.b16 %v1347
        %v3694 = vunpack.c.l.b16 %v1348
        %v3695 = vunpack.c.h.b16 %v1348
        %v3696 = vunpack.c.l.b16 %v1349
        %v3697 = vunpack.c.h.b16 %v1349
        %v3698 = vunpack.c.l.b16 %v1350
        %v3699 = vunpack.c.h.b16 %v1350
        %v3700 = vunpack.c.l.b16 %v1351
        %v3701 = vunpack.c.h.b16 %v1351
        %v3702 = vunpack.c.l.b16 %v1352
        %v3703 = vunpack.c.h.b16 %v1352
        %v3704 = vunpack.c.l.b16 %v1353
        %v3705 = vunpack.c.h.b16 %v1353
        %v3706 = vpack.c.b16 %v3580, %v3578
        %v3707 = vpack.c.b16 %v3581, %v3579
        %v3708 = vpack.c.b16 %v3584, %v3582
        %v3709 = vpack.c.b16 %v3585, %v3583
        %v3710 = vpack.c.b16 %v3588, %v3586
        %v3711 = vpack.c.b16 %v3589, %v3587
        %v3712 = vpack.c.b16 %v3592, %v3590
        %v3713 = vpack.c.b16 %v3593, %v3591
        %v3714 = vpack.c.b16 %v3596, %v3594
        %v3715 = vpack.c.b16 %v3597, %v3595
        %v3716 = vpack.c.b16 %v3600, %v3598
        %v3717 = vpack.c.b16 %v3601, %v3599
        %v3718 = vpack.c.b16 %v3604, %v3602
        %v3719 = vpack.c.b16 %v3605, %v3603
        %v3720 = vpack.c.b16 %v3608, %v3606
        %v3721 = vpack.c.b16 %v3609, %v3607
        %v3722 = vpack.c.b16 %v3612, %v3610
        %v3723 = vpack.c.b16 %v3613, %v3611
        %v3724 = vpack.c.b16 %v3616, %v3614
        %v3725 = vpack.c.b16 %v3617, %v3615
        %v3726 = vpack.c.b16 %v3620, %v3618
        %v3727 = vpack.c.b16 %v3621, %v3619
        %v3728 = vpack.c.b16 %v3624, %v3622
        %v3729 = vpack.c.b16 %v3625, %v3623
        %v3730 = vpack.c.b16 %v3628, %v3626
        %v3731 = vpack.c.b16 %v3629, %v3627
        %v3732 = vpack.c.b16 %v3632, %v3630
        %v3733 = vpack.c.b16 %v3633, %v3631
        %v3734 = vpack.c.b16 %v3636, %v3634
        %v3735 = vpack.c.b16 %v3637, %v3635
        %v3736 = vpack.c.b16 %v3640, %v3638
        %v3737 = vpack.c.b16 %v3641, %v3639
        %v3738 = vpack.c.b16 %v3644, %v3642
        %v3739 = vpack.c.b16 %v3645, %v3643
        %v3740 = vpack.c.b16 %v3648, %v3646
        %v3741 = vpack.c.b16 %v3649, %v3647
        %v3742 = vpack.c.b16 %v3652, %v3650
        %v3743 = vpack.c.b16 %v3653, %v3651
        %v3744 = vpack.c.b16 %v3656, %v3654
        %v3745 = vpack.c.b16 %v3657, %v3655
        %v3746 = vpack.c.b16 %v3660, %v3658
        %v3747 = vpack.c.b16 %v3661, %v3659
        %v3748 = vpack.c.b16 %v3664, %v3662
        %v3749 = vpack.c.b16 %v3665, %v3663
        %v3750 = vpack.c.b16 %v3668, %v3666
        %v3751 = vpack.c.b16 %v3669, %v3667
        %v3752 = vpack.c.b16 %v3672, %v3670
        %v3753 = vpack.c.b16 %v3673, %v3671
        %v3754 = vpack.c.b16 %v3676, %v3674
        %v3755 = vpack.c.b16 %v3677, %v3675
        %v3756 = vpack.c.b16 %v3680, %v3678
        %v3757 = vpack.c.b16 %v3681, %v3679
        %v3758 = vpack.c.b16 %v3684, %v3682
        %v3759 = vpack.c.b16 %v3685, %v3683
        %v3760 = vpack.c.b16 %v3688, %v3686
        %v3761 = vpack.c.b16 %v3689, %v3687
        %v3762 = vpack.c.b16 %v3692, %v3690
        %v3763 = vpack.c.b16 %v3693, %v3691
        %v3764 = vpack.c.b16 %v3696, %v3694
        %v3765 = vpack.c.b16 %v3697, %v3695
        %v3766 = vpack.c.b16 %v3700, %v3698
        %v3767 = vpack.c.b16 %v3701, %v3699
        %v3768 = vpack.c.b16 %v3704, %v3702
        %v3769 = vpack.c.b16 %v3705, %v3703
        %3834 = vmatpush.bf16.msra.mxu0 %v3720
        %3835 = vmatpush.bf16.msra.mxu0 %v3718
        %3836 = vmatpush.bf16.msra.mxu0 %v3716
        %3837 = vmatpush.bf16.msra.mxu0 %v3714
        %3838 = vmatpush.bf16.msra.mxu0 %v3712
        %3839 = vmatpush.bf16.msra.mxu0 %v3710
        %3840 = vmatpush.bf16.msra.mxu0 %v3708
        %3841 = vmatpush.bf16.msra.mxu0 %v3706
        %3842 = vmatmul.bf16.gmra.mxu0 %v3505
        %v3843 = vpop.f32.mrf.mxu0
        %v3844 = vadd.f32 %v3510, %v3843
        %v3845 = vpop.f32.mrf.mxu0
        %3846 = vdwg.mxu0
        %3847 = vmatpush.bf16.msra.mxu0 %v3736
        %3848 = vmatpush.bf16.msra.mxu0 %v3734
        %3849 = vmatpush.bf16.msra.mxu0 %v3732
        %3850 = vmatpush.bf16.msra.mxu0 %v3730
        %3851 = vmatpush.bf16.msra.mxu0 %v3728
        %3852 = vmatpush.bf16.msra.mxu0 %v3726
        %3853 = vmatpush.bf16.msra.mxu0 %v3724
        %3854 = vmatpush.bf16.msra.mxu0 %v3722
        %3855 = vmatmul.bf16.gmra.mxu0 %v3506
        %v3856 = vpop.f32.mrf.mxu0
        %v3857 = vadd.f32 %v3844, %v3856
        %v3858 = vpop.f32.mrf.mxu0
        %3859 = vdwg.mxu0
        %3860 = vmatpush.bf16.msra.mxu0 %v3752
        %3861 = vmatpush.bf16.msra.mxu0 %v3750
        %3862 = vmatpush.bf16.msra.mxu0 %v3748
        %3863 = vmatpush.bf16.msra.mxu0 %v3746
        %3864 = vmatpush.bf16.msra.mxu0 %v3744
        %3865 = vmatpush.bf16.msra.mxu0 %v3742
        %3866 = vmatpush.bf16.msra.mxu0 %v3740
        %3867 = vmatpush.bf16.msra.mxu0 %v3738
        %3868 = vmatmul.bf16.gmra.mxu0 %v3507
        %v3869 = vpop.f32.mrf.mxu0
        %v3870 = vadd.f32 %v3857, %v3869
        %v3871 = vpop.f32.mrf.mxu0
        %3872 = vdwg.mxu0
        %3873 = vmatpush.bf16.msra.mxu0 %v3768
        %3874 = vmatpush.bf16.msra.mxu0 %v3766
        %3875 = vmatpush.bf16.msra.mxu0 %v3764
        %3876 = vmatpush.bf16.msra.mxu0 %v3762
        %3877 = vmatpush.bf16.msra.mxu0 %v3760
        %3878 = vmatpush.bf16.msra.mxu0 %v3758
        %3879 = vmatpush.bf16.msra.mxu0 %v3756
        %3880 = vmatpush.bf16.msra.mxu0 %v3754
        %3881 = vmatmul.bf16.gmra.mxu0 %v3508
        %v3882 = vpop.f32.mrf.mxu0
        %v3883 = vadd.f32 %v3870, %v3882
        %v3884 = vpop.f32.mrf.mxu0
        %3885 = vdwg.mxu0
        %3886 = vmatpush.bf16.msra.mxu0 %v3721
        %3887 = vmatpush.bf16.msra.mxu0 %v3719
        %3888 = vmatpush.bf16.msra.mxu0 %v3717
        %3889 = vmatpush.bf16.msra.mxu0 %v3715
        %3890 = vmatpush.bf16.msra.mxu0 %v3713
        %3891 = vmatpush.bf16.msra.mxu0 %v3711
        %3892 = vmatpush.bf16.msra.mxu0 %v3709
        %3893 = vmatpush.bf16.msra.mxu0 %v3707
        %3894 = vmatmul.bf16.gmra.mxu0 %v3505
        %v3895 = vpop.f32.mrf.mxu0
        %v3896 = vadd.f32 %v3511, %v3895
        %v3897 = vpop.f32.mrf.mxu0
        %3898 = vdwg.mxu0
        %3899 = vmatpush.bf16.msra.mxu0 %v3737
        %3900 = vmatpush.bf16.msra.mxu0 %v3735
        %3901 = vmatpush.bf16.msra.mxu0 %v3733
        %3902 = vmatpush.bf16.msra.mxu0 %v3731
        %3903 = vmatpush.bf16.msra.mxu0 %v3729
        %3904 = vmatpush.bf16.msra.mxu0 %v3727
        %3905 = vmatpush.bf16.msra.mxu0 %v3725
        %3906 = vmatpush.bf16.msra.mxu0 %v3723
        %3907 = vmatmul.bf16.gmra.mxu0 %v3506
        %v3908 = vpop.f32.mrf.mxu0
        %v3909 = vadd.f32 %v3896, %v3908
        %v3910 = vpop.f32.mrf.mxu0
        %3911 = vdwg.mxu0
        %3912 = vmatpush.bf16.msra.mxu0 %v3753
        %3913 = vmatpush.bf16.msra.mxu0 %v3751
        %3914 = vmatpush.bf16.msra.mxu0 %v3749
        %3915 = vmatpush.bf16.msra.mxu0 %v3747
        %3916 = vmatpush.bf16.msra.mxu0 %v3745
        %3917 = vmatpush.bf16.msra.mxu0 %v3743
        %3918 = vmatpush.bf16.msra.mxu0 %v3741
        %3919 = vmatpush.bf16.msra.mxu0 %v3739
        %3920 = vmatmul.bf16.gmra.mxu0 %v3507
        %v3921 = vpop.f32.mrf.mxu0
        %v3922 = vadd.f32 %v3909, %v3921
        %v3923 = vpop.f32.mrf.mxu0
        %3924 = vdwg.mxu0
        %3925 = vmatpush.bf16.msra.mxu0 %v3769
        %3926 = vmatpush.bf16.msra.mxu0 %v3767
        %3927 = vmatpush.bf16.msra.mxu0 %v3765
        %3928 = vmatpush.bf16.msra.mxu0 %v3763
        %3929 = vmatpush.bf16.msra.mxu0 %v3761
        %3930 = vmatpush.bf16.msra.mxu0 %v3759
        %3931 = vmatpush.bf16.msra.mxu0 %v3757
        %3932 = vmatpush.bf16.msra.mxu0 %v3755
        %3933 = vmatmul.bf16.gmra.mxu0 %v3508
        %v3934 = vpop.f32.mrf.mxu0
        %v3935 = vadd.f32 %v3922, %v3934
        %v3936 = vpop.f32.mrf.mxu0
        %3937 = vdwg.mxu0
        %vm3938 = vcmp.gt.f32.partialorder %v3883, 0.0
        %vm3939 = vcmp.gt.f32.partialorder %v3935, 0.0
        %v3940 = vmul.f32 %v3883, 0.5
        %v3941 = vmul.f32 %v3935, 0.5
        %v3942 = vsel %vm3938, %v3883, %v3940
        %v3943 = vsel %vm3939, %v3935, %v3941
        %v3944 = vpack.c.bf16 %v3942, %v3942
        %v3945 = vpack.c.bf16 %v3943, %v3943
        %v3947 = vperm.slane %v1387, 0
        %v3981 = vunpack.c.l.b16 %v1355
        %v3982 = vunpack.c.l.b16 %v1356
        %v3983 = vunpack.c.l.b16 %v1357
        %v3984 = vunpack.c.l.b16 %v1358
        %v3985 = vunpack.c.l.b16 %v1359
        %v3986 = vunpack.c.l.b16 %v1360
        %v3987 = vunpack.c.l.b16 %v1361
        %v3988 = vunpack.c.l.b16 %v1362
        %v3989 = vunpack.c.l.b16 %v1363
        %v3990 = vunpack.c.l.b16 %v1364
        %v3991 = vunpack.c.l.b16 %v1365
        %v3992 = vunpack.c.l.b16 %v1366
        %v3993 = vunpack.c.l.b16 %v1367
        %v3994 = vunpack.c.l.b16 %v1368
        %v3995 = vunpack.c.l.b16 %v1369
        %v3996 = vunpack.c.l.b16 %v1370
        %v3997 = vunpack.c.l.b16 %v1371
        %v3998 = vunpack.c.l.b16 %v1372
        %v3999 = vunpack.c.l.b16 %v1373
        %v4000 = vunpack.c.l.b16 %v1374
        %v4001 = vunpack.c.l.b16 %v1375
        %v4002 = vunpack.c.l.b16 %v1376
        %v4003 = vunpack.c.l.b16 %v1377
        %v4004 = vunpack.c.l.b16 %v1378
        %v4005 = vunpack.c.l.b16 %v1379
        %v4006 = vunpack.c.l.b16 %v1380
        %v4007 = vunpack.c.l.b16 %v1381
        %v4008 = vunpack.c.l.b16 %v1382
        %v4009 = vunpack.c.l.b16 %v1383
        %v4010 = vunpack.c.l.b16 %v1384
        %v4011 = vunpack.c.l.b16 %v1385
        %v4012 = vunpack.c.l.b16 %v1386
        %v4013 = vpack.c.b16 %v3982, %v3981
        %v4014 = vpack.c.b16 %v3984, %v3983
        %v4015 = vpack.c.b16 %v3986, %v3985
        %v4016 = vpack.c.b16 %v3988, %v3987
        %v4017 = vpack.c.b16 %v3990, %v3989
        %v4018 = vpack.c.b16 %v3992, %v3991
        %v4019 = vpack.c.b16 %v3994, %v3993
        %v4020 = vpack.c.b16 %v3996, %v3995
        %v4021 = vpack.c.b16 %v3998, %v3997
        %v4022 = vpack.c.b16 %v4000, %v3999
        %v4023 = vpack.c.b16 %v4002, %v4001
        %v4024 = vpack.c.b16 %v4004, %v4003
        %v4025 = vpack.c.b16 %v4006, %v4005
        %v4026 = vpack.c.b16 %v4008, %v4007
        %v4027 = vpack.c.b16 %v4010, %v4009
        %v4028 = vpack.c.b16 %v4012, %v4011
        %4045 = vmatpush.bf16.msra.mxu0 %v4020
        %4046 = vmatpush.bf16.msra.mxu0 %v4019
        %4047 = vmatpush.bf16.msra.mxu0 %v4018
        %4048 = vmatpush.bf16.msra.mxu0 %v4017
        %4049 = vmatpush.bf16.msra.mxu0 %v4016
        %4050 = vmatpush.bf16.msra.mxu0 %v4015
        %4051 = vmatpush.bf16.msra.mxu0 %v4014
        %4052 = vmatpush.bf16.msra.mxu0 %v4013
        %4053 = vmatmul.bf16.gmra.mxu0 %v3944
        %v4054 = vpop.f32.mrf.mxu0
        %v4055 = vadd.f32 %v3947, %v4054
        %v4056 = vpop.f32.mrf.mxu0
        %4057 = vdwg.mxu0
        %4058 = vmatpush.bf16.msra.mxu0 %v4028
        %4059 = vmatpush.bf16.msra.mxu0 %v4027
        %4060 = vmatpush.bf16.msra.mxu0 %v4026
        %4061 = vmatpush.bf16.msra.mxu0 %v4025
        %4062 = vmatpush.bf16.msra.mxu0 %v4024
        %4063 = vmatpush.bf16.msra.mxu0 %v4023
        %4064 = vmatpush.bf16.msra.mxu0 %v4022
        %4065 = vmatpush.bf16.msra.mxu0 %v4021
        %4066 = vmatmul.bf16.gmra.mxu0 %v3945
        %v4067 = vpop.f32.mrf.mxu0
        %v4068 = vadd.f32 %v4055, %v4067
        %v4069 = vpop.f32.mrf.mxu0
        %4070 = vdwg.mxu0
        %vm4071 = vcmp.gt.f32.partialorder %v4068, 0.0
        %v4072 = vmul.f32 %v4068, 0.5
        %v4073 = vsel %vm4071, %v4068, %v4072
        %v4074 = vpack.c.bf16 %v4073, %v4073
        %v4076 = vperm.slane %v1404, 0
        %v4094 = vunpack.c.l.b16 %v1388
        %v4095 = vunpack.c.l.b16 %v1389
        %v4096 = vunpack.c.l.b16 %v1390
        %v4097 = vunpack.c.l.b16 %v1391
        %v4098 = vunpack.c.l.b16 %v1392
        %v4099 = vunpack.c.l.b16 %v1393
        %v4100 = vunpack.c.l.b16 %v1394
        %v4101 = vunpack.c.l.b16 %v1395
        %v4102 = vunpack.c.l.b16 %v1396
        %v4103 = vunpack.c.l.b16 %v1397
        %v4104 = vunpack.c.l.b16 %v1398
        %v4105 = vunpack.c.l.b16 %v1399
        %v4106 = vunpack.c.l.b16 %v1400
        %v4107 = vunpack.c.l.b16 %v1401
        %v4108 = vunpack.c.l.b16 %v1402
        %v4109 = vunpack.c.l.b16 %v1403
        %v4110 = vpack.c.b16 %v4095, %v4094
        %v4111 = vpack.c.b16 %v4097, %v4096
        %v4112 = vpack.c.b16 %v4099, %v4098
        %v4113 = vpack.c.b16 %v4101, %v4100
        %v4114 = vpack.c.b16 %v4103, %v4102
        %v4115 = vpack.c.b16 %v4105, %v4104
        %v4116 = vpack.c.b16 %v4107, %v4106
        %v4117 = vpack.c.b16 %v4109, %v4108
        %4126 = vmatpush.bf16.msra.mxu0 %v4117
        %4127 = vmatpush.bf16.msra.mxu0 %v4116
        %4128 = vmatpush.bf16.msra.mxu0 %v4115
        %4129 = vmatpush.bf16.msra.mxu0 %v4114
        %4130 = vmatpush.bf16.msra.mxu0 %v4113
        %4131 = vmatpush.bf16.msra.mxu0 %v4112
        %4132 = vmatpush.bf16.msra.mxu0 %v4111
        %4133 = vmatpush.bf16.msra.mxu0 %v4110
        %4134 = vmatmul.bf16.gmra.mxu0 %v4074
        %v4135 = vpop.f32.mrf.mxu0
        %v4136 = vadd.f32 %v4076, %v4135
        %v4137 = vpop.f32.mrf.mxu0
        %4138 = vdwg.mxu0
        %v4139 = vmul.f32 %v4136, 0.5
        %v4140 = vmul.f32 %v4139, 1.442695
        %v4141 = vpow.pop %v4140
        %4143 = vrot.lane.b32.xlu0 %v1758, 64
        %v4144 = vpop.permute.xlu0 %4143
        %v4146 = vmul.f32 %v4141, %v4144
        %4148 = vrot.lane.b32.xlu0 %v4146, 64
        %v4149 = vpop.permute.xlu0 %4148
        %v4151 = vadd.f32 %v4136, %v4149
        %v4152 = vpack.c.bf16 %v4151, %v4151
        %v4154 = vperm.slane %v1413, 0
        %v4164 = vunpack.c.l.b16 %v1405
        %v4165 = vunpack.c.l.b16 %v1406
        %v4166 = vunpack.c.l.b16 %v1407
        %v4167 = vunpack.c.l.b16 %v1408
        %v4168 = vunpack.c.l.b16 %v1409
        %v4169 = vunpack.c.l.b16 %v1410
        %v4170 = vunpack.c.l.b16 %v1411
        %v4171 = vunpack.c.l.b16 %v1412
        %v4172 = vpack.c.b16 %v4165, %v4164
        %v4173 = vpack.c.b16 %v4167, %v4166
        %v4174 = vpack.c.b16 %v4169, %v4168
        %v4175 = vpack.c.b16 %v4171, %v4170
        %vm4180 = vcmask 523264
        %v4182 = vsel %vm4180, %v4152, 0
        %4184 = vmatpush.bf16.msra.mxu0 0
        %4185 = vmatpush.bf16.msra.mxu0 0
        %4186 = vmatpush.bf16.msra.mxu0 0
        %4187 = vmatpush.bf16.msra.mxu0 0
        %4188 = vmatpush.bf16.msra.mxu0 %v4175
        %4189 = vmatpush.bf16.msra.mxu0 %v4174
        %4190 = vmatpush.bf16.msra.mxu0 %v4173
        %4191 = vmatpush.bf16.msra.mxu0 %v4172
        %4192 = vmatmul.bf16.gmra.mxu0 %v4182
        %v4193 = vpop.f32.mrf.mxu0
        %v4194 = vadd.f32 %v4154, %v4193
        %v4195 = vpop.f32.mrf.mxu0
        %4196 = vdwg.mxu0
        %vm4197 = vcmp.gt.f32.partialorder %v4194, 0.0
        %v4198 = vmul.f32 %v4194, 0.5
        %v4199 = vsel %vm4197, %v4194, %v4198
        %v4200 = vpack.c.bf16 %v4199, %v4199
        %v4202 = vperm.slane %v1430, 0
        %v4203 = vperm.slane %v1430, 1
        %v4222 = vunpack.c.l.b16 %v1414
        %v4223 = vunpack.c.h.b16 %v1414
        %v4224 = vunpack.c.l.b16 %v1415
        %v4225 = vunpack.c.h.b16 %v1415
        %v4226 = vunpack.c.l.b16 %v1416
        %v4227 = vunpack.c.h.b16 %v1416
        %v4228 = vunpack.c.l.b16 %v1417
        %v4229 = vunpack.c.h.b16 %v1417
        %v4230 = vunpack.c.l.b16 %v1418
        %v4231 = vunpack.c.h.b16 %v1418
        %v4232 = vunpack.c.l.b16 %v1419
        %v4233 = vunpack.c.h.b16 %v1419
        %v4234 = vunpack.c.l.b16 %v1420
        %v4235 = vunpack.c.h.b16 %v1420
        %v4236 = vunpack.c.l.b16 %v1421
        %v4237 = vunpack.c.h.b16 %v1421
        %v4238 = vunpack.c.l.b16 %v1422
        %v4239 = vunpack.c.h.b16 %v1422
        %v4240 = vunpack.c.l.b16 %v1423
        %v4241 = vunpack.c.h.b16 %v1423
        %v4242 = vunpack.c.l.b16 %v1424
        %v4243 = vunpack.c.h.b16 %v1424
        %v4244 = vunpack.c.l.b16 %v1425
        %v4245 = vunpack.c.h.b16 %v1425
        %v4246 = vunpack.c.l.b16 %v1426
        %v4247 = vunpack.c.h.b16 %v1426
        %v4248 = vunpack.c.l.b16 %v1427
        %v4249 = vunpack.c.h.b16 %v1427
        %v4250 = vunpack.c.l.b16 %v1428
        %v4251 = vunpack.c.h.b16 %v1428
        %v4252 = vunpack.c.l.b16 %v1429
        %v4253 = vunpack.c.h.b16 %v1429
        %v4254 = vpack.c.b16 %v4224, %v4222
        %v4255 = vpack.c.b16 %v4225, %v4223
        %v4256 = vpack.c.b16 %v4228, %v4226
        %v4257 = vpack.c.b16 %v4229, %v4227
        %v4258 = vpack.c.b16 %v4232, %v4230
        %v4259 = vpack.c.b16 %v4233, %v4231
        %v4260 = vpack.c.b16 %v4236, %v4234
        %v4261 = vpack.c.b16 %v4237, %v4235
        %v4262 = vpack.c.b16 %v4240, %v4238
        %v4263 = vpack.c.b16 %v4241, %v4239
        %v4264 = vpack.c.b16 %v4244, %v4242
        %v4265 = vpack.c.b16 %v4245, %v4243
        %v4266 = vpack.c.b16 %v4248, %v4246
        %v4267 = vpack.c.b16 %v4249, %v4247
        %v4268 = vpack.c.b16 %v4252, %v4250
        %v4269 = vpack.c.b16 %v4253, %v4251
        %4286 = vmatpush.bf16.msra.mxu0 %v4268
        %4287 = vmatpush.bf16.msra.mxu0 %v4266
        %4288 = vmatpush.bf16.msra.mxu0 %v4264
        %4289 = vmatpush.bf16.msra.mxu0 %v4262
        %4290 = vmatpush.bf16.msra.mxu0 %v4260
        %4291 = vmatpush.bf16.msra.mxu0 %v4258
        %4292 = vmatpush.bf16.msra.mxu0 %v4256
        %4293 = vmatpush.bf16.msra.mxu0 %v4254
        %4294 = vmatmul.bf16.gmra.mxu0 %v4200
        %v4295 = vpop.f32.mrf.mxu0
        %v4296 = vadd.f32 %v4202, %v4295
        %v4297 = vpop.f32.mrf.mxu0
        %4298 = vdwg.mxu0
        %4299 = vmatpush.bf16.msra.mxu0 %v4269
        %4300 = vmatpush.bf16.msra.mxu0 %v4267
        %4301 = vmatpush.bf16.msra.mxu0 %v4265
        %4302 = vmatpush.bf16.msra.mxu0 %v4263
        %4303 = vmatpush.bf16.msra.mxu0 %v4261
        %4304 = vmatpush.bf16.msra.mxu0 %v4259
        %4305 = vmatpush.bf16.msra.mxu0 %v4257
        %4306 = vmatpush.bf16.msra.mxu0 %v4255
        %4307 = vmatmul.bf16.gmra.mxu0 %v4200
        %v4308 = vpop.f32.mrf.mxu0
        %v4309 = vadd.f32 %v4203, %v4308
        %v4310 = vpop.f32.mrf.mxu0
        %4311 = vdwg.mxu0
        %vm4312 = vcmp.gt.f32.partialorder %v4296, 0.0
        %vm4313 = vcmp.gt.f32.partialorder %v4309, 0.0
        %v4314 = vmul.f32 %v4296, 0.5
        %v4315 = vmul.f32 %v4309, 0.5
        %v4316 = vsel %vm4312, %v4296, %v4314
        %v4317 = vsel %vm4313, %v4309, %v4315
        %v4318 = vpack.c.bf16 %v4316, %v4316
        %v4319 = vpack.c.bf16 %v4317, %v4317
        %v4321 = vperm.slane %v1495, 0
        %v4322 = vperm.slane %v1495, 1
        %v4323 = vperm.slane %v1495, 2
        %v4324 = vperm.slane %v1495, 3
        %v4393 = vunpack.c.l.b16 %v1431
        %v4394 = vunpack.c.h.b16 %v1431
        %v4395 = vunpack.c.l.b16 %v1432
        %v4396 = vunpack.c.h.b16 %v1432
        %v4397 = vunpack.c.l.b16 %v1433
        %v4398 = vunpack.c.h.b16 %v1433
        %v4399 = vunpack.c.l.b16 %v1434
        %v4400 = vunpack.c.h.b16 %v1434
        %v4401 = vunpack.c.l.b16 %v1435
        %v4402 = vunpack.c.h.b16 %v1435
        %v4403 = vunpack.c.l.b16 %v1436
        %v4404 = vunpack.c.h.b16 %v1436
        %v4405 = vunpack.c.l.b16 %v1437
        %v4406 = vunpack.c.h.b16 %v1437
        %v4407 = vunpack.c.l.b16 %v1438
        %v4408 = vunpack.c.h.b16 %v1438
        %v4409 = vunpack.c.l.b16 %v1439
        %v4410 = vunpack.c.h.b16 %v1439
        %v4411 = vunpack.c.l.b16 %v1440
        %v4412 = vunpack.c.h.b16 %v1440
        %v4413 = vunpack.c.l.b16 %v1441
        %v4414 = vunpack.c.h.b16 %v1441
        %v4415 = vunpack.c.l.b16 %v1442
        %v4416 = vunpack.c.h.b16 %v1442
        %v4417 = vunpack.c.l.b16 %v1443
        %v4418 = vunpack.c.h.b16 %v1443
        %v4419 = vunpack.c.l.b16 %v1444
        %v4420 = vunpack.c.h.b16 %v1444
        %v4421 = vunpack.c.l.b16 %v1445
        %v4422 = vunpack.c.h.b16 %v1445
        %v4423 = vunpack.c.l.b16 %v1446
        %v4424 = vunpack.c.h.b16 %v1446
        %v4425 = vunpack.c.l.b16 %v1447
        %v4426 = vunpack.c.h.b16 %v1447
        %v4427 = vunpack.c.l.b16 %v1448
        %v4428 = vunpack.c.h.b16 %v1448
        %v4429 = vunpack.c.l.b16 %v1449
        %v4430 = vunpack.c.h.b16 %v1449
        %v4431 = vunpack.c.l.b16 %v1450
        %v4432 = vunpack.c.h.b16 %v1450
        %v4433 = vunpack.c.l.b16 %v1451
        %v4434 = vunpack.c.h.b16 %v1451
        %v4435 = vunpack.c.l.b16 %v1452
        %v4436 = vunpack.c.h.b16 %v1452
        %v4437 = vunpack.c.l.b16 %v1453
        %v4438 = vunpack.c.h.b16 %v1453
        %v4439 = vunpack.c.l.b16 %v1454
        %v4440 = vunpack.c.h.b16 %v1454
        %v4441 = vunpack.c.l.b16 %v1455
        %v4442 = vunpack.c.h.b16 %v1455
        %v4443 = vunpack.c.l.b16 %v1456
        %v4444 = vunpack.c.h.b16 %v1456
        %v4445 = vunpack.c.l.b16 %v1457
        %v4446 = vunpack.c.h.b16 %v1457
        %v4447 = vunpack.c.l.b16 %v1458
        %v4448 = vunpack.c.h.b16 %v1458
        %v4449 = vunpack.c.l.b16 %v1459
        %v4450 = vunpack.c.h.b16 %v1459
        %v4451 = vunpack.c.l.b16 %v1460
        %v4452 = vunpack.c.h.b16 %v1460
        %v4453 = vunpack.c.l.b16 %v1461
        %v4454 = vunpack.c.h.b16 %v1461
        %v4455 = vunpack.c.l.b16 %v1462
        %v4456 = vunpack.c.h.b16 %v1462
        %v4457 = vunpack.c.l.b16 %v1463
        %v4458 = vunpack.c.h.b16 %v1463
        %v4459 = vunpack.c.l.b16 %v1464
        %v4460 = vunpack.c.h.b16 %v1464
        %v4461 = vunpack.c.l.b16 %v1465
        %v4462 = vunpack.c.h.b16 %v1465
        %v4463 = vunpack.c.l.b16 %v1466
        %v4464 = vunpack.c.h.b16 %v1466
        %v4465 = vunpack.c.l.b16 %v1467
        %v4466 = vunpack.c.h.b16 %v1467
        %v4467 = vunpack.c.l.b16 %v1468
        %v4468 = vunpack.c.h.b16 %v1468
        %v4469 = vunpack.c.l.b16 %v1469
        %v4470 = vunpack.c.h.b16 %v1469
        %v4471 = vunpack.c.l.b16 %v1470
        %v4472 = vunpack.c.h.b16 %v1470
        %v4473 = vunpack.c.l.b16 %v1471
        %v4474 = vunpack.c.h.b16 %v1471
        %v4475 = vunpack.c.l.b16 %v1472
        %v4476 = vunpack.c.h.b16 %v1472
        %v4477 = vunpack.c.l.b16 %v1473
        %v4478 = vunpack.c.h.b16 %v1473
        %v4479 = vunpack.c.l.b16 %v1474
        %v4480 = vunpack.c.h.b16 %v1474
        %v4481 = vunpack.c.l.b16 %v1475
        %v4482 = vunpack.c.h.b16 %v1475
        %v4483 = vunpack.c.l.b16 %v1476
        %v4484 = vunpack.c.h.b16 %v1476
        %v4485 = vunpack.c.l.b16 %v1477
        %v4486 = vunpack.c.h.b16 %v1477
        %v4487 = vunpack.c.l.b16 %v1478
        %v4488 = vunpack.c.h.b16 %v1478
        %v4489 = vunpack.c.l.b16 %v1479
        %v4490 = vunpack.c.h.b16 %v1479
        %v4491 = vunpack.c.l.b16 %v1480
        %v4492 = vunpack.c.h.b16 %v1480
        %v4493 = vunpack.c.l.b16 %v1481
        %v4494 = vunpack.c.h.b16 %v1481
        %v4495 = vunpack.c.l.b16 %v1482
        %v4496 = vunpack.c.h.b16 %v1482
        %v4497 = vunpack.c.l.b16 %v1483
        %v4498 = vunpack.c.h.b16 %v1483
        %v4499 = vunpack.c.l.b16 %v1484
        %v4500 = vunpack.c.h.b16 %v1484
        %v4501 = vunpack.c.l.b16 %v1485
        %v4502 = vunpack.c.h.b16 %v1485
        %v4503 = vunpack.c.l.b16 %v1486
        %v4504 = vunpack.c.h.b16 %v1486
        %v4505 = vunpack.c.l.b16 %v1487
        %v4506 = vunpack.c.h.b16 %v1487
        %v4507 = vunpack.c.l.b16 %v1488
        %v4508 = vunpack.c.h.b16 %v1488
        %v4509 = vunpack.c.l.b16 %v1489
        %v4510 = vunpack.c.h.b16 %v1489
        %v4511 = vunpack.c.l.b16 %v1490
        %v4512 = vunpack.c.h.b16 %v1490
        %v4513 = vunpack.c.l.b16 %v1491
        %v4514 = vunpack.c.h.b16 %v1491
        %v4515 = vunpack.c.l.b16 %v1492
        %v4516 = vunpack.c.h.b16 %v1492
        %v4517 = vunpack.c.l.b16 %v1493
        %v4518 = vunpack.c.h.b16 %v1493
        %v4519 = vunpack.c.l.b16 %v1494
        %v4520 = vunpack.c.h.b16 %v1494
        %v4521 = vpack.c.b16 %v4397, %v4393
        %v4522 = vpack.c.b16 %v4398, %v4394
        %v4523 = vpack.c.b16 %v4399, %v4395
        %v4524 = vpack.c.b16 %v4400, %v4396
        %v4525 = vpack.c.b16 %v4405, %v4401
        %v4526 = vpack.c.b16 %v4406, %v4402
        %v4527 = vpack.c.b16 %v4407, %v4403
        %v4528 = vpack.c.b16 %v4408, %v4404
        %v4529 = vpack.c.b16 %v4413, %v4409
        %v4530 = vpack.c.b16 %v4414, %v4410
        %v4531 = vpack.c.b16 %v4415, %v4411
        %v4532 = vpack.c.b16 %v4416, %v4412
        %v4533 = vpack.c.b16 %v4421, %v4417
        %v4534 = vpack.c.b16 %v4422, %v4418
        %v4535 = vpack.c.b16 %v4423, %v4419
        %v4536 = vpack.c.b16 %v4424, %v4420
        %v4537 = vpack.c.b16 %v4429, %v4425
        %v4538 = vpack.c.b16 %v4430, %v4426
        %v4539 = vpack.c.b16 %v4431, %v4427
        %v4540 = vpack.c.b16 %v4432, %v4428
        %v4541 = vpack.c.b16 %v4437, %v4433
        %v4542 = vpack.c.b16 %v4438, %v4434
        %v4543 = vpack.c.b16 %v4439, %v4435
        %v4544 = vpack.c.b16 %v4440, %v4436
        %v4545 = vpack.c.b16 %v4445, %v4441
        %v4546 = vpack.c.b16 %v4446, %v4442
        %v4547 = vpack.c.b16 %v4447, %v4443
        %v4548 = vpack.c.b16 %v4448, %v4444
        %v4549 = vpack.c.b16 %v4453, %v4449
        %v4550 = vpack.c.b16 %v4454, %v4450
        %v4551 = vpack.c.b16 %v4455, %v4451
        %v4552 = vpack.c.b16 %v4456, %v4452
        %v4553 = vpack.c.b16 %v4461, %v4457
        %v4554 = vpack.c.b16 %v4462, %v4458
        %v4555 = vpack.c.b16 %v4463, %v4459
        %v4556 = vpack.c.b16 %v4464, %v4460
        %v4557 = vpack.c.b16 %v4469, %v4465
        %v4558 = vpack.c.b16 %v4470, %v4466
        %v4559 = vpack.c.b16 %v4471, %v4467
        %v4560 = vpack.c.b16 %v4472, %v4468
        %v4561 = vpack.c.b16 %v4477, %v4473
        %v4562 = vpack.c.b16 %v4478, %v4474
        %v4563 = vpack.c.b16 %v4479, %v4475
        %v4564 = vpack.c.b16 %v4480, %v4476
        %v4565 = vpack.c.b16 %v4485, %v4481
        %v4566 = vpack.c.b16 %v4486, %v4482
        %v4567 = vpack.c.b16 %v4487, %v4483
        %v4568 = vpack.c.b16 %v4488, %v4484
        %v4569 = vpack.c.b16 %v4493, %v4489
        %v4570 = vpack.c.b16 %v4494, %v4490
        %v4571 = vpack.c.b16 %v4495, %v4491
        %v4572 = vpack.c.b16 %v4496, %v4492
        %v4573 = vpack.c.b16 %v4501, %v4497
        %v4574 = vpack.c.b16 %v4502, %v4498
        %v4575 = vpack.c.b16 %v4503, %v4499
        %v4576 = vpack.c.b16 %v4504, %v4500
        %v4577 = vpack.c.b16 %v4509, %v4505
        %v4578 = vpack.c.b16 %v4510, %v4506
        %v4579 = vpack.c.b16 %v4511, %v4507
        %v4580 = vpack.c.b16 %v4512, %v4508
        %v4581 = vpack.c.b16 %v4517, %v4513
        %v4582 = vpack.c.b16 %v4518, %v4514
        %v4583 = vpack.c.b16 %v4519, %v4515
        %v4584 = vpack.c.b16 %v4520, %v4516
        %4649 = vmatpush.bf16.msra.mxu0 %v4549
        %4650 = vmatpush.bf16.msra.mxu0 %v4545
        %4651 = vmatpush.bf16.msra.mxu0 %v4541
        %4652 = vmatpush.bf16.msra.mxu0 %v4537
        %4653 = vmatpush.bf16.msra.mxu0 %v4533
        %4654 = vmatpush.bf16.msra.mxu0 %v4529
        %4655 = vmatpush.bf16.msra.mxu0 %v4525
        %4656 = vmatpush.bf16.msra.mxu0 %v4521
        %4657 = vmatmul.bf16.gmra.mxu0 %v4318
        %v4658 = vpop.f32.mrf.mxu0
        %v4659 = vadd.f32 %v4321, %v4658
        %v4660 = vpop.f32.mrf.mxu0
        %4661 = vdwg.mxu0
        %4662 = vmatpush.bf16.msra.mxu0 %v4581
        %4663 = vmatpush.bf16.msra.mxu0 %v4577
        %4664 = vmatpush.bf16.msra.mxu0 %v4573
        %4665 = vmatpush.bf16.msra.mxu0 %v4569
        %4666 = vmatpush.bf16.msra.mxu0 %v4565
        %4667 = vmatpush.bf16.msra.mxu0 %v4561
        %4668 = vmatpush.bf16.msra.mxu0 %v4557
        %4669 = vmatpush.bf16.msra.mxu0 %v4553
        %4670 = vmatmul.bf16.gmra.mxu0 %v4319
        %v4671 = vpop.f32.mrf.mxu0
        %v4672 = vadd.f32 %v4659, %v4671
        %v4673 = vpop.f32.mrf.mxu0
        %4674 = vdwg.mxu0
        %4675 = vmatpush.bf16.msra.mxu0 %v4550
        %4676 = vmatpush.bf16.msra.mxu0 %v4546
        %4677 = vmatpush.bf16.msra.mxu0 %v4542
        %4678 = vmatpush.bf16.msra.mxu0 %v4538
        %4679 = vmatpush.bf16.msra.mxu0 %v4534
        %4680 = vmatpush.bf16.msra.mxu0 %v4530
        %4681 = vmatpush.bf16.msra.mxu0 %v4526
        %4682 = vmatpush.bf16.msra.mxu0 %v4522
        %4683 = vmatmul.bf16.gmra.mxu0 %v4318
        %v4684 = vpop.f32.mrf.mxu0
        %v4685 = vadd.f32 %v4322, %v4684
        %v4686 = vpop.f32.mrf.mxu0
        %4687 = vdwg.mxu0
        %4688 = vmatpush.bf16.msra.mxu0 %v4582
        %4689 = vmatpush.bf16.msra.mxu0 %v4578
        %4690 = vmatpush.bf16.msra.mxu0 %v4574
        %4691 = vmatpush.bf16.msra.mxu0 %v4570
        %4692 = vmatpush.bf16.msra.mxu0 %v4566
        %4693 = vmatpush.bf16.msra.mxu0 %v4562
        %4694 = vmatpush.bf16.msra.mxu0 %v4558
        %4695 = vmatpush.bf16.msra.mxu0 %v4554
        %4696 = vmatmul.bf16.gmra.mxu0 %v4319
        %v4697 = vpop.f32.mrf.mxu0
        %v4698 = vadd.f32 %v4685, %v4697
        %v4699 = vpop.f32.mrf.mxu0
        %4700 = vdwg.mxu0
        %4701 = vmatpush.bf16.msra.mxu0 %v4551
        %4702 = vmatpush.bf16.msra.mxu0 %v4547
        %4703 = vmatpush.bf16.msra.mxu0 %v4543
        %4704 = vmatpush.bf16.msra.mxu0 %v4539
        %4705 = vmatpush.bf16.msra.mxu0 %v4535
        %4706 = vmatpush.bf16.msra.mxu0 %v4531
        %4707 = vmatpush.bf16.msra.mxu0 %v4527
        %4708 = vmatpush.bf16.msra.mxu0 %v4523
        %4709 = vmatmul.bf16.gmra.mxu0 %v4318
        %v4710 = vpop.f32.mrf.mxu0
        %v4711 = vadd.f32 %v4323, %v4710
        %v4712 = vpop.f32.mrf.mxu0
        %4713 = vdwg.mxu0
        %4714 = vmatpush.bf16.msra.mxu0 %v4583
        %4715 = vmatpush.bf16.msra.mxu0 %v4579
        %4716 = vmatpush.bf16.msra.mxu0 %v4575
        %4717 = vmatpush.bf16.msra.mxu0 %v4571
        %4718 = vmatpush.bf16.msra.mxu0 %v4567
        %4719 = vmatpush.bf16.msra.mxu0 %v4563
        %4720 = vmatpush.bf16.msra.mxu0 %v4559
        %4721 = vmatpush.bf16.msra.mxu0 %v4555
        %4722 = vmatmul.bf16.gmra.mxu0 %v4319
        %v4723 = vpop.f32.mrf.mxu0
        %v4724 = vadd.f32 %v4711, %v4723
        %v4725 = vpop.f32.mrf.mxu0
        %4726 = vdwg.mxu0
        %4727 = vmatpush.bf16.msra.mxu0 %v4552
        %4728 = vmatpush.bf16.msra.mxu0 %v4548
        %4729 = vmatpush.bf16.msra.mxu0 %v4544
        %4730 = vmatpush.bf16.msra.mxu0 %v4540
        %4731 = vmatpush.bf16.msra.mxu0 %v4536
        %4732 = vmatpush.bf16.msra.mxu0 %v4532
        %4733 = vmatpush.bf16.msra.mxu0 %v4528
        %4734 = vmatpush.bf16.msra.mxu0 %v4524
        %4735 = vmatmul.bf16.gmra.mxu0 %v4318
        %v4736 = vpop.f32.mrf.mxu0
        %v4737 = vadd.f32 %v4324, %v4736
        %v4738 = vpop.f32.mrf.mxu0
        %4739 = vdwg.mxu0
        %4740 = vmatpush.bf16.msra.mxu0 %v4584
        %4741 = vmatpush.bf16.msra.mxu0 %v4580
        %4742 = vmatpush.bf16.msra.mxu0 %v4576
        %4743 = vmatpush.bf16.msra.mxu0 %v4572
        %4744 = vmatpush.bf16.msra.mxu0 %v4568
        %4745 = vmatpush.bf16.msra.mxu0 %v4564
        %4746 = vmatpush.bf16.msra.mxu0 %v4560
        %4747 = vmatpush.bf16.msra.mxu0 %v4556
        %4748 = vmatmul.bf16.gmra.mxu0 %v4319
        %v4749 = vpop.f32.mrf.mxu0
        %v4750 = vadd.f32 %v4737, %v4749
        %v4751 = vpop.f32.mrf.mxu0
        %4752 = vdwg.mxu0
        %vm4753 = vcmp.gt.f32.partialorder %v4672, 0.0
        %vm4754 = vcmp.gt.f32.partialorder %v4698, 0.0
        %vm4755 = vcmp.gt.f32.partialorder %v4724, 0.0
        %vm4756 = vcmp.gt.f32.partialorder %v4750, 0.0
        %v4757 = vmul.f32 %v4672, 0.5
        %v4758 = vmul.f32 %v4698, 0.5
        %v4759 = vmul.f32 %v4724, 0.5
        %v4760 = vmul.f32 %v4750, 0.5
        %v4761 = vsel %vm4753, %v4672, %v4757
        %v4762 = vsel %vm4754, %v4698, %v4758
        %v4763 = vsel %vm4755, %v4724, %v4759
        %v4764 = vsel %vm4756, %v4750, %v4760
        %v4765 = vpack.c.bf16 %v4761, %v4761
        %v4766 = vpack.c.bf16 %v4762, %v4762
        %v4767 = vpack.c.bf16 %v4763, %v4763
        %v4768 = vpack.c.bf16 %v4764, %v4764
        %v4770 = vperm.slane %v1624, 0
        %v4771 = vperm.slane %v1624, 1
        %v4772 = vperm.slane %v1624, 2
        %v4773 = vperm.slane %v1624, 3
        %v4906 = vunpack.c.l.b16 %v1496
        %v4907 = vunpack.c.h.b16 %v1496
        %v4908 = vunpack.c.l.b16 %v1497
        %v4909 = vunpack.c.h.b16 %v1497
        %v4910 = vunpack.c.l.b16 %v1498
        %v4911 = vunpack.c.h.b16 %v1498
        %v4912 = vunpack.c.l.b16 %v1499
        %v4913 = vunpack.c.h.b16 %v1499
        %v4914 = vunpack.c.l.b16 %v1500
        %v4915 = vunpack.c.h.b16 %v1500
        %v4916 = vunpack.c.l.b16 %v1501
        %v4917 = vunpack.c.h.b16 %v1501
        %v4918 = vunpack.c.l.b16 %v1502
        %v4919 = vunpack.c.h.b16 %v1502
        %v4920 = vunpack.c.l.b16 %v1503
        %v4921 = vunpack.c.h.b16 %v1503
        %v4922 = vunpack.c.l.b16 %v1504
        %v4923 = vunpack.c.h.b16 %v1504
        %v4924 = vunpack.c.l.b16 %v1505
        %v4925 = vunpack.c.h.b16 %v1505
        %v4926 = vunpack.c.l.b16 %v1506
        %v4927 = vunpack.c.h.b16 %v1506
        %v4928 = vunpack.c.l.b16 %v1507
        %v4929 = vunpack.c.h.b16 %v1507
        %v4930 = vunpack.c.l.b16 %v1508
        %v4931 = vunpack.c.h.b16 %v1508
        %v4932 = vunpack.c.l.b16 %v1509
        %v4933 = vunpack.c.h.b16 %v1509
        %v4934 = vunpack.c.l.b16 %v1510
        %v4935 = vunpack.c.h.b16 %v1510
        %v4936 = vunpack.c.l.b16 %v1511
        %v4937 = vunpack.c.h.b16 %v1511
        %v4938 = vunpack.c.l.b16 %v1512
        %v4939 = vunpack.c.h.b16 %v1512
        %v4940 = vunpack.c.l.b16 %v1513
        %v4941 = vunpack.c.h.b16 %v1513
        %v4942 = vunpack.c.l.b16 %v1514
        %v4943 = vunpack.c.h.b16 %v1514
        %v4944 = vunpack.c.l.b16 %v1515
        %v4945 = vunpack.c.h.b16 %v1515
        %v4946 = vunpack.c.l.b16 %v1516
        %v4947 = vunpack.c.h.b16 %v1516
        %v4948 = vunpack.c.l.b16 %v1517
        %v4949 = vunpack.c.h.b16 %v1517
        %v4950 = vunpack.c.l.b16 %v1518
        %v4951 = vunpack.c.h.b16 %v1518
        %v4952 = vunpack.c.l.b16 %v1519
        %v4953 = vunpack.c.h.b16 %v1519
        %v4954 = vunpack.c.l.b16 %v1520
        %v4955 = vunpack.c.h.b16 %v1520
        %v4956 = vunpack.c.l.b16 %v1521
        %v4957 = vunpack.c.h.b16 %v1521
        %v4958 = vunpack.c.l.b16 %v1522
        %v4959 = vunpack.c.h.b16 %v1522
        %v4960 = vunpack.c.l.b16 %v1523
        %v4961 = vunpack.c.h.b16 %v1523
        %v4962 = vunpack.c.l.b16 %v1524
        %v4963 = vunpack.c.h.b16 %v1524
        %v4964 = vunpack.c.l.b16 %v1525
        %v4965 = vunpack.c.h.b16 %v1525
        %v4966 = vunpack.c.l.b16 %v1526
        %v4967 = vunpack.c.h.b16 %v1526
        %v4968 = vunpack.c.l.b16 %v1527
        %v4969 = vunpack.c.h.b16 %v1527
        %v4970 = vunpack.c.l.b16 %v1528
        %v4971 = vunpack.c.h.b16 %v1528
        %v4972 = vunpack.c.l.b16 %v1529
        %v4973 = vunpack.c.h.b16 %v1529
        %v4974 = vunpack.c.l.b16 %v1530
        %v4975 = vunpack.c.h.b16 %v1530
        %v4976 = vunpack.c.l.b16 %v1531
        %v4977 = vunpack.c.h.b16 %v1531
        %v4978 = vunpack.c.l.b16 %v1532
        %v4979 = vunpack.c.h.b16 %v1532
        %v4980 = vunpack.c.l.b16 %v1533
        %v4981 = vunpack.c.h.b16 %v1533
        %v4982 = vunpack.c.l.b16 %v1534
        %v4983 = vunpack.c.h.b16 %v1534
        %v4984 = vunpack.c.l.b16 %v1535
        %v4985 = vunpack.c.h.b16 %v1535
        %v4986 = vunpack.c.l.b16 %v1536
        %v4987 = vunpack.c.h.b16 %v1536
        %v4988 = vunpack.c.l.b16 %v1537
        %v4989 = vunpack.c.h.b16 %v1537
        %v4990 = vunpack.c.l.b16 %v1538
        %v4991 = vunpack.c.h.b16 %v1538
        %v4992 = vunpack.c.l.b16 %v1539
        %v4993 = vunpack.c.h.b16 %v1539
        %v4994 = vunpack.c.l.b16 %v1540
        %v4995 = vunpack.c.h.b16 %v1540
        %v4996 = vunpack.c.l.b16 %v1541
        %v4997 = vunpack.c.h.b16 %v1541
        %v4998 = vunpack.c.l.b16 %v1542
        %v4999 = vunpack.c.h.b16 %v1542
        %v5000 = vunpack.c.l.b16 %v1543
        %v5001 = vunpack.c.h.b16 %v1543
        %v5002 = vunpack.c.l.b16 %v1544
        %v5003 = vunpack.c.h.b16 %v1544
        %v5004 = vunpack.c.l.b16 %v1545
        %v5005 = vunpack.c.h.b16 %v1545
        %v5006 = vunpack.c.l.b16 %v1546
        %v5007 = vunpack.c.h.b16 %v1546
        %v5008 = vunpack.c.l.b16 %v1547
        %v5009 = vunpack.c.h.b16 %v1547
        %v5010 = vunpack.c.l.b16 %v1548
        %v5011 = vunpack.c.h.b16 %v1548
        %v5012 = vunpack.c.l.b16 %v1549
        %v5013 = vunpack.c.h.b16 %v1549
        %v5014 = vunpack.c.l.b16 %v1550
        %v5015 = vunpack.c.h.b16 %v1550
        %v5016 = vunpack.c.l.b16 %v1551
        %v5017 = vunpack.c.h.b16 %v1551
        %v5018 = vunpack.c.l.b16 %v1552
        %v5019 = vunpack.c.h.b16 %v1552
        %v5020 = vunpack.c.l.b16 %v1553
        %v5021 = vunpack.c.h.b16 %v1553
        %v5022 = vunpack.c.l.b16 %v1554
        %v5023 = vunpack.c.h.b16 %v1554
        %v5024 = vunpack.c.l.b16 %v1555
        %v5025 = vunpack.c.h.b16 %v1555
        %v5026 = vunpack.c.l.b16 %v1556
        %v5027 = vunpack.c.h.b16 %v1556
        %v5028 = vunpack.c.l.b16 %v1557
        %v5029 = vunpack.c.h.b16 %v1557
        %v5030 = vunpack.c.l.b16 %v1558
        %v5031 = vunpack.c.h.b16 %v1558
        %v5032 = vunpack.c.l.b16 %v1559
        %v5033 = vunpack.c.h.b16 %v1559
        %v5034 = vunpack.c.l.b16 %v1560
        %v5035 = vunpack.c.h.b16 %v1560
        %v5036 = vunpack.c.l.b16 %v1561
        %v5037 = vunpack.c.h.b16 %v1561
        %v5038 = vunpack.c.l.b16 %v1562
        %v5039 = vunpack.c.h.b16 %v1562
        %v5040 = vunpack.c.l.b16 %v1563
        %v5041 = vunpack.c.h.b16 %v1563
        %v5042 = vunpack.c.l.b16 %v1564
        %v5043 = vunpack.c.h.b16 %v1564
        %v5044 = vunpack.c.l.b16 %v1565
        %v5045 = vunpack.c.h.b16 %v1565
        %v5046 = vunpack.c.l.b16 %v1566
        %v5047 = vunpack.c.h.b16 %v1566
        %v5048 = vunpack.c.l.b16 %v1567
        %v5049 = vunpack.c.h.b16 %v1567
        %v5050 = vunpack.c.l.b16 %v1568
        %v5051 = vunpack.c.h.b16 %v1568
        %v5052 = vunpack.c.l.b16 %v1569
        %v5053 = vunpack.c.h.b16 %v1569
        %v5054 = vunpack.c.l.b16 %v1570
        %v5055 = vunpack.c.h.b16 %v1570
        %v5056 = vunpack.c.l.b16 %v1571
        %v5057 = vunpack.c.h.b16 %v1571
        %v5058 = vunpack.c.l.b16 %v1572
        %v5059 = vunpack.c.h.b16 %v1572
        %v5060 = vunpack.c.l.b16 %v1573
        %v5061 = vunpack.c.h.b16 %v1573
        %v5062 = vunpack.c.l.b16 %v1574
        %v5063 = vunpack.c.h.b16 %v1574
        %v5064 = vunpack.c.l.b16 %v1575
        %v5065 = vunpack.c.h.b16 %v1575
        %v5066 = vunpack.c.l.b16 %v1576
        %v5067 = vunpack.c.h.b16 %v1576
        %v5068 = vunpack.c.l.b16 %v1577
        %v5069 = vunpack.c.h.b16 %v1577
        %v5070 = vunpack.c.l.b16 %v1578
        %v5071 = vunpack.c.h.b16 %v1578
        %v5072 = vunpack.c.l.b16 %v1579
        %v5073 = vunpack.c.h.b16 %v1579
        %v5074 = vunpack.c.l.b16 %v1580
        %v5075 = vunpack.c.h.b16 %v1580
        %v5076 = vunpack.c.l.b16 %v1581
        %v5077 = vunpack.c.h.b16 %v1581
        %v5078 = vunpack.c.l.b16 %v1582
        %v5079 = vunpack.c.h.b16 %v1582
        %v5080 = vunpack.c.l.b16 %v1583
        %v5081 = vunpack.c.h.b16 %v1583
        %v5082 = vunpack.c.l.b16 %v1584
        %v5083 = vunpack.c.h.b16 %v1584
        %v5084 = vunpack.c.l.b16 %v1585
        %v5085 = vunpack.c.h.b16 %v1585
        %v5086 = vunpack.c.l.b16 %v1586
        %v5087 = vunpack.c.h.b16 %v1586
        %v5088 = vunpack.c.l.b16 %v1587
        %v5089 = vunpack.c.h.b16 %v1587
        %v5090 = vunpack.c.l.b16 %v1588
        %v5091 = vunpack.c.h.b16 %v1588
        %v5092 = vunpack.c.l.b16 %v1589
        %v5093 = vunpack.c.h.b16 %v1589
        %v5094 = vunpack.c.l.b16 %v1590
        %v5095 = vunpack.c.h.b16 %v1590
        %v5096 = vunpack.c.l.b16 %v1591
        %v5097 = vunpack.c.h.b16 %v1591
        %v5098 = vunpack.c.l.b16 %v1592
        %v5099 = vunpack.c.h.b16 %v1592
        %v5100 = vunpack.c.l.b16 %v1593
        %v5101 = vunpack.c.h.b16 %v1593
        %v5102 = vunpack.c.l.b16 %v1594
        %v5103 = vunpack.c.h.b16 %v1594
        %v5104 = vunpack.c.l.b16 %v1595
        %v5105 = vunpack.c.h.b16 %v1595
        %v5106 = vunpack.c.l.b16 %v1596
        %v5107 = vunpack.c.h.b16 %v1596
        %v5108 = vunpack.c.l.b16 %v1597
        %v5109 = vunpack.c.h.b16 %v1597
        %v5110 = vunpack.c.l.b16 %v1598
        %v5111 = vunpack.c.h.b16 %v1598
        %v5112 = vunpack.c.l.b16 %v1599
        %v5113 = vunpack.c.h.b16 %v1599
        %v5114 = vunpack.c.l.b16 %v1600
        %v5115 = vunpack.c.h.b16 %v1600
        %v5116 = vunpack.c.l.b16 %v1601
        %v5117 = vunpack.c.h.b16 %v1601
        %v5118 = vunpack.c.l.b16 %v1602
        %v5119 = vunpack.c.h.b16 %v1602
        %v5120 = vunpack.c.l.b16 %v1603
        %v5121 = vunpack.c.h.b16 %v1603
        %v5122 = vunpack.c.l.b16 %v1604
        %v5123 = vunpack.c.h.b16 %v1604
        %v5124 = vunpack.c.l.b16 %v1605
        %v5125 = vunpack.c.h.b16 %v1605
        %v5126 = vunpack.c.l.b16 %v1606
        %v5127 = vunpack.c.h.b16 %v1606
        %v5128 = vunpack.c.l.b16 %v1607
        %v5129 = vunpack.c.h.b16 %v1607
        %v5130 = vunpack.c.l.b16 %v1608
        %v5131 = vunpack.c.h.b16 %v1608
        %v5132 = vunpack.c.l.b16 %v1609
        %v5133 = vunpack.c.h.b16 %v1609
        %v5134 = vunpack.c.l.b16 %v1610
        %v5135 = vunpack.c.h.b16 %v1610
        %v5136 = vunpack.c.l.b16 %v1611
        %v5137 = vunpack.c.h.b16 %v1611
        %v5138 = vunpack.c.l.b16 %v1612
        %v5139 = vunpack.c.h.b16 %v1612
        %v5140 = vunpack.c.l.b16 %v1613
        %v5141 = vunpack.c.h.b16 %v1613
        %v5142 = vunpack.c.l.b16 %v1614
        %v5143 = vunpack.c.h.b16 %v1614
        %v5144 = vunpack.c.l.b16 %v1615
        %v5145 = vunpack.c.h.b16 %v1615
        %v5146 = vunpack.c.l.b16 %v1616
        %v5147 = vunpack.c.h.b16 %v1616
        %v5148 = vunpack.c.l.b16 %v1617
        %v5149 = vunpack.c.h.b16 %v1617
        %v5150 = vunpack.c.l.b16 %v1618
        %v5151 = vunpack.c.h.b16 %v1618
        %v5152 = vunpack.c.l.b16 %v1619
        %v5153 = vunpack.c.h.b16 %v1619
        %v5154 = vunpack.c.l.b16 %v1620
        %v5155 = vunpack.c.h.b16 %v1620
        %v5156 = vunpack.c.l.b16 %v1621
        %v5157 = vunpack.c.h.b16 %v1621
        %v5158 = vunpack.c.l.b16 %v1622
        %v5159 = vunpack.c.h.b16 %v1622
        %v5160 = vunpack.c.l.b16 %v1623
        %v5161 = vunpack.c.h.b16 %v1623
        %v5162 = vpack.c.b16 %v4910, %v4906
        %v5163 = vpack.c.b16 %v4911, %v4907
        %v5164 = vpack.c.b16 %v4912, %v4908
        %v5165 = vpack.c.b16 %v4913, %v4909
        %v5166 = vpack.c.b16 %v4918, %v4914
        %v5167 = vpack.c.b16 %v4919, %v4915
        %v5168 = vpack.c.b16 %v4920, %v4916
        %v5169 = vpack.c.b16 %v4921, %v4917
        %v5170 = vpack.c.b16 %v4926, %v4922
        %v5171 = vpack.c.b16 %v4927, %v4923
        %v5172 = vpack.c.b16 %v4928, %v4924
        %v5173 = vpack.c.b16 %v4929, %v4925
        %v5174 = vpack.c.b16 %v4934, %v4930
        %v5175 = vpack.c.b16 %v4935, %v4931
        %v5176 = vpack.c.b16 %v4936, %v4932
        %v5177 = vpack.c.b16 %v4937, %v4933
        %v5178 = vpack.c.b16 %v4942, %v4938
        %v5179 = vpack.c.b16 %v4943, %v4939
        %v5180 = vpack.c.b16 %v4944, %v4940
        %v5181 = vpack.c.b16 %v4945, %v4941
        %v5182 = vpack.c.b16 %v4950, %v4946
        %v5183 = vpack.c.b16 %v4951, %v4947
        %v5184 = vpack.c.b16 %v4952, %v4948
        %v5185 = vpack.c.b16 %v4953, %v4949
        %v5186 = vpack.c.b16 %v4958, %v4954
        %v5187 = vpack.c.b16 %v4959, %v4955
        %v5188 = vpack.c.b16 %v4960, %v4956
        %v5189 = vpack.c.b16 %v4961, %v4957
        %v5190 = vpack.c.b16 %v4966, %v4962
        %v5191 = vpack.c.b16 %v4967, %v4963
        %v5192 = vpack.c.b16 %v4968, %v4964
        %v5193 = vpack.c.b16 %v4969, %v4965
        %v5194 = vpack.c.b16 %v4974, %v4970
        %v5195 = vpack.c.b16 %v4975, %v4971
        %v5196 = vpack.c.b16 %v4976, %v4972
        %v5197 = vpack.c.b16 %v4977, %v4973
        %v5198 = vpack.c.b16 %v4982, %v4978
        %v5199 = vpack.c.b16 %v4983, %v4979
        %v5200 = vpack.c.b16 %v4984, %v4980
        %v5201 = vpack.c.b16 %v4985, %v4981
        %v5202 = vpack.c.b16 %v4990, %v4986
        %v5203 = vpack.c.b16 %v4991, %v4987
        %v5204 = vpack.c.b16 %v4992, %v4988
        %v5205 = vpack.c.b16 %v4993, %v4989
        %v5206 = vpack.c.b16 %v4998, %v4994
        %v5207 = vpack.c.b16 %v4999, %v4995
        %v5208 = vpack.c.b16 %v5000, %v4996
        %v5209 = vpack.c.b16 %v5001, %v4997
        %v5210 = vpack.c.b16 %v5006, %v5002
        %v5211 = vpack.c.b16 %v5007, %v5003
        %v5212 = vpack.c.b16 %v5008, %v5004
        %v5213 = vpack.c.b16 %v5009, %v5005
        %v5214 = vpack.c.b16 %v5014, %v5010
        %v5215 = vpack.c.b16 %v5015, %v5011
        %v5216 = vpack.c.b16 %v5016, %v5012
        %v5217 = vpack.c.b16 %v5017, %v5013
        %v5218 = vpack.c.b16 %v5022, %v5018
        %v5219 = vpack.c.b16 %v5023, %v5019
        %v5220 = vpack.c.b16 %v5024, %v5020
        %v5221 = vpack.c.b16 %v5025, %v5021
        %v5222 = vpack.c.b16 %v5030, %v5026
        %v5223 = vpack.c.b16 %v5031, %v5027
        %v5224 = vpack.c.b16 %v5032, %v5028
        %v5225 = vpack.c.b16 %v5033, %v5029
        %v5226 = vpack.c.b16 %v5038, %v5034
        %v5227 = vpack.c.b16 %v5039, %v5035
        %v5228 = vpack.c.b16 %v5040, %v5036
        %v5229 = vpack.c.b16 %v5041, %v5037
        %v5230 = vpack.c.b16 %v5046, %v5042
        %v5231 = vpack.c.b16 %v5047, %v5043
        %v5232 = vpack.c.b16 %v5048, %v5044
        %v5233 = vpack.c.b16 %v5049, %v5045
        %v5234 = vpack.c.b16 %v5054, %v5050
        %v5235 = vpack.c.b16 %v5055, %v5051
        %v5236 = vpack.c.b16 %v5056, %v5052
        %v5237 = vpack.c.b16 %v5057, %v5053
        %v5238 = vpack.c.b16 %v5062, %v5058
        %v5239 = vpack.c.b16 %v5063, %v5059
        %v5240 = vpack.c.b16 %v5064, %v5060
        %v5241 = vpack.c.b16 %v5065, %v5061
        %v5242 = vpack.c.b16 %v5070, %v5066
        %v5243 = vpack.c.b16 %v5071, %v5067
        %v5244 = vpack.c.b16 %v5072, %v5068
        %v5245 = vpack.c.b16 %v5073, %v5069
        %v5246 = vpack.c.b16 %v5078, %v5074
        %v5247 = vpack.c.b16 %v5079, %v5075
        %v5248 = vpack.c.b16 %v5080, %v5076
        %v5249 = vpack.c.b16 %v5081, %v5077
        %v5250 = vpack.c.b16 %v5086, %v5082
        %v5251 = vpack.c.b16 %v5087, %v5083
        %v5252 = vpack.c.b16 %v5088, %v5084
        %v5253 = vpack.c.b16 %v5089, %v5085
        %v5254 = vpack.c.b16 %v5094, %v5090
        %v5255 = vpack.c.b16 %v5095, %v5091
        %v5256 = vpack.c.b16 %v5096, %v5092
        %v5257 = vpack.c.b16 %v5097, %v5093
        %v5258 = vpack.c.b16 %v5102, %v5098
        %v5259 = vpack.c.b16 %v5103, %v5099
        %v5260 = vpack.c.b16 %v5104, %v5100
        %v5261 = vpack.c.b16 %v5105, %v5101
        %v5262 = vpack.c.b16 %v5110, %v5106
        %v5263 = vpack.c.b16 %v5111, %v5107
        %v5264 = vpack.c.b16 %v5112, %v5108
        %v5265 = vpack.c.b16 %v5113, %v5109
        %v5266 = vpack.c.b16 %v5118, %v5114
        %v5267 = vpack.c.b16 %v5119, %v5115
        %v5268 = vpack.c.b16 %v5120, %v5116
        %v5269 = vpack.c.b16 %v5121, %v5117
        %v5270 = vpack.c.b16 %v5126, %v5122
        %v5271 = vpack.c.b16 %v5127, %v5123
        %v5272 = vpack.c.b16 %v5128, %v5124
        %v5273 = vpack.c.b16 %v5129, %v5125
        %v5274 = vpack.c.b16 %v5134, %v5130
        %v5275 = vpack.c.b16 %v5135, %v5131
        %v5276 = vpack.c.b16 %v5136, %v5132
        %v5277 = vpack.c.b16 %v5137, %v5133
        %v5278 = vpack.c.b16 %v5142, %v5138
        %v5279 = vpack.c.b16 %v5143, %v5139
        %v5280 = vpack.c.b16 %v5144, %v5140
        %v5281 = vpack.c.b16 %v5145, %v5141
        %v5282 = vpack.c.b16 %v5150, %v5146
        %v5283 = vpack.c.b16 %v5151, %v5147
        %v5284 = vpack.c.b16 %v5152, %v5148
        %v5285 = vpack.c.b16 %v5153, %v5149
        %v5286 = vpack.c.b16 %v5158, %v5154
        %v5287 = vpack.c.b16 %v5159, %v5155
        %v5288 = vpack.c.b16 %v5160, %v5156
        %v5289 = vpack.c.b16 %v5161, %v5157
        %5418 = vmatpush.bf16.msra.mxu0 %v5190
        %5419 = vmatpush.bf16.msra.mxu0 %v5186
        %5420 = vmatpush.bf16.msra.mxu0 %v5182
        %5421 = vmatpush.bf16.msra.mxu0 %v5178
        %5422 = vmatpush.bf16.msra.mxu0 %v5174
        %5423 = vmatpush.bf16.msra.mxu0 %v5170
        %5424 = vmatpush.bf16.msra.mxu0 %v5166
        %5425 = vmatpush.bf16.msra.mxu0 %v5162
        %5426 = vmatmul.bf16.gmra.mxu0 %v4765
        %v5427 = vpop.f32.mrf.mxu0
        %v5428 = vadd.f32 %v4770, %v5427
        %v5429 = vpop.f32.mrf.mxu0
        %5430 = vdwg.mxu0
        %5431 = vmatpush.bf16.msra.mxu0 %v5222
        %5432 = vmatpush.bf16.msra.mxu0 %v5218
        %5433 = vmatpush.bf16.msra.mxu0 %v5214
        %5434 = vmatpush.bf16.msra.mxu0 %v5210
        %5435 = vmatpush.bf16.msra.mxu0 %v5206
        %5436 = vmatpush.bf16.msra.mxu0 %v5202
        %5437 = vmatpush.bf16.msra.mxu0 %v5198
        %5438 = vmatpush.bf16.msra.mxu0 %v5194
        %5439 = vmatmul.bf16.gmra.mxu0 %v4766
        %v5440 = vpop.f32.mrf.mxu0
        %v5441 = vadd.f32 %v5428, %v5440
        %v5442 = vpop.f32.mrf.mxu0
        %5443 = vdwg.mxu0
        %5444 = vmatpush.bf16.msra.mxu0 %v5254
        %5445 = vmatpush.bf16.msra.mxu0 %v5250
        %5446 = vmatpush.bf16.msra.mxu0 %v5246
        %5447 = vmatpush.bf16.msra.mxu0 %v5242
        %5448 = vmatpush.bf16.msra.mxu0 %v5238
        %5449 = vmatpush.bf16.msra.mxu0 %v5234
        %5450 = vmatpush.bf16.msra.mxu0 %v5230
        %5451 = vmatpush.bf16.msra.mxu0 %v5226
        %5452 = vmatmul.bf16.gmra.mxu0 %v4767
        %v5453 = vpop.f32.mrf.mxu0
        %v5454 = vadd.f32 %v5441, %v5453
        %v5455 = vpop.f32.mrf.mxu0
        %5456 = vdwg.mxu0
        %5457 = vmatpush.bf16.msra.mxu0 %v5286
        %5458 = vmatpush.bf16.msra.mxu0 %v5282
        %5459 = vmatpush.bf16.msra.mxu0 %v5278
        %5460 = vmatpush.bf16.msra.mxu0 %v5274
        %5461 = vmatpush.bf16.msra.mxu0 %v5270
        %5462 = vmatpush.bf16.msra.mxu0 %v5266
        %5463 = vmatpush.bf16.msra.mxu0 %v5262
        %5464 = vmatpush.bf16.msra.mxu0 %v5258
        %5465 = vmatmul.bf16.gmra.mxu0 %v4768
        %v5466 = vpop.f32.mrf.mxu0
        %v5467 = vadd.f32 %v5454, %v5466
        %v5468 = vpop.f32.mrf.mxu0
        %5469 = vdwg.mxu0
        %5470 = vmatpush.bf16.msra.mxu0 %v5191
        %5471 = vmatpush.bf16.msra.mxu0 %v5187
        %5472 = vmatpush.bf16.msra.mxu0 %v5183
        %5473 = vmatpush.bf16.msra.mxu0 %v5179
        %5474 = vmatpush.bf16.msra.mxu0 %v5175
        %5475 = vmatpush.bf16.msra.mxu0 %v5171
        %5476 = vmatpush.bf16.msra.mxu0 %v5167
        %5477 = vmatpush.bf16.msra.mxu0 %v5163
        %5478 = vmatmul.bf16.gmra.mxu0 %v4765
        %v5479 = vpop.f32.mrf.mxu0
        %v5480 = vadd.f32 %v4771, %v5479
        %v5481 = vpop.f32.mrf.mxu0
        %5482 = vdwg.mxu0
        %5483 = vmatpush.bf16.msra.mxu0 %v5223
        %5484 = vmatpush.bf16.msra.mxu0 %v5219
        %5485 = vmatpush.bf16.msra.mxu0 %v5215
        %5486 = vmatpush.bf16.msra.mxu0 %v5211
        %5487 = vmatpush.bf16.msra.mxu0 %v5207
        %5488 = vmatpush.bf16.msra.mxu0 %v5203
        %5489 = vmatpush.bf16.msra.mxu0 %v5199
        %5490 = vmatpush.bf16.msra.mxu0 %v5195
        %5491 = vmatmul.bf16.gmra.mxu0 %v4766
        %v5492 = vpop.f32.mrf.mxu0
        %v5493 = vadd.f32 %v5480, %v5492
        %v5494 = vpop.f32.mrf.mxu0
        %5495 = vdwg.mxu0
        %5496 = vmatpush.bf16.msra.mxu0 %v5255
        %5497 = vmatpush.bf16.msra.mxu0 %v5251
        %5498 = vmatpush.bf16.msra.mxu0 %v5247
        %5499 = vmatpush.bf16.msra.mxu0 %v5243
        %5500 = vmatpush.bf16.msra.mxu0 %v5239
        %5501 = vmatpush.bf16.msra.mxu0 %v5235
        %5502 = vmatpush.bf16.msra.mxu0 %v5231
        %5503 = vmatpush.bf16.msra.mxu0 %v5227
        %5504 = vmatmul.bf16.gmra.mxu0 %v4767
        %v5505 = vpop.f32.mrf.mxu0
        %v5506 = vadd.f32 %v5493, %v5505
        %v5507 = vpop.f32.mrf.mxu0
        %5508 = vdwg.mxu0
        %5509 = vmatpush.bf16.msra.mxu0 %v5287
        %5510 = vmatpush.bf16.msra.mxu0 %v5283
        %5511 = vmatpush.bf16.msra.mxu0 %v5279
        %5512 = vmatpush.bf16.msra.mxu0 %v5275
        %5513 = vmatpush.bf16.msra.mxu0 %v5271
        %5514 = vmatpush.bf16.msra.mxu0 %v5267
        %5515 = vmatpush.bf16.msra.mxu0 %v5263
        %5516 = vmatpush.bf16.msra.mxu0 %v5259
        %5517 = vmatmul.bf16.gmra.mxu0 %v4768
        %v5518 = vpop.f32.mrf.mxu0
        %v5519 = vadd.f32 %v5506, %v5518
        %v5520 = vpop.f32.mrf.mxu0
        %5521 = vdwg.mxu0
        %5522 = vmatpush.bf16.msra.mxu0 %v5192
        %5523 = vmatpush.bf16.msra.mxu0 %v5188
        %5524 = vmatpush.bf16.msra.mxu0 %v5184
        %5525 = vmatpush.bf16.msra.mxu0 %v5180
        %5526 = vmatpush.bf16.msra.mxu0 %v5176
        %5527 = vmatpush.bf16.msra.mxu0 %v5172
        %5528 = vmatpush.bf16.msra.mxu0 %v5168
        %5529 = vmatpush.bf16.msra.mxu0 %v5164
        %5530 = vmatmul.bf16.gmra.mxu0 %v4765
        %v5531 = vpop.f32.mrf.mxu0
        %v5532 = vadd.f32 %v4772, %v5531
        %v5533 = vpop.f32.mrf.mxu0
        %5534 = vdwg.mxu0
        %5535 = vmatpush.bf16.msra.mxu0 %v5224
        %5536 = vmatpush.bf16.msra.mxu0 %v5220
        %5537 = vmatpush.bf16.msra.mxu0 %v5216
        %5538 = vmatpush.bf16.msra.mxu0 %v5212
        %5539 = vmatpush.bf16.msra.mxu0 %v5208
        %5540 = vmatpush.bf16.msra.mxu0 %v5204
        %5541 = vmatpush.bf16.msra.mxu0 %v5200
        %5542 = vmatpush.bf16.msra.mxu0 %v5196
        %5543 = vmatmul.bf16.gmra.mxu0 %v4766
        %v5544 = vpop.f32.mrf.mxu0
        %v5545 = vadd.f32 %v5532, %v5544
        %v5546 = vpop.f32.mrf.mxu0
        %5547 = vdwg.mxu0
        %5548 = vmatpush.bf16.msra.mxu0 %v5256
        %5549 = vmatpush.bf16.msra.mxu0 %v5252
        %5550 = vmatpush.bf16.msra.mxu0 %v5248
        %5551 = vmatpush.bf16.msra.mxu0 %v5244
        %5552 = vmatpush.bf16.msra.mxu0 %v5240
        %5553 = vmatpush.bf16.msra.mxu0 %v5236
        %5554 = vmatpush.bf16.msra.mxu0 %v5232
        %5555 = vmatpush.bf16.msra.mxu0 %v5228
        %5556 = vmatmul.bf16.gmra.mxu0 %v4767
        %v5557 = vpop.f32.mrf.mxu0
        %v5558 = vadd.f32 %v5545, %v5557
        %v5559 = vpop.f32.mrf.mxu0
        %5560 = vdwg.mxu0
        %5561 = vmatpush.bf16.msra.mxu0 %v5288
        %5562 = vmatpush.bf16.msra.mxu0 %v5284
        %5563 = vmatpush.bf16.msra.mxu0 %v5280
        %5564 = vmatpush.bf16.msra.mxu0 %v5276
        %5565 = vmatpush.bf16.msra.mxu0 %v5272
        %5566 = vmatpush.bf16.msra.mxu0 %v5268
        %5567 = vmatpush.bf16.msra.mxu0 %v5264
        %5568 = vmatpush.bf16.msra.mxu0 %v5260
        %5569 = vmatmul.bf16.gmra.mxu0 %v4768
        %v5570 = vpop.f32.mrf.mxu0
        %v5571 = vadd.f32 %v5558, %v5570
        %v5572 = vpop.f32.mrf.mxu0
        %5573 = vdwg.mxu0
        %5574 = vmatpush.bf16.msra.mxu0 %v5193
        %5575 = vmatpush.bf16.msra.mxu0 %v5189
        %5576 = vmatpush.bf16.msra.mxu0 %v5185
        %5577 = vmatpush.bf16.msra.mxu0 %v5181
        %5578 = vmatpush.bf16.msra.mxu0 %v5177
        %5579 = vmatpush.bf16.msra.mxu0 %v5173
        %5580 = vmatpush.bf16.msra.mxu0 %v5169
        %5581 = vmatpush.bf16.msra.mxu0 %v5165
        %5582 = vmatmul.bf16.gmra.mxu0 %v4765
        %v5583 = vpop.f32.mrf.mxu0
        %v5584 = vadd.f32 %v4773, %v5583
        %v5585 = vpop.f32.mrf.mxu0
        %5586 = vdwg.mxu0
        %5587 = vmatpush.bf16.msra.mxu0 %v5225
        %5588 = vmatpush.bf16.msra.mxu0 %v5221
        %5589 = vmatpush.bf16.msra.mxu0 %v5217
        %5590 = vmatpush.bf16.msra.mxu0 %v5213
        %5591 = vmatpush.bf16.msra.mxu0 %v5209
        %5592 = vmatpush.bf16.msra.mxu0 %v5205
        %5593 = vmatpush.bf16.msra.mxu0 %v5201
        %5594 = vmatpush.bf16.msra.mxu0 %v5197
        %5595 = vmatmul.bf16.gmra.mxu0 %v4766
        %v5596 = vpop.f32.mrf.mxu0
        %v5597 = vadd.f32 %v5584, %v5596
        %v5598 = vpop.f32.mrf.mxu0
        %5599 = vdwg.mxu0
        %5600 = vmatpush.bf16.msra.mxu0 %v5257
        %5601 = vmatpush.bf16.msra.mxu0 %v5253
        %5602 = vmatpush.bf16.msra.mxu0 %v5249
        %5603 = vmatpush.bf16.msra.mxu0 %v5245
        %5604 = vmatpush.bf16.msra.mxu0 %v5241
        %5605 = vmatpush.bf16.msra.mxu0 %v5237
        %5606 = vmatpush.bf16.msra.mxu0 %v5233
        %5607 = vmatpush.bf16.msra.mxu0 %v5229
        %5608 = vmatmul.bf16.gmra.mxu0 %v4767
        %v5609 = vpop.f32.mrf.mxu0
        %v5610 = vadd.f32 %v5597, %v5609
        %v5611 = vpop.f32.mrf.mxu0
        %5612 = vdwg.mxu0
        %5613 = vmatpush.bf16.msra.mxu0 %v5289
        %5614 = vmatpush.bf16.msra.mxu0 %v5285
        %5615 = vmatpush.bf16.msra.mxu0 %v5281
        %5616 = vmatpush.bf16.msra.mxu0 %v5277
        %5617 = vmatpush.bf16.msra.mxu0 %v5273
        %5618 = vmatpush.bf16.msra.mxu0 %v5269
        %5619 = vmatpush.bf16.msra.mxu0 %v5265
        %5620 = vmatpush.bf16.msra.mxu0 %v5261
        %5621 = vmatmul.bf16.gmra.mxu0 %v4768
        %v5622 = vpop.f32.mrf.mxu0
        %v5623 = vadd.f32 %v5610, %v5622
        %v5624 = vpop.f32.mrf.mxu0
        %5625 = vdwg.mxu0
        %vm5626 = vcmp.gt.f32.partialorder %v5467, 0.0
        %vm5627 = vcmp.gt.f32.partialorder %v5519, 0.0
        %vm5628 = vcmp.gt.f32.partialorder %v5571, 0.0
        %vm5629 = vcmp.gt.f32.partialorder %v5623, 0.0
        %v5630 = vmul.f32 %v5467, 0.5
        %v5631 = vmul.f32 %v5519, 0.5
        %v5632 = vmul.f32 %v5571, 0.5
        %v5633 = vmul.f32 %v5623, 0.5
        %v5634 = vsel %vm5626, %v5467, %v5630
        %v5635 = vsel %vm5627, %v5519, %v5631
        %v5636 = vsel %vm5628, %v5571, %v5632
        %v5637 = vsel %vm5629, %v5623, %v5633
        %v5638 = vpack.c.bf16 %v5634, %v5634
        %v5639 = vpack.c.bf16 %v5635, %v5635
        %v5640 = vpack.c.bf16 %v5636, %v5636
        %v5641 = vpack.c.bf16 %v5637, %v5637
        %v5643 = vperm.slane %v1753, 0
        %v5644 = vperm.slane %v1753, 1
        %v5645 = vperm.slane %v1753, 2
        %v5646 = vperm.slane %v1753, 3
        %v5779 = vunpack.c.l.b16 %v1625
        %v5780 = vunpack.c.h.b16 %v1625
        %v5781 = vunpack.c.l.b16 %v1626
        %v5782 = vunpack.c.h.b16 %v1626
        %v5783 = vunpack.c.l.b16 %v1627
        %v5784 = vunpack.c.h.b16 %v1627
        %v5785 = vunpack.c.l.b16 %v1628
        %v5786 = vunpack.c.h.b16 %v1628
        %v5787 = vunpack.c.l.b16 %v1629
        %v5788 = vunpack.c.h.b16 %v1629
        %v5789 = vunpack.c.l.b16 %v1630
        %v5790 = vunpack.c.h.b16 %v1630
        %v5791 = vunpack.c.l.b16 %v1631
        %v5792 = vunpack.c.h.b16 %v1631
        %v5793 = vunpack.c.l.b16 %v1632
        %v5794 = vunpack.c.h.b16 %v1632
        %v5795 = vunpack.c.l.b16 %v1633
        %v5796 = vunpack.c.h.b16 %v1633
        %v5797 = vunpack.c.l.b16 %v1634
        %v5798 = vunpack.c.h.b16 %v1634
        %v5799 = vunpack.c.l.b16 %v1635
        %v5800 = vunpack.c.h.b16 %v1635
        %v5801 = vunpack.c.l.b16 %v1636
        %v5802 = vunpack.c.h.b16 %v1636
        %v5803 = vunpack.c.l.b16 %v1637
        %v5804 = vunpack.c.h.b16 %v1637
        %v5805 = vunpack.c.l.b16 %v1638
        %v5806 = vunpack.c.h.b16 %v1638
        %v5807 = vunpack.c.l.b16 %v1639
        %v5808 = vunpack.c.h.b16 %v1639
        %v5809 = vunpack.c.l.b16 %v1640
        %v5810 = vunpack.c.h.b16 %v1640
        %v5811 = vunpack.c.l.b16 %v1641
        %v5812 = vunpack.c.h.b16 %v1641
        %v5813 = vunpack.c.l.b16 %v1642
        %v5814 = vunpack.c.h.b16 %v1642
        %v5815 = vunpack.c.l.b16 %v1643
        %v5816 = vunpack.c.h.b16 %v1643
        %v5817 = vunpack.c.l.b16 %v1644
        %v5818 = vunpack.c.h.b16 %v1644
        %v5819 = vunpack.c.l.b16 %v1645
        %v5820 = vunpack.c.h.b16 %v1645
        %v5821 = vunpack.c.l.b16 %v1646
        %v5822 = vunpack.c.h.b16 %v1646
        %v5823 = vunpack.c.l.b16 %v1647
        %v5824 = vunpack.c.h.b16 %v1647
        %v5825 = vunpack.c.l.b16 %v1648
        %v5826 = vunpack.c.h.b16 %v1648
        %v5827 = vunpack.c.l.b16 %v1649
        %v5828 = vunpack.c.h.b16 %v1649
        %v5829 = vunpack.c.l.b16 %v1650
        %v5830 = vunpack.c.h.b16 %v1650
        %v5831 = vunpack.c.l.b16 %v1651
        %v5832 = vunpack.c.h.b16 %v1651
        %v5833 = vunpack.c.l.b16 %v1652
        %v5834 = vunpack.c.h.b16 %v1652
        %v5835 = vunpack.c.l.b16 %v1653
        %v5836 = vunpack.c.h.b16 %v1653
        %v5837 = vunpack.c.l.b16 %v1654
        %v5838 = vunpack.c.h.b16 %v1654
        %v5839 = vunpack.c.l.b16 %v1655
        %v5840 = vunpack.c.h.b16 %v1655
        %v5841 = vunpack.c.l.b16 %v1656
        %v5842 = vunpack.c.h.b16 %v1656
        %v5843 = vunpack.c.l.b16 %v1657
        %v5844 = vunpack.c.h.b16 %v1657
        %v5845 = vunpack.c.l.b16 %v1658
        %v5846 = vunpack.c.h.b16 %v1658
        %v5847 = vunpack.c.l.b16 %v1659
        %v5848 = vunpack.c.h.b16 %v1659
        %v5849 = vunpack.c.l.b16 %v1660
        %v5850 = vunpack.c.h.b16 %v1660
        %v5851 = vunpack.c.l.b16 %v1661
        %v5852 = vunpack.c.h.b16 %v1661
        %v5853 = vunpack.c.l.b16 %v1662
        %v5854 = vunpack.c.h.b16 %v1662
        %v5855 = vunpack.c.l.b16 %v1663
        %v5856 = vunpack.c.h.b16 %v1663
        %v5857 = vunpack.c.l.b16 %v1664
        %v5858 = vunpack.c.h.b16 %v1664
        %v5859 = vunpack.c.l.b16 %v1665
        %v5860 = vunpack.c.h.b16 %v1665
        %v5861 = vunpack.c.l.b16 %v1666
        %v5862 = vunpack.c.h.b16 %v1666
        %v5863 = vunpack.c.l.b16 %v1667
        %v5864 = vunpack.c.h.b16 %v1667
        %v5865 = vunpack.c.l.b16 %v1668
        %v5866 = vunpack.c.h.b16 %v1668
        %v5867 = vunpack.c.l.b16 %v1669
        %v5868 = vunpack.c.h.b16 %v1669
        %v5869 = vunpack.c.l.b16 %v1670
        %v5870 = vunpack.c.h.b16 %v1670
        %v5871 = vunpack.c.l.b16 %v1671
        %v5872 = vunpack.c.h.b16 %v1671
        %v5873 = vunpack.c.l.b16 %v1672
        %v5874 = vunpack.c.h.b16 %v1672
        %v5875 = vunpack.c.l.b16 %v1673
        %v5876 = vunpack.c.h.b16 %v1673
        %v5877 = vunpack.c.l.b16 %v1674
        %v5878 = vunpack.c.h.b16 %v1674
        %v5879 = vunpack.c.l.b16 %v1675
        %v5880 = vunpack.c.h.b16 %v1675
        %v5881 = vunpack.c.l.b16 %v1676
        %v5882 = vunpack.c.h.b16 %v1676
        %v5883 = vunpack.c.l.b16 %v1677
        %v5884 = vunpack.c.h.b16 %v1677
        %v5885 = vunpack.c.l.b16 %v1678
        %v5886 = vunpack.c.h.b16 %v1678
        %v5887 = vunpack.c.l.b16 %v1679
        %v5888 = vunpack.c.h.b16 %v1679
        %v5889 = vunpack.c.l.b16 %v1680
        %v5890 = vunpack.c.h.b16 %v1680
        %v5891 = vunpack.c.l.b16 %v1681
        %v5892 = vunpack.c.h.b16 %v1681
        %v5893 = vunpack.c.l.b16 %v1682
        %v5894 = vunpack.c.h.b16 %v1682
        %v5895 = vunpack.c.l.b16 %v1683
        %v5896 = vunpack.c.h.b16 %v1683
        %v5897 = vunpack.c.l.b16 %v1684
        %v5898 = vunpack.c.h.b16 %v1684
        %v5899 = vunpack.c.l.b16 %v1685
        %v5900 = vunpack.c.h.b16 %v1685
        %v5901 = vunpack.c.l.b16 %v1686
        %v5902 = vunpack.c.h.b16 %v1686
        %v5903 = vunpack.c.l.b16 %v1687
        %v5904 = vunpack.c.h.b16 %v1687
        %v5905 = vunpack.c.l.b16 %v1688
        %v5906 = vunpack.c.h.b16 %v1688
        %v5907 = vunpack.c.l.b16 %v1689
        %v5908 = vunpack.c.h.b16 %v1689
        %v5909 = vunpack.c.l.b16 %v1690
        %v5910 = vunpack.c.h.b16 %v1690
        %v5911 = vunpack.c.l.b16 %v1691
        %v5912 = vunpack.c.h.b16 %v1691
        %v5913 = vunpack.c.l.b16 %v1692
        %v5914 = vunpack.c.h.b16 %v1692
        %v5915 = vunpack.c.l.b16 %v1693
        %v5916 = vunpack.c.h.b16 %v1693
        %v5917 = vunpack.c.l.b16 %v1694
        %v5918 = vunpack.c.h.b16 %v1694
        %v5919 = vunpack.c.l.b16 %v1695
        %v5920 = vunpack.c.h.b16 %v1695
        %v5921 = vunpack.c.l.b16 %v1696
        %v5922 = vunpack.c.h.b16 %v1696
        %v5923 = vunpack.c.l.b16 %v1697
        %v5924 = vunpack.c.h.b16 %v1697
        %v5925 = vunpack.c.l.b16 %v1698
        %v5926 = vunpack.c.h.b16 %v1698
        %v5927 = vunpack.c.l.b16 %v1699
        %v5928 = vunpack.c.h.b16 %v1699
        %v5929 = vunpack.c.l.b16 %v1700
        %v5930 = vunpack.c.h.b16 %v1700
        %v5931 = vunpack.c.l.b16 %v1701
        %v5932 = vunpack.c.h.b16 %v1701
        %v5933 = vunpack.c.l.b16 %v1702
        %v5934 = vunpack.c.h.b16 %v1702
        %v5935 = vunpack.c.l.b16 %v1703
        %v5936 = vunpack.c.h.b16 %v1703
        %v5937 = vunpack.c.l.b16 %v1704
        %v5938 = vunpack.c.h.b16 %v1704
        %v5939 = vunpack.c.l.b16 %v1705
        %v5940 = vunpack.c.h.b16 %v1705
        %v5941 = vunpack.c.l.b16 %v1706
        %v5942 = vunpack.c.h.b16 %v1706
        %v5943 = vunpack.c.l.b16 %v1707
        %v5944 = vunpack.c.h.b16 %v1707
        %v5945 = vunpack.c.l.b16 %v1708
        %v5946 = vunpack.c.h.b16 %v1708
        %v5947 = vunpack.c.l.b16 %v1709
        %v5948 = vunpack.c.h.b16 %v1709
        %v5949 = vunpack.c.l.b16 %v1710
        %v5950 = vunpack.c.h.b16 %v1710
        %v5951 = vunpack.c.l.b16 %v1711
        %v5952 = vunpack.c.h.b16 %v1711
        %v5953 = vunpack.c.l.b16 %v1712
        %v5954 = vunpack.c.h.b16 %v1712
        %v5955 = vunpack.c.l.b16 %v1713
        %v5956 = vunpack.c.h.b16 %v1713
        %v5957 = vunpack.c.l.b16 %v1714
        %v5958 = vunpack.c.h.b16 %v1714
        %v5959 = vunpack.c.l.b16 %v1715
        %v5960 = vunpack.c.h.b16 %v1715
        %v5961 = vunpack.c.l.b16 %v1716
        %v5962 = vunpack.c.h.b16 %v1716
        %v5963 = vunpack.c.l.b16 %v1717
        %v5964 = vunpack.c.h.b16 %v1717
        %v5965 = vunpack.c.l.b16 %v1718
        %v5966 = vunpack.c.h.b16 %v1718
        %v5967 = vunpack.c.l.b16 %v1719
        %v5968 = vunpack.c.h.b16 %v1719
        %v5969 = vunpack.c.l.b16 %v1720
        %v5970 = vunpack.c.h.b16 %v1720
        %v5971 = vunpack.c.l.b16 %v1721
        %v5972 = vunpack.c.h.b16 %v1721
        %v5973 = vunpack.c.l.b16 %v1722
        %v5974 = vunpack.c.h.b16 %v1722
        %v5975 = vunpack.c.l.b16 %v1723
        %v5976 = vunpack.c.h.b16 %v1723
        %v5977 = vunpack.c.l.b16 %v1724
        %v5978 = vunpack.c.h.b16 %v1724
        %v5979 = vunpack.c.l.b16 %v1725
        %v5980 = vunpack.c.h.b16 %v1725
        %v5981 = vunpack.c.l.b16 %v1726
        %v5982 = vunpack.c.h.b16 %v1726
        %v5983 = vunpack.c.l.b16 %v1727
        %v5984 = vunpack.c.h.b16 %v1727
        %v5985 = vunpack.c.l.b16 %v1728
        %v5986 = vunpack.c.h.b16 %v1728
        %v5987 = vunpack.c.l.b16 %v1729
        %v5988 = vunpack.c.h.b16 %v1729
        %v5989 = vunpack.c.l.b16 %v1730
        %v5990 = vunpack.c.h.b16 %v1730
        %v5991 = vunpack.c.l.b16 %v1731
        %v5992 = vunpack.c.h.b16 %v1731
        %v5993 = vunpack.c.l.b16 %v1732
        %v5994 = vunpack.c.h.b16 %v1732
        %v5995 = vunpack.c.l.b16 %v1733
        %v5996 = vunpack.c.h.b16 %v1733
        %v5997 = vunpack.c.l.b16 %v1734
        %v5998 = vunpack.c.h.b16 %v1734
        %v5999 = vunpack.c.l.b16 %v1735
        %v6000 = vunpack.c.h.b16 %v1735
        %v6001 = vunpack.c.l.b16 %v1736
        %v6002 = vunpack.c.h.b16 %v1736
        %v6003 = vunpack.c.l.b16 %v1737
        %v6004 = vunpack.c.h.b16 %v1737
        %v6005 = vunpack.c.l.b16 %v1738
        %v6006 = vunpack.c.h.b16 %v1738
        %v6007 = vunpack.c.l.b16 %v1739
        %v6008 = vunpack.c.h.b16 %v1739
        %v6009 = vunpack.c.l.b16 %v1740
        %v6010 = vunpack.c.h.b16 %v1740
        %v6011 = vunpack.c.l.b16 %v1741
        %v6012 = vunpack.c.h.b16 %v1741
        %v6013 = vunpack.c.l.b16 %v1742
        %v6014 = vunpack.c.h.b16 %v1742
        %v6015 = vunpack.c.l.b16 %v1743
        %v6016 = vunpack.c.h.b16 %v1743
        %v6017 = vunpack.c.l.b16 %v1744
        %v6018 = vunpack.c.h.b16 %v1744
        %v6019 = vunpack.c.l.b16 %v1745
        %v6020 = vunpack.c.h.b16 %v1745
        %v6021 = vunpack.c.l.b16 %v1746
        %v6022 = vunpack.c.h.b16 %v1746
        %v6023 = vunpack.c.l.b16 %v1747
        %v6024 = vunpack.c.h.b16 %v1747
        %v6025 = vunpack.c.l.b16 %v1748
        %v6026 = vunpack.c.h.b16 %v1748
        %v6027 = vunpack.c.l.b16 %v1749
        %v6028 = vunpack.c.h.b16 %v1749
        %v6029 = vunpack.c.l.b16 %v1750
        %v6030 = vunpack.c.h.b16 %v1750
        %v6031 = vunpack.c.l.b16 %v1751
        %v6032 = vunpack.c.h.b16 %v1751
        %v6033 = vunpack.c.l.b16 %v1752
        %v6034 = vunpack.c.h.b16 %v1752
        %v6035 = vpack.c.b16 %v5783, %v5779
        %v6036 = vpack.c.b16 %v5784, %v5780
        %v6037 = vpack.c.b16 %v5785, %v5781
        %v6038 = vpack.c.b16 %v5786, %v5782
        %v6039 = vpack.c.b16 %v5791, %v5787
        %v6040 = vpack.c.b16 %v5792, %v5788
        %v6041 = vpack.c.b16 %v5793, %v5789
        %v6042 = vpack.c.b16 %v5794, %v5790
        %v6043 = vpack.c.b16 %v5799, %v5795
        %v6044 = vpack.c.b16 %v5800, %v5796
        %v6045 = vpack.c.b16 %v5801, %v5797
        %v6046 = vpack.c.b16 %v5802, %v5798
        %v6047 = vpack.c.b16 %v5807, %v5803
        %v6048 = vpack.c.b16 %v5808, %v5804
        %v6049 = vpack.c.b16 %v5809, %v5805
        %v6050 = vpack.c.b16 %v5810, %v5806
        %v6051 = vpack.c.b16 %v5815, %v5811
        %v6052 = vpack.c.b16 %v5816, %v5812
        %v6053 = vpack.c.b16 %v5817, %v5813
        %v6054 = vpack.c.b16 %v5818, %v5814
        %v6055 = vpack.c.b16 %v5823, %v5819
        %v6056 = vpack.c.b16 %v5824, %v5820
        %v6057 = vpack.c.b16 %v5825, %v5821
        %v6058 = vpack.c.b16 %v5826, %v5822
        %v6059 = vpack.c.b16 %v5831, %v5827
        %v6060 = vpack.c.b16 %v5832, %v5828
        %v6061 = vpack.c.b16 %v5833, %v5829
        %v6062 = vpack.c.b16 %v5834, %v5830
        %v6063 = vpack.c.b16 %v5839, %v5835
        %v6064 = vpack.c.b16 %v5840, %v5836
        %v6065 = vpack.c.b16 %v5841, %v5837
        %v6066 = vpack.c.b16 %v5842, %v5838
        %v6067 = vpack.c.b16 %v5847, %v5843
        %v6068 = vpack.c.b16 %v5848, %v5844
        %v6069 = vpack.c.b16 %v5849, %v5845
        %v6070 = vpack.c.b16 %v5850, %v5846
        %v6071 = vpack.c.b16 %v5855, %v5851
        %v6072 = vpack.c.b16 %v5856, %v5852
        %v6073 = vpack.c.b16 %v5857, %v5853
        %v6074 = vpack.c.b16 %v5858, %v5854
        %v6075 = vpack.c.b16 %v5863, %v5859
        %v6076 = vpack.c.b16 %v5864, %v5860
        %v6077 = vpack.c.b16 %v5865, %v5861
        %v6078 = vpack.c.b16 %v5866, %v5862
        %v6079 = vpack.c.b16 %v5871, %v5867
        %v6080 = vpack.c.b16 %v5872, %v5868
        %v6081 = vpack.c.b16 %v5873, %v5869
        %v6082 = vpack.c.b16 %v5874, %v5870
        %v6083 = vpack.c.b16 %v5879, %v5875
        %v6084 = vpack.c.b16 %v5880, %v5876
        %v6085 = vpack.c.b16 %v5881, %v5877
        %v6086 = vpack.c.b16 %v5882, %v5878
        %v6087 = vpack.c.b16 %v5887, %v5883
        %v6088 = vpack.c.b16 %v5888, %v5884
        %v6089 = vpack.c.b16 %v5889, %v5885
        %v6090 = vpack.c.b16 %v5890, %v5886
        %v6091 = vpack.c.b16 %v5895, %v5891
        %v6092 = vpack.c.b16 %v5896, %v5892
        %v6093 = vpack.c.b16 %v5897, %v5893
        %v6094 = vpack.c.b16 %v5898, %v5894
        %v6095 = vpack.c.b16 %v5903, %v5899
        %v6096 = vpack.c.b16 %v5904, %v5900
        %v6097 = vpack.c.b16 %v5905, %v5901
        %v6098 = vpack.c.b16 %v5906, %v5902
        %v6099 = vpack.c.b16 %v5911, %v5907
        %v6100 = vpack.c.b16 %v5912, %v5908
        %v6101 = vpack.c.b16 %v5913, %v5909
        %v6102 = vpack.c.b16 %v5914, %v5910
        %v6103 = vpack.c.b16 %v5919, %v5915
        %v6104 = vpack.c.b16 %v5920, %v5916
        %v6105 = vpack.c.b16 %v5921, %v5917
        %v6106 = vpack.c.b16 %v5922, %v5918
        %v6107 = vpack.c.b16 %v5927, %v5923
        %v6108 = vpack.c.b16 %v5928, %v5924
        %v6109 = vpack.c.b16 %v5929, %v5925
        %v6110 = vpack.c.b16 %v5930, %v5926
        %v6111 = vpack.c.b16 %v5935, %v5931
        %v6112 = vpack.c.b16 %v5936, %v5932
        %v6113 = vpack.c.b16 %v5937, %v5933
        %v6114 = vpack.c.b16 %v5938, %v5934
        %v6115 = vpack.c.b16 %v5943, %v5939
        %v6116 = vpack.c.b16 %v5944, %v5940
        %v6117 = vpack.c.b16 %v5945, %v5941
        %v6118 = vpack.c.b16 %v5946, %v5942
        %v6119 = vpack.c.b16 %v5951, %v5947
        %v6120 = vpack.c.b16 %v5952, %v5948
        %v6121 = vpack.c.b16 %v5953, %v5949
        %v6122 = vpack.c.b16 %v5954, %v5950
        %v6123 = vpack.c.b16 %v5959, %v5955
        %v6124 = vpack.c.b16 %v5960, %v5956
        %v6125 = vpack.c.b16 %v5961, %v5957
        %v6126 = vpack.c.b16 %v5962, %v5958
        %v6127 = vpack.c.b16 %v5967, %v5963
        %v6128 = vpack.c.b16 %v5968, %v5964
        %v6129 = vpack.c.b16 %v5969, %v5965
        %v6130 = vpack.c.b16 %v5970, %v5966
        %v6131 = vpack.c.b16 %v5975, %v5971
        %v6132 = vpack.c.b16 %v5976, %v5972
        %v6133 = vpack.c.b16 %v5977, %v5973
        %v6134 = vpack.c.b16 %v5978, %v5974
        %v6135 = vpack.c.b16 %v5983, %v5979
        %v6136 = vpack.c.b16 %v5984, %v5980
        %v6137 = vpack.c.b16 %v5985, %v5981
        %v6138 = vpack.c.b16 %v5986, %v5982
        %v6139 = vpack.c.b16 %v5991, %v5987
        %v6140 = vpack.c.b16 %v5992, %v5988
        %v6141 = vpack.c.b16 %v5993, %v5989
        %v6142 = vpack.c.b16 %v5994, %v5990
        %v6143 = vpack.c.b16 %v5999, %v5995
        %v6144 = vpack.c.b16 %v6000, %v5996
        %v6145 = vpack.c.b16 %v6001, %v5997
        %v6146 = vpack.c.b16 %v6002, %v5998
        %v6147 = vpack.c.b16 %v6007, %v6003
        %v6148 = vpack.c.b16 %v6008, %v6004
        %v6149 = vpack.c.b16 %v6009, %v6005
        %v6150 = vpack.c.b16 %v6010, %v6006
        %v6151 = vpack.c.b16 %v6015, %v6011
        %v6152 = vpack.c.b16 %v6016, %v6012
        %v6153 = vpack.c.b16 %v6017, %v6013
        %v6154 = vpack.c.b16 %v6018, %v6014
        %v6155 = vpack.c.b16 %v6023, %v6019
        %v6156 = vpack.c.b16 %v6024, %v6020
        %v6157 = vpack.c.b16 %v6025, %v6021
        %v6158 = vpack.c.b16 %v6026, %v6022
        %v6159 = vpack.c.b16 %v6031, %v6027
        %v6160 = vpack.c.b16 %v6032, %v6028
        %v6161 = vpack.c.b16 %v6033, %v6029
        %v6162 = vpack.c.b16 %v6034, %v6030
        %6291 = vmatpush.bf16.msra.mxu0 %v6063
        %6292 = vmatpush.bf16.msra.mxu0 %v6059
        %6293 = vmatpush.bf16.msra.mxu0 %v6055
        %6294 = vmatpush.bf16.msra.mxu0 %v6051
        %6295 = vmatpush.bf16.msra.mxu0 %v6047
        %6296 = vmatpush.bf16.msra.mxu0 %v6043
        %6297 = vmatpush.bf16.msra.mxu0 %v6039
        %6298 = vmatpush.bf16.msra.mxu0 %v6035
        %6299 = vmatmul.bf16.gmra.mxu0 %v5638
        %v6300 = vpop.f32.mrf.mxu0
        %v6301 = vadd.f32 %v5643, %v6300
        %v6302 = vpop.f32.mrf.mxu0
        %6303 = vdwg.mxu0
        %6304 = vmatpush.bf16.msra.mxu0 %v6095
        %6305 = vmatpush.bf16.msra.mxu0 %v6091
        %6306 = vmatpush.bf16.msra.mxu0 %v6087
        %6307 = vmatpush.bf16.msra.mxu0 %v6083
        %6308 = vmatpush.bf16.msra.mxu0 %v6079
        %6309 = vmatpush.bf16.msra.mxu0 %v6075
        %6310 = vmatpush.bf16.msra.mxu0 %v6071
        %6311 = vmatpush.bf16.msra.mxu0 %v6067
        %6312 = vmatmul.bf16.gmra.mxu0 %v5639
        %v6313 = vpop.f32.mrf.mxu0
        %v6314 = vadd.f32 %v6301, %v6313
        %v6315 = vpop.f32.mrf.mxu0
        %6316 = vdwg.mxu0
        %6317 = vmatpush.bf16.msra.mxu0 %v6127
        %6318 = vmatpush.bf16.msra.mxu0 %v6123
        %6319 = vmatpush.bf16.msra.mxu0 %v6119
        %6320 = vmatpush.bf16.msra.mxu0 %v6115
        %6321 = vmatpush.bf16.msra.mxu0 %v6111
        %6322 = vmatpush.bf16.msra.mxu0 %v6107
        %6323 = vmatpush.bf16.msra.mxu0 %v6103
        %6324 = vmatpush.bf16.msra.mxu0 %v6099
        %6325 = vmatmul.bf16.gmra.mxu0 %v5640
        %v6326 = vpop.f32.mrf.mxu0
        %v6327 = vadd.f32 %v6314, %v6326
        %v6328 = vpop.f32.mrf.mxu0
        %6329 = vdwg.mxu0
        %6330 = vmatpush.bf16.msra.mxu0 %v6159
        %6331 = vmatpush.bf16.msra.mxu0 %v6155
        %6332 = vmatpush.bf16.msra.mxu0 %v6151
        %6333 = vmatpush.bf16.msra.mxu0 %v6147
        %6334 = vmatpush.bf16.msra.mxu0 %v6143
        %6335 = vmatpush.bf16.msra.mxu0 %v6139
        %6336 = vmatpush.bf16.msra.mxu0 %v6135
        %6337 = vmatpush.bf16.msra.mxu0 %v6131
        %6338 = vmatmul.bf16.gmra.mxu0 %v5641
        %v6339 = vpop.f32.mrf.mxu0
        %v6340 = vadd.f32 %v6327, %v6339
        %v6341 = vpop.f32.mrf.mxu0
        %6342 = vdwg.mxu0
        %6343 = vmatpush.bf16.msra.mxu0 %v6064
        %6344 = vmatpush.bf16.msra.mxu0 %v6060
        %6345 = vmatpush.bf16.msra.mxu0 %v6056
        %6346 = vmatpush.bf16.msra.mxu0 %v6052
        %6347 = vmatpush.bf16.msra.mxu0 %v6048
        %6348 = vmatpush.bf16.msra.mxu0 %v6044
        %6349 = vmatpush.bf16.msra.mxu0 %v6040
        %6350 = vmatpush.bf16.msra.mxu0 %v6036
        %6351 = vmatmul.bf16.gmra.mxu0 %v5638
        %v6352 = vpop.f32.mrf.mxu0
        %v6353 = vadd.f32 %v5644, %v6352
        %v6354 = vpop.f32.mrf.mxu0
        %6355 = vdwg.mxu0
        %6356 = vmatpush.bf16.msra.mxu0 %v6096
        %6357 = vmatpush.bf16.msra.mxu0 %v6092
        %6358 = vmatpush.bf16.msra.mxu0 %v6088
        %6359 = vmatpush.bf16.msra.mxu0 %v6084
        %6360 = vmatpush.bf16.msra.mxu0 %v6080
        %6361 = vmatpush.bf16.msra.mxu0 %v6076
        %6362 = vmatpush.bf16.msra.mxu0 %v6072
        %6363 = vmatpush.bf16.msra.mxu0 %v6068
        %6364 = vmatmul.bf16.gmra.mxu0 %v5639
        %v6365 = vpop.f32.mrf.mxu0
        %v6366 = vadd.f32 %v6353, %v6365
        %v6367 = vpop.f32.mrf.mxu0
        %6368 = vdwg.mxu0
        %6369 = vmatpush.bf16.msra.mxu0 %v6128
        %6370 = vmatpush.bf16.msra.mxu0 %v6124
        %6371 = vmatpush.bf16.msra.mxu0 %v6120
        %6372 = vmatpush.bf16.msra.mxu0 %v6116
        %6373 = vmatpush.bf16.msra.mxu0 %v6112
        %6374 = vmatpush.bf16.msra.mxu0 %v6108
        %6375 = vmatpush.bf16.msra.mxu0 %v6104
        %6376 = vmatpush.bf16.msra.mxu0 %v6100
        %6377 = vmatmul.bf16.gmra.mxu0 %v5640
        %v6378 = vpop.f32.mrf.mxu0
        %v6379 = vadd.f32 %v6366, %v6378
        %v6380 = vpop.f32.mrf.mxu0
        %6381 = vdwg.mxu0
        %6382 = vmatpush.bf16.msra.mxu0 %v6160
        %6383 = vmatpush.bf16.msra.mxu0 %v6156
        %6384 = vmatpush.bf16.msra.mxu0 %v6152
        %6385 = vmatpush.bf16.msra.mxu0 %v6148
        %6386 = vmatpush.bf16.msra.mxu0 %v6144
        %6387 = vmatpush.bf16.msra.mxu0 %v6140
        %6388 = vmatpush.bf16.msra.mxu0 %v6136
        %6389 = vmatpush.bf16.msra.mxu0 %v6132
        %6390 = vmatmul.bf16.gmra.mxu0 %v5641
        %v6391 = vpop.f32.mrf.mxu0
        %v6392 = vadd.f32 %v6379, %v6391
        %v6393 = vpop.f32.mrf.mxu0
        %6394 = vdwg.mxu0
        %6395 = vmatpush.bf16.msra.mxu0 %v6065
        %6396 = vmatpush.bf16.msra.mxu0 %v6061
        %6397 = vmatpush.bf16.msra.mxu0 %v6057
        %6398 = vmatpush.bf16.msra.mxu0 %v6053
        %6399 = vmatpush.bf16.msra.mxu0 %v6049
        %6400 = vmatpush.bf16.msra.mxu0 %v6045
        %6401 = vmatpush.bf16.msra.mxu0 %v6041
        %6402 = vmatpush.bf16.msra.mxu0 %v6037
        %6403 = vmatmul.bf16.gmra.mxu0 %v5638
        %v6404 = vpop.f32.mrf.mxu0
        %v6405 = vadd.f32 %v5645, %v6404
        %v6406 = vpop.f32.mrf.mxu0
        %6407 = vdwg.mxu0
        %6408 = vmatpush.bf16.msra.mxu0 %v6097
        %6409 = vmatpush.bf16.msra.mxu0 %v6093
        %6410 = vmatpush.bf16.msra.mxu0 %v6089
        %6411 = vmatpush.bf16.msra.mxu0 %v6085
        %6412 = vmatpush.bf16.msra.mxu0 %v6081
        %6413 = vmatpush.bf16.msra.mxu0 %v6077
        %6414 = vmatpush.bf16.msra.mxu0 %v6073
        %6415 = vmatpush.bf16.msra.mxu0 %v6069
        %6416 = vmatmul.bf16.gmra.mxu0 %v5639
        %v6417 = vpop.f32.mrf.mxu0
        %v6418 = vadd.f32 %v6405, %v6417
        %v6419 = vpop.f32.mrf.mxu0
        %6420 = vdwg.mxu0
        %6421 = vmatpush.bf16.msra.mxu0 %v6129
        %6422 = vmatpush.bf16.msra.mxu0 %v6125
        %6423 = vmatpush.bf16.msra.mxu0 %v6121
        %6424 = vmatpush.bf16.msra.mxu0 %v6117
        %6425 = vmatpush.bf16.msra.mxu0 %v6113
        %6426 = vmatpush.bf16.msra.mxu0 %v6109
        %6427 = vmatpush.bf16.msra.mxu0 %v6105
        %6428 = vmatpush.bf16.msra.mxu0 %v6101
        %6429 = vmatmul.bf16.gmra.mxu0 %v5640
        %v6430 = vpop.f32.mrf.mxu0
        %v6431 = vadd.f32 %v6418, %v6430
        %v6432 = vpop.f32.mrf.mxu0
        %6433 = vdwg.mxu0
        %6434 = vmatpush.bf16.msra.mxu0 %v6161
        %6435 = vmatpush.bf16.msra.mxu0 %v6157
        %6436 = vmatpush.bf16.msra.mxu0 %v6153
        %6437 = vmatpush.bf16.msra.mxu0 %v6149
        %6438 = vmatpush.bf16.msra.mxu0 %v6145
        %6439 = vmatpush.bf16.msra.mxu0 %v6141
        %6440 = vmatpush.bf16.msra.mxu0 %v6137
        %6441 = vmatpush.bf16.msra.mxu0 %v6133
        %6442 = vmatmul.bf16.gmra.mxu0 %v5641
        %v6443 = vpop.f32.mrf.mxu0
        %v6444 = vadd.f32 %v6431, %v6443
        %v6445 = vpop.f32.mrf.mxu0
        %6446 = vdwg.mxu0
        %6447 = vmatpush.bf16.msra.mxu0 %v6066
        %6448 = vmatpush.bf16.msra.mxu0 %v6062
        %6449 = vmatpush.bf16.msra.mxu0 %v6058
        %6450 = vmatpush.bf16.msra.mxu0 %v6054
        %6451 = vmatpush.bf16.msra.mxu0 %v6050
        %6452 = vmatpush.bf16.msra.mxu0 %v6046
        %6453 = vmatpush.bf16.msra.mxu0 %v6042
        %6454 = vmatpush.bf16.msra.mxu0 %v6038
        %6455 = vmatmul.bf16.gmra.mxu0 %v5638
        %v6456 = vpop.f32.mrf.mxu0
        %v6457 = vadd.f32 %v5646, %v6456
        %v6458 = vpop.f32.mrf.mxu0
        %6459 = vdwg.mxu0
        %6460 = vmatpush.bf16.msra.mxu0 %v6098
        %6461 = vmatpush.bf16.msra.mxu0 %v6094
        %6462 = vmatpush.bf16.msra.mxu0 %v6090
        %6463 = vmatpush.bf16.msra.mxu0 %v6086
        %6464 = vmatpush.bf16.msra.mxu0 %v6082
        %6465 = vmatpush.bf16.msra.mxu0 %v6078
        %6466 = vmatpush.bf16.msra.mxu0 %v6074
        %6467 = vmatpush.bf16.msra.mxu0 %v6070
        %6468 = vmatmul.bf16.gmra.mxu0 %v5639
        %v6469 = vpop.f32.mrf.mxu0
        %v6470 = vadd.f32 %v6457, %v6469
        %v6471 = vpop.f32.mrf.mxu0
        %6472 = vdwg.mxu0
        %6473 = vmatpush.bf16.msra.mxu0 %v6130
        %6474 = vmatpush.bf16.msra.mxu0 %v6126
        %6475 = vmatpush.bf16.msra.mxu0 %v6122
        %6476 = vmatpush.bf16.msra.mxu0 %v6118
        %6477 = vmatpush.bf16.msra.mxu0 %v6114
        %6478 = vmatpush.bf16.msra.mxu0 %v6110
        %6479 = vmatpush.bf16.msra.mxu0 %v6106
        %6480 = vmatpush.bf16.msra.mxu0 %v6102
        %6481 = vmatmul.bf16.gmra.mxu0 %v5640
        %v6482 = vpop.f32.mrf.mxu0
        %v6483 = vadd.f32 %v6470, %v6482
        %v6484 = vpop.f32.mrf.mxu0
        %6485 = vdwg.mxu0
        %6486 = vmatpush.bf16.msra.mxu0 %v6162
        %6487 = vmatpush.bf16.msra.mxu0 %v6158
        %6488 = vmatpush.bf16.msra.mxu0 %v6154
        %6489 = vmatpush.bf16.msra.mxu0 %v6150
        %6490 = vmatpush.bf16.msra.mxu0 %v6146
        %6491 = vmatpush.bf16.msra.mxu0 %v6142
        %6492 = vmatpush.bf16.msra.mxu0 %v6138
        %6493 = vmatpush.bf16.msra.mxu0 %v6134
        %6494 = vmatmul.bf16.gmra.mxu0 %v5641
        %v6495 = vpop.f32.mrf.mxu0
        %v6496 = vadd.f32 %v6483, %v6495
        %v6497 = vpop.f32.mrf.mxu0
        %6498 = vdwg.mxu0
        %v6499 = vxor.u32 %v6340, 2147483648
        %v6500 = vxor.u32 %v6392, 2147483648
        %v6501 = vxor.u32 %v6444, 2147483648
        %v6502 = vxor.u32 %v6496, 2147483648
        %v6503 = vmul.f32 %v6499, 1.442695
        %v6504 = vpow.pop %v6503
        %v6505 = vmul.f32 %v6500, 1.442695
        %v6506 = vpow.pop %v6505
        %v6507 = vmul.f32 %v6501, 1.442695
        %v6508 = vpow.pop %v6507
        %v6509 = vmul.f32 %v6502, 1.442695
        %v6510 = vpow.pop %v6509
        %v6511 = vadd.f32 %v6504, 1.0
        %v6512 = vadd.f32 %v6506, 1.0
        %v6513 = vadd.f32 %v6508, 1.0
        %v6514 = vadd.f32 %v6510, 1.0
        %v6515 = vrcp.pop %v6511
        %v6516 = vmul.f32 %v6511, %v6515
        %v6517 = vsub.f32 1.0, %v6516
        %v6518 = vmul.f32 %v6515, %v6517
        %v6519 = vadd.f32 %v6515, %v6518
        %vm6520 = vweird.f32 %v6511
        %vm6521 = vweird.f32 %v6515
        %vm6522 = vmor %vm6520, %vm6521
        %v6523 = vsel %vm6522, %v6515, %v6519
        %v6524 = vand.u32 2147483647, %v6511
        %vm6525 = vcmp.eq.f32.partialorder %v6524, 8.507059e+37
        %v6526 = vand.u32 %v6511, 2147483648
        %v6527 = vor.u32 1.1754944e-38, %v6526
        %v6528 = vsel %vm6525, %v6527, %v6523
        %v6529 = vmul.f32 1.0, %v6528
        %v6530 = vrcp.pop %v6512
        %v6531 = vmul.f32 %v6512, %v6530
        %v6532 = vsub.f32 1.0, %v6531
        %v6533 = vmul.f32 %v6530, %v6532
        %v6534 = vadd.f32 %v6530, %v6533
        %vm6535 = vweird.f32 %v6512
        %vm6536 = vweird.f32 %v6530
        %vm6537 = vmor %vm6535, %vm6536
        %v6538 = vsel %vm6537, %v6530, %v6534
        %v6539 = vand.u32 2147483647, %v6512
        %vm6540 = vcmp.eq.f32.partialorder %v6539, 8.507059e+37
        %v6541 = vand.u32 %v6512, 2147483648
        %v6542 = vor.u32 1.1754944e-38, %v6541
        %v6543 = vsel %vm6540, %v6542, %v6538
        %v6544 = vmul.f32 1.0, %v6543
        %v6545 = vrcp.pop %v6513
        %v6546 = vmul.f32 %v6513, %v6545
        %v6547 = vsub.f32 1.0, %v6546
        %v6548 = vmul.f32 %v6545, %v6547
        %v6549 = vadd.f32 %v6545, %v6548
        %vm6550 = vweird.f32 %v6513
        %vm6551 = vweird.f32 %v6545
        %vm6552 = vmor %vm6550, %vm6551
        %v6553 = vsel %vm6552, %v6545, %v6549
        %v6554 = vand.u32 2147483647, %v6513
        %vm6555 = vcmp.eq.f32.partialorder %v6554, 8.507059e+37
        %v6556 = vand.u32 %v6513, 2147483648
        %v6557 = vor.u32 1.1754944e-38, %v6556
        %v6558 = vsel %vm6555, %v6557, %v6553
        %v6559 = vmul.f32 1.0, %v6558
        %v6560 = vrcp.pop %v6514
        %v6561 = vmul.f32 %v6514, %v6560
        %v6562 = vsub.f32 1.0, %v6561
        %v6563 = vmul.f32 %v6560, %v6562
        %v6564 = vadd.f32 %v6560, %v6563
        %vm6565 = vweird.f32 %v6514
        %vm6566 = vweird.f32 %v6560
        %vm6567 = vmor %vm6565, %vm6566
        %v6568 = vsel %vm6567, %v6560, %v6564
        %v6569 = vand.u32 2147483647, %v6514
        %vm6570 = vcmp.eq.f32.partialorder %v6569, 8.507059e+37
        %v6571 = vand.u32 %v6514, 2147483648
        %v6572 = vor.u32 1.1754944e-38, %v6571
        %v6573 = vsel %vm6570, %v6572, %v6568
        %v6574 = vmul.f32 1.0, %v6573
        %6575 = vst [vmem:[%s1020] sm:$0xff] %v6529
        %6576 = vst [vmem:[%s1020 + $0x8] sm:$0xff] %v6544
        %6577 = vst [vmem:[%s1020 + $0x10] sm:$0xff] %v6559
        %6578 = vst [vmem:[%s1020 + $0x18] sm:$0xff] %v6574
        %6579 = vst [vmem:[%s1030] sm:$0xff] %v4136
        %s6580 = sand.u32 %s532, 1
        %s6581 = scalar_lea.sflag [#allocation4], %s6580
        %s6582 = sand.u32 %s532, 1
        %s6583 = smul.addr %s6582, 32
        %s6584 = scalar_lea.vmem [#allocation31], %s6583
        %p6585 = scmp.lt.s32.totalorder %s52, 1
        %s6586 = scalar_select %p6585, %s52, 1
        %s6587 = smul.addr %s6586, 8
        %s6588 = scalar_lea.vmem %s23, %s6587
        // Predicated region
        $region181: #{vae_forward.1} parent=107 // pred_check
          %p6589 = pneg %p542
        $region182: #{vae_forward.1} parent=107 // pred_check_branch
          %6591 = sbr.rel (%p6589) target = $region184
        $region183: #{vae_forward.1} parent=107 // pred_region
          %6593 = vsyncadd %s6581, 0
          %s6594 = smul.addr %s52, 4
          %s6595 = smul.addr %s6594, 8
          %s6596 = scalar_lea.hbm %s22, %s6595
          %s6598 = sshll.u32 %s6584, 4
          %s6599 = int_to_ptr.vmem [resolvable:$true] %s6598
          %s6600 = sshll.u32 %s6596, 4
          %s6601 = int_to_ptr.hbm [resolvable:$true] %s6600
          %6603 = dma.vmem_to_hbm [thread:$0]  %s6599, 512, %s6601, %s6581
        $region184: #{vae_forward.1} parent=107 // pred_fallthru
          _
        // Predicated region
        $region185: #{vae_forward.1} parent=107 // pred_check
          %p6604 = pneg %p568
        $region186: #{vae_forward.1} parent=107 // pred_check_branch
          %6606 = sbr.rel (%p6604) target = $region188
        $region187: #{vae_forward.1} parent=107 // pred_region
          _
        $region188: #{vae_forward.1} parent=107 // pred_fallthru
          _
      $region108: #{vae_forward.1} parent=5 // pred_fallthru
        _
      %p6607 = scmp.le.s32.totalorder 2, %s47
      // Predicated region
      $region189: #{vae_forward.1} parent=5 // pred_check
        %p6608 = pneg %p6607
      $region190: #{vae_forward.1} parent=5 // pred_check_branch
        %6610 = sbr.rel (%p6608) target = $region192
      $region191: #{vae_forward.1} parent=5 // pred_region
        %s6611 = ssub.s32 %s47, 2
        // Predicated region
        $region193: #{vae_forward.1} parent=191 // pred_check
          %p6612 = pneg %p548
        $region194: #{vae_forward.1} parent=191 // pred_check_branch
          %6614 = sbr.rel (%p6612) target = $region196
        $region195: #{vae_forward.1} parent=191 // pred_region
          %s6615 = sand.u32 %s533, 1
          %s6616 = scalar_lea.sflag [#allocation4], %s6615
          %s6617 = sand.u32 %s533, 1
          %s6618 = smul.addr %s6617, 32
          %s6619 = scalar_lea.vmem [#allocation31], %s6618
          %6621 = dma.done %s6616, 512
        $region196: #{vae_forward.1} parent=191 // pred_fallthru
          _
        // Predicated region
        $region197: #{vae_forward.1} parent=191 // pred_check
          %p6622 = pneg %p574
        $region198: #{vae_forward.1} parent=191 // pred_check_branch
          %6624 = sbr.rel (%p6622) target = $region200
        $region199: #{vae_forward.1} parent=191 // pred_region
          %p6625 = scmp.lt.s32.totalorder %s53, 1
          %s6626 = scalar_select %p6625, %s53, 1
          %s6627 = smul.addr %s6626, 8
          %s6628 = scalar_lea.vmem %s23, %s6627
        $region200: #{vae_forward.1} parent=191 // pred_fallthru
          _
      $region192: #{vae_forward.1} parent=5 // pred_fallthru
        _
    $region6: #{vae_forward.1} parent=1 // loop_footer
      %s51 = sadd.s32 1, %s47
    $region7: #{vae_forward.1} parent=1 // loop_footer_branch
      %46 = sbr.rel target = $region3
    $region8: #{vae_forward.1} parent=1 // loop_exit
      _
    %6629 = vsyncpa [#allocation3], 1
    %s6630 = scalar_lea.sflag [#allocation3], 1
    %6631 = vsyncpa %s6630, 1
    %6632 = vsyncpa [#allocation6], 1
    %s6633 = scalar_lea.sflag [#allocation6], 1
    %6634 = vsyncpa %s6633, 1
    %6635 = vsyncpa [#allocation9], 1
    %6636 = vsyncpa [#allocation12], 1
    %6637 = vsyncpa [#allocation15], 1
    %6638 = vsyncpa [#allocation18], 1
    %6639 = vsyncpa [#allocation21], 1
    %6640 = vsyncpa [#allocation24], 1
    %6641 = vsyncpa [#allocation27], 1
    %6642 = vsyncpa [#allocation30], 1
    %6643 = vsyncpa [#allocation4], 1
    %s6644 = scalar_lea.sflag [#allocation4], 1
    %6645 = vsyncpa %s6644, 1

</llo_original>
